<compile_context>
chip_gen: v7x
topology: tpu7x:2x2x1
jax: 0.10.0
libtpu: 0.0.40
codegen_flags: <defaults>
</compile_context>

<pallas_src>
import functools

import jax
import jax.numpy as jnp
from jax.experimental import pallas as pl
from jax.experimental.pallas import tpu as pltpu

_LANE = 128
_SUBLANE = 8
_MAX_BLOCK_ROWS = 4096      # 4096 x 128 x 4B = 2 MiB f32 per input per grid step
_NSPLIT = 2                 # leading "parallel" axis -> 2 TensorCores on v7x


def _round_up(x, m):
    return ((x + m - 1) // m) * m


def _fused_feature_loss_kernel(a_ref, b_ref, scale_ref, out_ref, *, criterion):
    """Accumulates sum(scale * (|a-b| or (a-b)^2)) into a resident (8,128) output tile.

    Grid is (nsplit, inner).  The output block index depends only on the parallel
    axis, so the (8, 128) output block stays resident in VMEM across the inner
    (reduction, "arbitrary") axis and acts as the accumulator: init at i == 0,
    auto written back to HBM when its block index changes.
    """
    i = pl.program_id(1)

    @pl.when(i == 0)
    def _():
        out_ref[...] = jnp.zeros_like(out_ref)

    d = a_ref[...].astype(jnp.float32) - b_ref[...].astype(jnp.float32)
    if criterion == "l1":
        v = jnp.abs(d)
    else:  # "l2"
        v = d * d
    # scale is (block_rows, 1) f32: per-row weight_k / numel_k; broadcast over lanes.
    v = v * scale_ref[...]
    # Fold this block's rows down to an (8, 128) partial: reduction over the leading
    # (non-minor) axis is pure VPU element-wise accumulation, no cross-lane XLU work.
    g = v.shape[0] // _SUBLANE
    out_ref[...] += jnp.sum(v.reshape(g, _SUBLANE, _LANE), axis=0)


def _prep_feature(sr, hr, weight, common_dtype):
    """Flatten one feature pair to (rows, 128) slabs + a per-row f32 scale column."""
    assert sr.shape == hr.shape, (sr.shape, hr.shape)
    n = int(sr.size)
    rows = -(-n // _LANE)
    pad = rows * _LANE - n
    a = jnp.ravel(sr).astype(common_dtype)
    b = jnp.ravel(hr).astype(common_dtype)
    if pad:
        a = jnp.pad(a, (0, pad))
        b = jnp.pad(b, (0, pad))
    scale = jnp.full((rows, 1), float(weight) / float(n), jnp.float32)
    return a.reshape(rows, _LANE), b.reshape(rows, _LANE), scale


def _fused_weighted_feature_loss(pairs, criterion):
    """sum_k weight_k * mean_criterion(sr_k, hr_k) via a single Pallas kernel."""
    pairs = [(sr, hr, w) for (sr, hr, w) in pairs if int(sr.size) > 0]
    if not pairs:
        return jnp.float32(0.0)

    common = jnp.result_type(*([p[0].dtype for p in pairs] + [p[1].dtype for p in pairs]))

    a_parts, b_parts, s_parts = [], [], []
    for sr, hr, w in pairs:
        a2, b2, s2 = _prep_feature(sr, hr, w, common)
        a_parts.append(a2)
        b_parts.append(b2)
        s_parts.append(s2)

    total_rows = sum(p.shape[0] for p in a_parts)
    block_rows = min(_MAX_BLOCK_ROWS, _round_up(total_rows, _SUBLANE))
    nblocks = -(-total_rows // block_rows)
    nsplit = _NSPLIT if nblocks >= _NSPLIT else 1
    nblocks = _round_up(nblocks, nsplit)
    rows_padded = nblocks * block_rows
    pad_rows = rows_padded - total_rows
    if pad_rows:
        a_parts.append(jnp.zeros((pad_rows, _LANE), common))
        b_parts.append(jnp.zeros((pad_rows, _LANE), common))
        s_parts.append(jnp.zeros((pad_rows, 1), jnp.float32))

    a = jnp.concatenate(a_parts, axis=0)
    b = jnp.concatenate(b_parts, axis=0)
    s = jnp.concatenate(s_parts, axis=0)

    inner = nblocks // nsplit

    partials = pl.pallas_call(
        functools.partial(_fused_feature_loss_kernel, criterion=criterion),
        out_shape=jax.ShapeDtypeStruct((nsplit * _SUBLANE, _LANE), jnp.float32),
        grid=(nsplit, inner),
        in_specs=[
            pl.BlockSpec((block_rows, _LANE), lambda p, i: (p * inner + i, 0)),
            pl.BlockSpec((block_rows, _LANE), lambda p, i: (p * inner + i, 0)),
            pl.BlockSpec((block_rows, 1), lambda p, i: (p * inner + i, 0)),
        ],
        out_specs=pl.BlockSpec((_SUBLANE, _LANE), lambda p, i: (p, 0)),
        compiler_params=pltpu.CompilerParams(
            dimension_semantics=("parallel", "arbitrary"),
            vmem_limit_bytes=32 * 1024 * 1024,
        ),
    )(a, b, s)

    return jnp.sum(partials)


class FeatureLoss:
    """JAX/Pallas port of the PyTorch FeatureLoss module."""

    def __init__(self, layer_weights, loss_weight=1.0, criterion="l1"):
        if criterion not in ("l1", "l2"):
            raise NotImplementedError(f"{criterion} criterion has not been supported.")
        self.loss_weight = loss_weight
        self.layer_weights = layer_weights
        self.criterion = criterion

    def __call__(self, feats_sr, feats_hr):
        if self.loss_weight > 0:
            pairs = []
            for k in self.layer_weights.keys():
                w = self.layer_weights[k]
                if isinstance(feats_hr[k], list):
                    for idx in range(len(feats_sr[k])):
                        pairs.append((feats_sr[k][idx], feats_hr[k][idx], w))
                elif isinstance(feats_hr[k], dict):
                    for kk in feats_hr[k].keys():
                        pairs.append((feats_sr[k][kk], feats_hr[k][kk], w))
                else:
                    pairs.append((feats_sr[k], feats_hr[k], w))
            feature_loss = _fused_weighted_feature_loss(pairs, self.criterion)
            feature_loss = feature_loss * self.loss_weight
        else:
            feature_loss = None
        return feature_loss


def _reference_loss(layer_weights, loss_weight, criterion, feats_sr, feats_hr):
    """Pure-JAX reference for correctness checking."""

    def crit(a, b):
        d = a.astype(jnp.float32) - b.astype(jnp.float32)
        return jnp.mean(jnp.abs(d)) if criterion == "l1" else jnp.mean(d * d)

    total = jnp.float32(0.0)
    for k in layer_weights:
        if isinstance(feats_hr[k], list):
            for idx in range(len(feats_sr[k])):
                total += crit(feats_sr[k][idx], feats_hr[k][idx]) * layer_weights[k]
        elif isinstance(feats_hr[k], dict):
            for kk in feats_hr[k]:
                total += crit(feats_sr[k][kk], feats_hr[k][kk]) * layer_weights[k]
        else:
            total += crit(feats_sr[k], feats_hr[k]) * layer_weights[k]
    return total * loss_weight


if __name__ == "__main__":
    key = jax.random.PRNGKey(0)
    keys = jax.random.split(key, 14)

    # Deterministic synthetic multi-level features (NCHW, matching PyTorch convention).
    # "conv4" has 210 elements (not a multiple of 128) to exercise tail padding.
    # "conv5" is large enough to force multiple grid blocks (exercises the parallel
    # split across TensorCores); "conv6" is bf16 to exercise in-kernel dtype widening.
    layer_weights = {
        "conv1": 0.5, "conv2": 1.0, "conv3": 0.25, "conv4": 0.75,
        "conv5": 0.1, "conv6": 0.3,
    }

    feats_sr = {
        "conv1": jax.random.normal(keys[0], (2, 4, 16, 16), jnp.float32),
        "conv2": [
            jax.random.normal(keys[1], (2, 8, 8, 8), jnp.float32),
            jax.random.normal(keys[2], (2, 8, 8, 8), jnp.float32),
        ],
        "conv3": {"a": jax.random.normal(keys[3], (2, 16, 4, 4), jnp.float32)},
        "conv4": jax.random.normal(keys[4], (2, 3, 5, 7), jnp.float32),
        "conv5": jax.random.normal(keys[5], (2, 64, 64, 64), jnp.float32),
        "conv6": jax.random.normal(keys[6], (2, 4, 8, 8), jnp.bfloat16),
    }
    feats_hr = {
        "conv1": jax.random.normal(keys[7], (2, 4, 16, 16), jnp.float32),
        "conv2": [
            jax.random.normal(keys[8], (2, 8, 8, 8), jnp.float32),
            jax.random.normal(keys[9], (2, 8, 8, 8), jnp.float32),
        ],
        "conv3": {"a": jax.random.normal(keys[10], (2, 16, 4, 4), jnp.float32)},
        "conv4": jax.random.normal(keys[11], (2, 3, 5, 7), jnp.float32),
        "conv5": jax.random.normal(keys[12], (2, 64, 64, 64), jnp.float32),
        "conv6": jax.random.normal(keys[13], (2, 4, 8, 8), jnp.bfloat16),
    }

    loss_fn = FeatureLoss(layer_weights, loss_weight=1.0, criterion="l1")
    out = jax.block_until_ready(loss_fn(feats_sr, feats_hr))
    ref = jax.block_until_ready(
        _reference_loss(layer_weights, 1.0, "l1", feats_sr, feats_hr)
    )
    assert jnp.allclose(out, ref, rtol=1e-4, atol=1e-6), (out, ref)

    # Also exercise the L2 criterion path once.
    loss_fn_l2 = FeatureLoss(layer_weights, loss_weight=2.0, criterion="l2")
    out_l2 = jax.block_until_ready(loss_fn_l2(feats_sr, feats_hr))
    ref_l2 = jax.block_until_ready(
        _reference_loss(layer_weights, 2.0, "l2", feats_sr, feats_hr)
    )
    assert jnp.allclose(out_l2, ref_l2, rtol=1e-4, atol=1e-6), (out_l2, ref_l2)

    print("KERNEL_OK")
</pallas_src>

<mosaic_0001>
module attributes {stable_mosaic.version = 11 : i64} {
  func.func @_fused_feature_loss_kernel(%arg0: i32, %arg1: i32, %arg2: memref<4096x128xf32, #tpu.memory_space<vmem>>, %arg3: memref<4096x128xf32, #tpu.memory_space<vmem>>, %arg4: memref<4096x1xf32, #tpu.memory_space<vmem>>, %arg5: memref<8x128xf32, #tpu.memory_space<vmem>>) attributes {dimension_semantics = [#tpu.dimension_semantics<parallel>, #tpu.dimension_semantics<arbitrary>], iteration_bounds = array<i64: 2, 1>, scalar_prefetch = 0 : i64, scratch_operands = 0 : i64, tpu.core_type = #tpu.core_type<tc>, window_params = [{transform_indices = @transform_0, window_bounds = array<i64: 4096, 128>}, {transform_indices = @transform_1, window_bounds = array<i64: 4096, 128>}, {transform_indices = @transform_2, window_bounds = array<i64: 4096, 1>}, {transform_indices = @transform_3, window_bounds = array<i64: 8, 128>}]} {
    %c0_i32 = arith.constant 0 : i32
    %0 = arith.cmpi eq, %arg1, %c0_i32 : i32
    %1 = arith.extui %0 : i1 to i32
    %c0_i32_0 = arith.constant 0 : i32
    %2 = arith.cmpi ne, %1, %c0_i32_0 : i32
    scf.if %2 {
      %cst_10 = arith.constant 0.000000e+00 : f32
      %15 = vector.broadcast %cst_10 : f32 to vector<8x128xf32>
      %c0_11 = arith.constant 0 : index
      %c0_12 = arith.constant 0 : index
      %16 = vector.load %arg5[%c0_11, %c0_12] : memref<8x128xf32, #tpu.memory_space<vmem>>, vector<8x128xf32>
      tpu.vector_store %arg5[%c0_11, %c0_12], %15 {strides = array<i32>} : memref<8x128xf32, #tpu.memory_space<vmem>>, vector<8x128xf32>,
    } else {
    }
    %c0 = arith.constant 0 : index
    %c0_1 = arith.constant 0 : index
    %3 = vector.load %arg2[%c0, %c0_1] : memref<4096x128xf32, #tpu.memory_space<vmem>>, vector<4096x128xf32>
    %c0_2 = arith.constant 0 : index
    %c0_3 = arith.constant 0 : index
    %4 = vector.load %arg3[%c0_2, %c0_3] : memref<4096x128xf32, #tpu.memory_space<vmem>>, vector<4096x128xf32>
    %5 = arith.subf %3, %4 : vector<4096x128xf32>
    %6 = math.absf %5 : vector<4096x128xf32>
    %c0_4 = arith.constant 0 : index
    %c0_5 = arith.constant 0 : index
    %7 = vector.load %arg4[%c0_4, %c0_5] : memref<4096x1xf32, #tpu.memory_space<vmem>>, vector<4096x1xf32>
    %8 = vector.broadcast %7 : vector<4096x1xf32> to vector<4096x128xf32>
    %9 = arith.mulf %6, %8 : vector<4096x128xf32>
    %c0_6 = arith.constant 0 : index
    %c0_7 = arith.constant 0 : index
    %10 = vector.load %arg5[%c0_6, %c0_7] : memref<8x128xf32, #tpu.memory_space<vmem>>, vector<8x128xf32>
    %11 = vector.shape_cast %9 : vector<4096x128xf32> to vector<512x8x128xf32>
    %cst = arith.constant dense<0.000000e+00> : vector<8x128xf32>
    %12 = vector.multi_reduction <add>, %11, %cst [0] : vector<512x8x128xf32> to vector<8x128xf32>
    %13 = arith.addf %10, %12 : vector<8x128xf32>
    %c0_8 = arith.constant 0 : index
    %c0_9 = arith.constant 0 : index
    %14 = vector.load %arg5[%c0_8, %c0_9] : memref<8x128xf32, #tpu.memory_space<vmem>>, vector<8x128xf32>
    tpu.vector_store %arg5[%c0_8, %c0_9], %13 {strides = array<i32>} : memref<8x128xf32, #tpu.memory_space<vmem>>, vector<8x128xf32>,
    return
  }
  func.func @transform_0(%arg0: i32, %arg1: i32) -> (i32, i32) {
    %c1_i32 = arith.constant 1 : i32
    %0 = arith.muli %arg0, %c1_i32 : i32
    %1 = arith.addi %0, %arg1 : i32
    %c0_i32 = arith.constant 0 : i32
    %c0_i32_0 = arith.constant 0 : i32
    return %1, %c0_i32 : i32, i32
  }
  func.func @transform_1(%arg0: i32, %arg1: i32) -> (i32, i32) {
    %c1_i32 = arith.constant 1 : i32
    %0 = arith.muli %arg0, %c1_i32 : i32
    %1 = arith.addi %0, %arg1 : i32
    %c0_i32 = arith.constant 0 : i32
    %c0_i32_0 = arith.constant 0 : i32
    return %1, %c0_i32 : i32, i32
  }
  func.func @transform_2(%arg0: i32, %arg1: i32) -> (i32, i32) {
    %c1_i32 = arith.constant 1 : i32
    %0 = arith.muli %arg0, %c1_i32 : i32
    %1 = arith.addi %0, %arg1 : i32
    %c0_i32 = arith.constant 0 : i32
    %c0_i32_0 = arith.constant 0 : i32
    return %1, %c0_i32 : i32, i32
  }
  func.func @transform_3(%arg0: i32, %arg1: i32) -> (i32, i32) {
    %c0_i32 = arith.constant 0 : i32
    %c0_i32_0 = arith.constant 0 : i32
    return %arg0, %c0_i32 : i32, i32
  }
}

</mosaic_0001>

<llo_original>
// kernel: tpu_custom_call.1
$region0: #{tpu_custom_call.1}
  #allocation0 [shape = 'u32[]', space=smem, size = 0x4, offset = 0x4, fixed_abs, tag = 'smem constant byte address 0x4 - core index']
  #allocation1 [shape = 'u32[144,128]{1,0:T(1,128)}', space=vmem, size = 0x12000, scoped, tag = 'internal scratch']
  %s0 = inlined_call_operand.vmem [shape: f32[8192,128], index: 0, kind: input, shape index: {}]
  %s1 = inlined_call_operand.hbm [shape: f32[8192,128], index: 1, kind: input, shape index: {}]
  %s2 = inlined_call_operand.vmem [shape: f32[8192,1], index: 2, kind: input, shape index: {}]
  %s3 = inlined_call_operand.hbm [shape: f32[16,128], index: 3, kind: output, shape index: {}]
  %s4 = sld [smem:[#allocation0]]
  $region53: #{tpu_custom_call.1} parent=0
    _
  %s6 = ssub.s32 1, %s4
  %s7 = scalar_select 0, %s6, %s4
  $region1: #{tpu_custom_call.1} parent=0
    #allocation2 [shape = 'u8[4194304]{0}', space=vmem, size = 0x400000, scoped, tag = 'input window, operand 1']
    #allocation3 [shape = 's32[2]{0}', space=sflag, size = 0x8, scoped, tag = 'scoped memory for tpu_custom_call.1']
    #allocation4 [shape = 's32[2]{0}', space=sflag, size = 0x8, scoped, tag = 'scoped memory for tpu_custom_call.1']
    #allocation5 [shape = 'u8[8192]{0}', space=vmem, size = 0x2000, scoped, tag = 'output window, operand 0']
    %8 = vsyncpa [#allocation3], 0
    %s9 = scalar_lea.sflag [#allocation3], 1
    %10 = vsyncpa %s9, 0
    %11 = vsyncpa [#allocation4], 0
    %s12 = scalar_lea.sflag [#allocation4], 1
    %13 = vsyncpa %s12, 0
    loop: start=0, step=1, limit=4
    $region2: #{tpu_custom_call.1} parent=1 // loop_pre_header
      _
    $region3: #{tpu_custom_call.1} parent=1 // loop_header
      %s15 = sphi 0, %s19
      %p16 = scmp.ge.s32.totalorder %s15, 4
      %s22 = sphi 0, %s34
      %s23 = sphi 0, %s30
      %s24 = sphi 0, %s22
      %s25 = sphi 0, %s23
      %s26 = sphi 0, %s24
      %s27 = sphi 0, %s25
      %s39 = sphi 0, %s41
      %s42 = sphi 0, %s39
      %s43 = sphi 0, %s42
      %s59 = sphi 0, %s43
      %s67 = sphi 0, %s69
      %s70 = sphi 0, %s67
      %s71 = sphi 0, %s70
      %s87 = sphi 0, %s71
      %s95 = sphi 0, %s97
      %s98 = sphi 0, %s95
      %s99 = sphi 0, %s98
      %s115 = sphi 0, %s99
      %s121 = sphi 0, %s123
      %s124 = sphi 0, %s121
      %s125 = sphi 0, %s124
      %s141 = sphi 0, %s125
    $region4: #{tpu_custom_call.1} parent=1 // loop_header_branch
      %18 = sbr.rel (%p16) target = $region8
    $region5: #{tpu_custom_call.1} parent=1 // loop_body
      %s20 = ssub.s32 %s15, 1
      %s21 = ssub.s32 %s15, 2
      %s28 = sadd.s32 1, %s23
      %p29 = scmp.ge.s32.totalorder %s28, 1
      %s30 = scalar_select %p29, 0, %s28
      %s31 = sadd.s32 1, %s22
      %s32 = scalar_select %p29, %s31, %s22
      %p33 = scmp.ge.s32.totalorder %s32, 2
      %s34 = scalar_select %p33, 0, %s32
      %s35 = sadd.s32 %s22, %s23
      %s36 = sadd.s32 %s34, %s30
      %s37 = ssub.s32 %s35, %s36
      %p38 = scmp.eq.s32.totalorder %s37, 0
      %s40 = sadd.s32 %s39, 1
      %s41 = scalar_select %p38, %s39, %s40
      %p44 = pneg %p38
      %p45 = scmp.eq.s32.totalorder %s15, 1
      %p46 = por %p44, %p45
      %p47 = scmp.ne.s32.totalorder %s39, %s42
      %p48 = scmp.eq.s32.totalorder %s15, 0
      %p49 = por %p47, %p48
      %p50 = scmp.ne.s32.totalorder %s39, %s42
      %p51 = scmp.eq.s32.totalorder %s20, 1
      %p52 = por %p50, %p51
      %p53 = scmp.ne.s32.totalorder %s42, %s43
      %p54 = scmp.eq.s32.totalorder %s20, 0
      %p55 = por %p53, %p54
      %p56 = scmp.ne.s32.totalorder %s42, %s43
      %p57 = scmp.eq.s32.totalorder %s21, 1
      %p58 = por %p56, %p57
      %p60 = scmp.ne.s32.totalorder %s43, %s59
      %p61 = scmp.eq.s32.totalorder %s21, 0
      %p62 = por %p60, %p61
      %s63 = sadd.s32 %s22, %s23
      %s64 = sadd.s32 %s34, %s30
      %s65 = ssub.s32 %s63, %s64
      %p66 = scmp.eq.s32.totalorder %s65, 0
      %s68 = sadd.s32 %s67, 1
      %s69 = scalar_select %p66, %s67, %s68
      %p72 = pneg %p66
      %p73 = scmp.eq.s32.totalorder %s15, 1
      %p74 = por %p72, %p73
      %p75 = scmp.ne.s32.totalorder %s67, %s70
      %p76 = scmp.eq.s32.totalorder %s15, 0
      %p77 = por %p75, %p76
      %p78 = scmp.ne.s32.totalorder %s67, %s70
      %p79 = scmp.eq.s32.totalorder %s20, 1
      %p80 = por %p78, %p79
      %p81 = scmp.ne.s32.totalorder %s70, %s71
      %p82 = scmp.eq.s32.totalorder %s20, 0
      %p83 = por %p81, %p82
      %p84 = scmp.ne.s32.totalorder %s70, %s71
      %p85 = scmp.eq.s32.totalorder %s21, 1
      %p86 = por %p84, %p85
      %p88 = scmp.ne.s32.totalorder %s71, %s87
      %p89 = scmp.eq.s32.totalorder %s21, 0
      %p90 = por %p88, %p89
      %s91 = sadd.s32 %s22, %s23
      %s92 = sadd.s32 %s34, %s30
      %s93 = ssub.s32 %s91, %s92
      %p94 = scmp.eq.s32.totalorder %s93, 0
      %s96 = sadd.s32 %s95, 1
      %s97 = scalar_select %p94, %s95, %s96
      %p100 = pneg %p94
      %p101 = scmp.eq.s32.totalorder %s15, 1
      %p102 = por %p100, %p101
      %p103 = scmp.ne.s32.totalorder %s95, %s98
      %p104 = scmp.eq.s32.totalorder %s15, 0
      %p105 = por %p103, %p104
      %p106 = scmp.ne.s32.totalorder %s95, %s98
      %p107 = scmp.eq.s32.totalorder %s20, 1
      %p108 = por %p106, %p107
      %p109 = scmp.ne.s32.totalorder %s98, %s99
      %p110 = scmp.eq.s32.totalorder %s20, 0
      %p111 = por %p109, %p110
      %p112 = scmp.ne.s32.totalorder %s98, %s99
      %p113 = scmp.eq.s32.totalorder %s21, 1
      %p114 = por %p112, %p113
      %p116 = scmp.ne.s32.totalorder %s99, %s115
      %p117 = scmp.eq.s32.totalorder %s21, 0
      %p118 = por %p116, %p117
      %s119 = ssub.s32 %s22, %s34
      %p120 = scmp.eq.s32.totalorder %s119, 0
      %s122 = sadd.s32 %s121, 1
      %s123 = scalar_select %p120, %s121, %s122
      %p126 = pneg %p120
      %p127 = scmp.eq.s32.totalorder %s15, 1
      %p128 = por %p126, %p127
      %p129 = scmp.ne.s32.totalorder %s121, %s124
      %p130 = scmp.eq.s32.totalorder %s15, 0
      %p131 = por %p129, %p130
      %p132 = scmp.ne.s32.totalorder %s121, %s124
      %p133 = scmp.eq.s32.totalorder %s20, 1
      %p134 = por %p132, %p133
      %p135 = scmp.ne.s32.totalorder %s124, %s125
      %p136 = scmp.eq.s32.totalorder %s20, 0
      %p137 = por %p135, %p136
      %p138 = scmp.ne.s32.totalorder %s124, %s125
      %p139 = scmp.eq.s32.totalorder %s21, 1
      %p140 = por %p138, %p139
      %p142 = scmp.ne.s32.totalorder %s125, %s141
      %p143 = scmp.eq.s32.totalorder %s21, 0
      %p144 = por %p142, %p143
      %p145 = scmp.le.s32.totalorder 1, %s15
      %p146 = scmp.lt.s32.totalorder %s15, 3
      %p147 = pnand %p145, %p146
      %p148 = pneg %p147
      // Predicated region
      $region9: #{tpu_custom_call.1} parent=5 // pred_check
        _
      $region10: #{tpu_custom_call.1} parent=5 // pred_check_branch
        %150 = sbr.rel (%p147) target = $region12
      $region11: #{tpu_custom_call.1} parent=5 // pred_region
        %s151 = ssub.s32 %s15, 1
      $region12: #{tpu_custom_call.1} parent=5 // pred_fallthru
        _
      %p152 = scmp.lt.s32.totalorder %s15, 2
      // Predicated region
      $region13: #{tpu_custom_call.1} parent=5 // pred_check
        %p153 = pneg %p152
      $region14: #{tpu_custom_call.1} parent=5 // pred_check_branch
        %155 = sbr.rel (%p153) target = $region16
      $region15: #{tpu_custom_call.1} parent=5 // pred_region
        // Predicated region
        $region17: #{tpu_custom_call.1} parent=15 // pred_check
          %p156 = pneg %p49
        $region18: #{tpu_custom_call.1} parent=15 // pred_check_branch
          %158 = sbr.rel (%p156) target = $region20
        $region19: #{tpu_custom_call.1} parent=15 // pred_region
          %s159 = sadd.s32 %s22, %s23
          %s160 = smul.u32 512, %s159
          %p161 = scmp.lt.s32.totalorder %s160, 1023
          %s162 = scalar_select %p161, %s160, 1023
          %s163 = smul.addr %s162, 8
          %s164 = scalar_lea.vmem %s0, %s163
          %s165 = sadd.s32 %s22, %s23
          %s166 = smul.u32 512, %s165
        $region20: #{tpu_custom_call.1} parent=15 // pred_fallthru
          _
        // Predicated region
        $region21: #{tpu_custom_call.1} parent=15 // pred_check
          %p167 = pneg %p77
        $region22: #{tpu_custom_call.1} parent=15 // pred_check_branch
          %169 = sbr.rel (%p167) target = $region24
        $region23: #{tpu_custom_call.1} parent=15 // pred_region
          %s170 = sand.u32 %s67, 1
          %s171 = scalar_lea.sflag [#allocation3], %s170
          %s172 = sand.u32 %s67, 1
          %s173 = smul.addr %s172, 4096
          %s174 = scalar_lea.vmem [#allocation2], %s173
          %s175 = sadd.s32 %s22, %s23
          %s176 = smul.u32 512, %s175
          %s178 = ssub.s32 65536, 65536
          %179 = vsyncadd %s171, %s178
          %s180 = smul.addr %s176, 128
          %s181 = scalar_lea.hbm %s1, %s180
          %s182 = sshll.u32 %s174, 4
          %s183 = int_to_ptr.vmem [resolvable:$true] %s182
          %188 = dma.hbm_to_vmem [thread:$0]  %s181, 65536, %s183, %s171, 128, 128, 8
        $region24: #{tpu_custom_call.1} parent=15 // pred_fallthru
          _
        // Predicated region
        $region25: #{tpu_custom_call.1} parent=15 // pred_check
          %p189 = pneg %p105
        $region26: #{tpu_custom_call.1} parent=15 // pred_check_branch
          %191 = sbr.rel (%p189) target = $region28
        $region27: #{tpu_custom_call.1} parent=15 // pred_region
          %s192 = sadd.s32 %s22, %s23
          %s193 = smul.u32 512, %s192
          %p194 = scmp.lt.s32.totalorder %s193, 1023
          %s195 = scalar_select %p194, %s193, 1023
          %s196 = smul.addr %s195, 8
          %s197 = scalar_lea.vmem %s2, %s196
          %s198 = sadd.s32 %s22, %s23
          %s199 = smul.u32 512, %s198
        $region28: #{tpu_custom_call.1} parent=15 // pred_fallthru
          _
      $region16: #{tpu_custom_call.1} parent=5 // pred_fallthru
        _
      %p200 = scmp.le.s32.totalorder 1, %s15
      %p201 = scmp.lt.s32.totalorder %s15, 3
      %p202 = pnand %p200, %p201
      %p203 = pneg %p202
      // Predicated region
      $region29: #{tpu_custom_call.1} parent=5 // pred_check
        _
      $region30: #{tpu_custom_call.1} parent=5 // pred_check_branch
        %205 = sbr.rel (%p202) target = $region32
      $region31: #{tpu_custom_call.1} parent=5 // pred_region
        %s206 = ssub.s32 %s15, 1
        %s207 = sand.u32 %s70, 1
        %s208 = scalar_lea.sflag [#allocation3], %s207
        %s209 = sand.u32 %s70, 1
        %s210 = smul.addr %s209, 4096
        %s211 = scalar_lea.vmem [#allocation2], %s210
        // Predicated region
        $region33: #{tpu_custom_call.1} parent=31 // pred_check
          %p212 = pneg %p83
        $region34: #{tpu_custom_call.1} parent=31 // pred_check_branch
          %214 = sbr.rel (%p212) target = $region36
        $region35: #{tpu_custom_call.1} parent=31 // pred_region
          %215 = dma.done %s208, 65536
        $region36: #{tpu_custom_call.1} parent=31 // pred_fallthru
          _
        %s216 = sadd.s32 %s24, %s25
        %s217 = smul.u32 512, %s216
        %p218 = scmp.lt.s32.totalorder %s217, 1023
        %s219 = scalar_select %p218, %s217, 1023
        %s220 = smul.addr %s219, 8
        %s221 = scalar_lea.vmem %s0, %s220
        %p222 = pneg %p55
        %p223 = pneg %p52
        %s224 = sand.u32 %s70, 1
        %s225 = scalar_lea.sflag [#allocation3], %s224
        %s226 = sand.u32 %s70, 1
        %s227 = smul.addr %s226, 4096
        %s228 = scalar_lea.vmem [#allocation2], %s227
        %p229 = pneg %p83
        %p230 = pneg %p80
        %s231 = sadd.s32 %s24, %s25
        %s232 = smul.u32 512, %s231
        %p233 = scmp.lt.s32.totalorder %s232, 1023
        %s234 = scalar_select %p233, %s232, 1023
        %s235 = smul.addr %s234, 8
        %s236 = scalar_lea.vmem %s2, %s235
        %p237 = pneg %p111
        %p238 = pneg %p108
        %p239 = pneg %p137
        %p240 = pneg %p134
        %s241 = sand.u32 %s124, 1
        %s242 = scalar_lea.sflag [#allocation4], %s241
        %s243 = sand.u32 %s124, 1
        %s244 = smul.addr %s243, 8
        %s245 = scalar_lea.vmem [#allocation5], %s244
        %s246 = sadd.s32 %s24, %s25
        %s247 = smul.u32 512, %s246
        %p248 = scmp.lt.s32.totalorder %s247, 1023
        %s249 = scalar_select %p248, %s247, 1023
        %s250 = smul.addr %s249, 8
        %s251 = scalar_lea.vmem %s0, %s250
        %s252 = sadd.s32 %s24, %s25
        %s253 = smul.u32 512, %s252
        %s254 = sadd.s32 %s24, %s25
        %s255 = smul.u32 512, %s254
        %s256 = sadd.s32 %s24, %s25
        %s257 = smul.u32 512, %s256
        %p258 = scmp.lt.s32.totalorder %s257, 1023
        %s259 = scalar_select %p258, %s257, 1023
        %s260 = smul.addr %s259, 8
        %s261 = scalar_lea.vmem %s2, %s260
        %s262 = sadd.s32 %s24, %s25
        %s263 = smul.u32 512, %s262
        %p264 = scmp.eq.s32.totalorder %s25, 0
        // Predicated region
        $region37: #{tpu_custom_call.1} parent=31 // pred_check
          %p265 = pneg %p264
        $region38: #{tpu_custom_call.1} parent=31 // pred_check_branch
          %267 = sbr.rel (%p265) target = $region40
        $region39: #{tpu_custom_call.1} parent=31 // pred_region
          %268 = vst [vmem:[%s245] sm:$0xff] 0.0
        $region40: #{tpu_custom_call.1} parent=31 // pred_fallthru
          _
        %v269 = vld [vmem:[%s251] sm:$0xff]
        %v270 = vld [vmem:[%s251 + $0x8] sm:$0xff]
        %v271 = vld [vmem:[%s251 + $0x10] sm:$0xff]
        %v272 = vld [vmem:[%s251 + $0x18] sm:$0xff]
        %v273 = vld [vmem:[%s251 + $0x20] sm:$0xff]
        %v274 = vld [vmem:[%s251 + $0x28] sm:$0xff]
        %v275 = vld [vmem:[%s251 + $0x30] sm:$0xff]
        %v276 = vld [vmem:[%s251 + $0x38] sm:$0xff]
        %v277 = vld [vmem:[%s251 + $0x40] sm:$0xff]
        %v278 = vld [vmem:[%s251 + $0x48] sm:$0xff]
        %v279 = vld [vmem:[%s251 + $0x50] sm:$0xff]
        %v280 = vld [vmem:[%s251 + $0x58] sm:$0xff]
        %v281 = vld [vmem:[%s251 + $0x60] sm:$0xff]
        %v282 = vld [vmem:[%s251 + $0x68] sm:$0xff]
        %v283 = vld [vmem:[%s251 + $0x70] sm:$0xff]
        %v284 = vld [vmem:[%s251 + $0x78] sm:$0xff]
        %v285 = vld [vmem:[%s251 + $0x80] sm:$0xff]
        %v286 = vld [vmem:[%s251 + $0x88] sm:$0xff]
        %v287 = vld [vmem:[%s251 + $0x90] sm:$0xff]
        %v288 = vld [vmem:[%s251 + $0x98] sm:$0xff]
        %v289 = vld [vmem:[%s251 + $0xa0] sm:$0xff]
        %v290 = vld [vmem:[%s251 + $0xa8] sm:$0xff]
        %v291 = vld [vmem:[%s251 + $0xb0] sm:$0xff]
        %v292 = vld [vmem:[%s251 + $0xb8] sm:$0xff]
        %v293 = vld [vmem:[%s251 + $0xc0] sm:$0xff]
        %v294 = vld [vmem:[%s251 + $0xc8] sm:$0xff]
        %v295 = vld [vmem:[%s251 + $0xd0] sm:$0xff]
        %v296 = vld [vmem:[%s251 + $0xd8] sm:$0xff]
        %v297 = vld [vmem:[%s251 + $0xe0] sm:$0xff]
        %v298 = vld [vmem:[%s251 + $0xe8] sm:$0xff]
        %v299 = vld [vmem:[%s251 + $0xf0] sm:$0xff]
        %v300 = vld [vmem:[%s251 + $0xf8] sm:$0xff]
        %v301 = vld [vmem:[%s251 + $0x100] sm:$0xff]
        %v302 = vld [vmem:[%s251 + $0x108] sm:$0xff]
        %v303 = vld [vmem:[%s251 + $0x110] sm:$0xff]
        %v304 = vld [vmem:[%s251 + $0x118] sm:$0xff]
        %v305 = vld [vmem:[%s251 + $0x120] sm:$0xff]
        %v306 = vld [vmem:[%s251 + $0x128] sm:$0xff]
        %v307 = vld [vmem:[%s251 + $0x130] sm:$0xff]
        %v308 = vld [vmem:[%s251 + $0x138] sm:$0xff]
        %v309 = vld [vmem:[%s251 + $0x140] sm:$0xff]
        %v310 = vld [vmem:[%s251 + $0x148] sm:$0xff]
        %v311 = vld [vmem:[%s251 + $0x150] sm:$0xff]
        %v312 = vld [vmem:[%s251 + $0x158] sm:$0xff]
        %v313 = vld [vmem:[%s251 + $0x160] sm:$0xff]
        %v314 = vld [vmem:[%s251 + $0x168] sm:$0xff]
        %v315 = vld [vmem:[%s251 + $0x170] sm:$0xff]
        %v316 = vld [vmem:[%s251 + $0x178] sm:$0xff]
        %v317 = vld [vmem:[%s251 + $0x180] sm:$0xff]
        %v318 = vld [vmem:[%s251 + $0x188] sm:$0xff]
        %v319 = vld [vmem:[%s251 + $0x190] sm:$0xff]
        %v320 = vld [vmem:[%s251 + $0x198] sm:$0xff]
        %v321 = vld [vmem:[%s251 + $0x1a0] sm:$0xff]
        %v322 = vld [vmem:[%s251 + $0x1a8] sm:$0xff]
        %v323 = vld [vmem:[%s251 + $0x1b0] sm:$0xff]
        %v324 = vld [vmem:[%s251 + $0x1b8] sm:$0xff]
        %v325 = vld [vmem:[%s251 + $0x1c0] sm:$0xff]
        %v326 = vld [vmem:[%s251 + $0x1c8] sm:$0xff]
        %v327 = vld [vmem:[%s251 + $0x1d0] sm:$0xff]
        %v328 = vld [vmem:[%s251 + $0x1d8] sm:$0xff]
        %v329 = vld [vmem:[%s251 + $0x1e0] sm:$0xff]
        %v330 = vld [vmem:[%s251 + $0x1e8] sm:$0xff]
        %v331 = vld [vmem:[%s251 + $0x1f0] sm:$0xff]
        %v332 = vld [vmem:[%s251 + $0x1f8] sm:$0xff]
        %v333 = vld [vmem:[%s251 + $0x200] sm:$0xff]
        %v334 = vld [vmem:[%s251 + $0x208] sm:$0xff]
        %v335 = vld [vmem:[%s251 + $0x210] sm:$0xff]
        %v336 = vld [vmem:[%s251 + $0x218] sm:$0xff]
        %v337 = vld [vmem:[%s251 + $0x220] sm:$0xff]
        %v338 = vld [vmem:[%s251 + $0x228] sm:$0xff]
        %v339 = vld [vmem:[%s251 + $0x230] sm:$0xff]
        %v340 = vld [vmem:[%s251 + $0x238] sm:$0xff]
        %v341 = vld [vmem:[%s251 + $0x240] sm:$0xff]
        %v342 = vld [vmem:[%s251 + $0x248] sm:$0xff]
        %v343 = vld [vmem:[%s251 + $0x250] sm:$0xff]
        %v344 = vld [vmem:[%s251 + $0x258] sm:$0xff]
        %v345 = vld [vmem:[%s251 + $0x260] sm:$0xff]
        %v346 = vld [vmem:[%s251 + $0x268] sm:$0xff]
        %v347 = vld [vmem:[%s251 + $0x270] sm:$0xff]
        %v348 = vld [vmem:[%s251 + $0x278] sm:$0xff]
        %v349 = vld [vmem:[%s251 + $0x280] sm:$0xff]
        %v350 = vld [vmem:[%s251 + $0x288] sm:$0xff]
        %v351 = vld [vmem:[%s251 + $0x290] sm:$0xff]
        %v352 = vld [vmem:[%s251 + $0x298] sm:$0xff]
        %v353 = vld [vmem:[%s251 + $0x2a0] sm:$0xff]
        %v354 = vld [vmem:[%s251 + $0x2a8] sm:$0xff]
        %v355 = vld [vmem:[%s251 + $0x2b0] sm:$0xff]
        %v356 = vld [vmem:[%s251 + $0x2b8] sm:$0xff]
        %v357 = vld [vmem:[%s251 + $0x2c0] sm:$0xff]
        %v358 = vld [vmem:[%s251 + $0x2c8] sm:$0xff]
        %v359 = vld [vmem:[%s251 + $0x2d0] sm:$0xff]
        %v360 = vld [vmem:[%s251 + $0x2d8] sm:$0xff]
        %v361 = vld [vmem:[%s251 + $0x2e0] sm:$0xff]
        %v362 = vld [vmem:[%s251 + $0x2e8] sm:$0xff]
        %v363 = vld [vmem:[%s251 + $0x2f0] sm:$0xff]
        %v364 = vld [vmem:[%s251 + $0x2f8] sm:$0xff]
        %v365 = vld [vmem:[%s251 + $0x300] sm:$0xff]
        %v366 = vld [vmem:[%s251 + $0x308] sm:$0xff]
        %v367 = vld [vmem:[%s251 + $0x310] sm:$0xff]
        %v368 = vld [vmem:[%s251 + $0x318] sm:$0xff]
        %v369 = vld [vmem:[%s251 + $0x320] sm:$0xff]
        %v370 = vld [vmem:[%s251 + $0x328] sm:$0xff]
        %v371 = vld [vmem:[%s251 + $0x330] sm:$0xff]
        %v372 = vld [vmem:[%s251 + $0x338] sm:$0xff]
        %v373 = vld [vmem:[%s251 + $0x340] sm:$0xff]
        %v374 = vld [vmem:[%s251 + $0x348] sm:$0xff]
        %v375 = vld [vmem:[%s251 + $0x350] sm:$0xff]
        %v376 = vld [vmem:[%s251 + $0x358] sm:$0xff]
        %v377 = vld [vmem:[%s251 + $0x360] sm:$0xff]
        %v378 = vld [vmem:[%s251 + $0x368] sm:$0xff]
        %v379 = vld [vmem:[%s251 + $0x370] sm:$0xff]
        %v380 = vld [vmem:[%s251 + $0x378] sm:$0xff]
        %v381 = vld [vmem:[%s251 + $0x380] sm:$0xff]
        %v382 = vld [vmem:[%s251 + $0x388] sm:$0xff]
        %v383 = vld [vmem:[%s251 + $0x390] sm:$0xff]
        %v384 = vld [vmem:[%s251 + $0x398] sm:$0xff]
        %v385 = vld [vmem:[%s251 + $0x3a0] sm:$0xff]
        %v386 = vld [vmem:[%s251 + $0x3a8] sm:$0xff]
        %v387 = vld [vmem:[%s251 + $0x3b0] sm:$0xff]
        %v388 = vld [vmem:[%s251 + $0x3b8] sm:$0xff]
        %v389 = vld [vmem:[%s251 + $0x3c0] sm:$0xff]
        %v390 = vld [vmem:[%s251 + $0x3c8] sm:$0xff]
        %v391 = vld [vmem:[%s251 + $0x3d0] sm:$0xff]
        %v392 = vld [vmem:[%s251 + $0x3d8] sm:$0xff]
        %v393 = vld [vmem:[%s251 + $0x3e0] sm:$0xff]
        %v394 = vld [vmem:[%s251 + $0x3e8] sm:$0xff]
        %v395 = vld [vmem:[%s251 + $0x3f0] sm:$0xff]
        %v396 = vld [vmem:[%s251 + $0x3f8] sm:$0xff]
        %v397 = vld [vmem:[%s251 + $0x400] sm:$0xff]
        %v398 = vld [vmem:[%s251 + $0x408] sm:$0xff]
        %v399 = vld [vmem:[%s251 + $0x410] sm:$0xff]
        %v400 = vld [vmem:[%s251 + $0x418] sm:$0xff]
        %v401 = vld [vmem:[%s251 + $0x420] sm:$0xff]
        %v402 = vld [vmem:[%s251 + $0x428] sm:$0xff]
        %v403 = vld [vmem:[%s251 + $0x430] sm:$0xff]
        %v404 = vld [vmem:[%s251 + $0x438] sm:$0xff]
        %v405 = vld [vmem:[%s251 + $0x440] sm:$0xff]
        %v406 = vld [vmem:[%s251 + $0x448] sm:$0xff]
        %v407 = vld [vmem:[%s251 + $0x450] sm:$0xff]
        %v408 = vld [vmem:[%s251 + $0x458] sm:$0xff]
        %v409 = vld [vmem:[%s251 + $0x460] sm:$0xff]
        %v410 = vld [vmem:[%s251 + $0x468] sm:$0xff]
        %v411 = vld [vmem:[%s251 + $0x470] sm:$0xff]
        %v412 = vld [vmem:[%s251 + $0x478] sm:$0xff]
        %v413 = vld [vmem:[%s251 + $0x480] sm:$0xff]
        %v414 = vld [vmem:[%s251 + $0x488] sm:$0xff]
        %v415 = vld [vmem:[%s251 + $0x490] sm:$0xff]
        %v416 = vld [vmem:[%s251 + $0x498] sm:$0xff]
        %v417 = vld [vmem:[%s251 + $0x4a0] sm:$0xff]
        %v418 = vld [vmem:[%s251 + $0x4a8] sm:$0xff]
        %v419 = vld [vmem:[%s251 + $0x4b0] sm:$0xff]
        %v420 = vld [vmem:[%s251 + $0x4b8] sm:$0xff]
        %v421 = vld [vmem:[%s251 + $0x4c0] sm:$0xff]
        %v422 = vld [vmem:[%s251 + $0x4c8] sm:$0xff]
        %v423 = vld [vmem:[%s251 + $0x4d0] sm:$0xff]
        %v424 = vld [vmem:[%s251 + $0x4d8] sm:$0xff]
        %v425 = vld [vmem:[%s251 + $0x4e0] sm:$0xff]
        %v426 = vld [vmem:[%s251 + $0x4e8] sm:$0xff]
        %v427 = vld [vmem:[%s251 + $0x4f0] sm:$0xff]
        %v428 = vld [vmem:[%s251 + $0x4f8] sm:$0xff]
        %v429 = vld [vmem:[%s251 + $0x500] sm:$0xff]
        %v430 = vld [vmem:[%s251 + $0x508] sm:$0xff]
        %v431 = vld [vmem:[%s251 + $0x510] sm:$0xff]
        %v432 = vld [vmem:[%s251 + $0x518] sm:$0xff]
        %v433 = vld [vmem:[%s251 + $0x520] sm:$0xff]
        %v434 = vld [vmem:[%s251 + $0x528] sm:$0xff]
        %v435 = vld [vmem:[%s251 + $0x530] sm:$0xff]
        %v436 = vld [vmem:[%s251 + $0x538] sm:$0xff]
        %v437 = vld [vmem:[%s251 + $0x540] sm:$0xff]
        %v438 = vld [vmem:[%s251 + $0x548] sm:$0xff]
        %v439 = vld [vmem:[%s251 + $0x550] sm:$0xff]
        %v440 = vld [vmem:[%s251 + $0x558] sm:$0xff]
        %v441 = vld [vmem:[%s251 + $0x560] sm:$0xff]
        %v442 = vld [vmem:[%s251 + $0x568] sm:$0xff]
        %v443 = vld [vmem:[%s251 + $0x570] sm:$0xff]
        %v444 = vld [vmem:[%s251 + $0x578] sm:$0xff]
        %v445 = vld [vmem:[%s251 + $0x580] sm:$0xff]
        %v446 = vld [vmem:[%s251 + $0x588] sm:$0xff]
        %v447 = vld [vmem:[%s251 + $0x590] sm:$0xff]
        %v448 = vld [vmem:[%s251 + $0x598] sm:$0xff]
        %v449 = vld [vmem:[%s251 + $0x5a0] sm:$0xff]
        %v450 = vld [vmem:[%s251 + $0x5a8] sm:$0xff]
        %v451 = vld [vmem:[%s251 + $0x5b0] sm:$0xff]
        %v452 = vld [vmem:[%s251 + $0x5b8] sm:$0xff]
        %v453 = vld [vmem:[%s251 + $0x5c0] sm:$0xff]
        %v454 = vld [vmem:[%s251 + $0x5c8] sm:$0xff]
        %v455 = vld [vmem:[%s251 + $0x5d0] sm:$0xff]
        %v456 = vld [vmem:[%s251 + $0x5d8] sm:$0xff]
        %v457 = vld [vmem:[%s251 + $0x5e0] sm:$0xff]
        %v458 = vld [vmem:[%s251 + $0x5e8] sm:$0xff]
        %v459 = vld [vmem:[%s251 + $0x5f0] sm:$0xff]
        %v460 = vld [vmem:[%s251 + $0x5f8] sm:$0xff]
        %v461 = vld [vmem:[%s251 + $0x600] sm:$0xff]
        %v462 = vld [vmem:[%s251 + $0x608] sm:$0xff]
        %v463 = vld [vmem:[%s251 + $0x610] sm:$0xff]
        %v464 = vld [vmem:[%s251 + $0x618] sm:$0xff]
        %v465 = vld [vmem:[%s251 + $0x620] sm:$0xff]
        %v466 = vld [vmem:[%s251 + $0x628] sm:$0xff]
        %v467 = vld [vmem:[%s251 + $0x630] sm:$0xff]
        %v468 = vld [vmem:[%s251 + $0x638] sm:$0xff]
        %v469 = vld [vmem:[%s251 + $0x640] sm:$0xff]
        %v470 = vld [vmem:[%s251 + $0x648] sm:$0xff]
        %v471 = vld [vmem:[%s251 + $0x650] sm:$0xff]
        %v472 = vld [vmem:[%s251 + $0x658] sm:$0xff]
        %v473 = vld [vmem:[%s251 + $0x660] sm:$0xff]
        %v474 = vld [vmem:[%s251 + $0x668] sm:$0xff]
        %v475 = vld [vmem:[%s251 + $0x670] sm:$0xff]
        %v476 = vld [vmem:[%s251 + $0x678] sm:$0xff]
        %v477 = vld [vmem:[%s251 + $0x680] sm:$0xff]
        %v478 = vld [vmem:[%s251 + $0x688] sm:$0xff]
        %v479 = vld [vmem:[%s251 + $0x690] sm:$0xff]
        %v480 = vld [vmem:[%s251 + $0x698] sm:$0xff]
        %v481 = vld [vmem:[%s251 + $0x6a0] sm:$0xff]
        %v482 = vld [vmem:[%s251 + $0x6a8] sm:$0xff]
        %v483 = vld [vmem:[%s251 + $0x6b0] sm:$0xff]
        %v484 = vld [vmem:[%s251 + $0x6b8] sm:$0xff]
        %v485 = vld [vmem:[%s251 + $0x6c0] sm:$0xff]
        %v486 = vld [vmem:[%s251 + $0x6c8] sm:$0xff]
        %v487 = vld [vmem:[%s251 + $0x6d0] sm:$0xff]
        %v488 = vld [vmem:[%s251 + $0x6d8] sm:$0xff]
        %v489 = vld [vmem:[%s251 + $0x6e0] sm:$0xff]
        %v490 = vld [vmem:[%s251 + $0x6e8] sm:$0xff]
        %v491 = vld [vmem:[%s251 + $0x6f0] sm:$0xff]
        %v492 = vld [vmem:[%s251 + $0x6f8] sm:$0xff]
        %v493 = vld [vmem:[%s251 + $0x700] sm:$0xff]
        %v494 = vld [vmem:[%s251 + $0x708] sm:$0xff]
        %v495 = vld [vmem:[%s251 + $0x710] sm:$0xff]
        %v496 = vld [vmem:[%s251 + $0x718] sm:$0xff]
        %v497 = vld [vmem:[%s251 + $0x720] sm:$0xff]
        %v498 = vld [vmem:[%s251 + $0x728] sm:$0xff]
        %v499 = vld [vmem:[%s251 + $0x730] sm:$0xff]
        %v500 = vld [vmem:[%s251 + $0x738] sm:$0xff]
        %v501 = vld [vmem:[%s251 + $0x740] sm:$0xff]
        %v502 = vld [vmem:[%s251 + $0x748] sm:$0xff]
        %v503 = vld [vmem:[%s251 + $0x750] sm:$0xff]
        %v504 = vld [vmem:[%s251 + $0x758] sm:$0xff]
        %v505 = vld [vmem:[%s251 + $0x760] sm:$0xff]
        %v506 = vld [vmem:[%s251 + $0x768] sm:$0xff]
        %v507 = vld [vmem:[%s251 + $0x770] sm:$0xff]
        %v508 = vld [vmem:[%s251 + $0x778] sm:$0xff]
        %v509 = vld [vmem:[%s251 + $0x780] sm:$0xff]
        %v510 = vld [vmem:[%s251 + $0x788] sm:$0xff]
        %v511 = vld [vmem:[%s251 + $0x790] sm:$0xff]
        %v512 = vld [vmem:[%s251 + $0x798] sm:$0xff]
        %v513 = vld [vmem:[%s251 + $0x7a0] sm:$0xff]
        %v514 = vld [vmem:[%s251 + $0x7a8] sm:$0xff]
        %v515 = vld [vmem:[%s251 + $0x7b0] sm:$0xff]
        %v516 = vld [vmem:[%s251 + $0x7b8] sm:$0xff]
        %v517 = vld [vmem:[%s251 + $0x7c0] sm:$0xff]
        %v518 = vld [vmem:[%s251 + $0x7c8] sm:$0xff]
        %v519 = vld [vmem:[%s251 + $0x7d0] sm:$0xff]
        %v520 = vld [vmem:[%s251 + $0x7d8] sm:$0xff]
        %v521 = vld [vmem:[%s251 + $0x7e0] sm:$0xff]
        %v522 = vld [vmem:[%s251 + $0x7e8] sm:$0xff]
        %v523 = vld [vmem:[%s251 + $0x7f0] sm:$0xff]
        %v524 = vld [vmem:[%s251 + $0x7f8] sm:$0xff]
        %v525 = vld [vmem:[%s251 + $0x800] sm:$0xff]
        %v526 = vld [vmem:[%s251 + $0x808] sm:$0xff]
        %v527 = vld [vmem:[%s251 + $0x810] sm:$0xff]
        %v528 = vld [vmem:[%s251 + $0x818] sm:$0xff]
        %v529 = vld [vmem:[%s251 + $0x820] sm:$0xff]
        %v530 = vld [vmem:[%s251 + $0x828] sm:$0xff]
        %v531 = vld [vmem:[%s251 + $0x830] sm:$0xff]
        %v532 = vld [vmem:[%s251 + $0x838] sm:$0xff]
        %v533 = vld [vmem:[%s251 + $0x840] sm:$0xff]
        %v534 = vld [vmem:[%s251 + $0x848] sm:$0xff]
        %v535 = vld [vmem:[%s251 + $0x850] sm:$0xff]
        %v536 = vld [vmem:[%s251 + $0x858] sm:$0xff]
        %v537 = vld [vmem:[%s251 + $0x860] sm:$0xff]
        %v538 = vld [vmem:[%s251 + $0x868] sm:$0xff]
        %v539 = vld [vmem:[%s251 + $0x870] sm:$0xff]
        %v540 = vld [vmem:[%s251 + $0x878] sm:$0xff]
        %v541 = vld [vmem:[%s251 + $0x880] sm:$0xff]
        %v542 = vld [vmem:[%s251 + $0x888] sm:$0xff]
        %v543 = vld [vmem:[%s251 + $0x890] sm:$0xff]
        %v544 = vld [vmem:[%s251 + $0x898] sm:$0xff]
        %v545 = vld [vmem:[%s251 + $0x8a0] sm:$0xff]
        %v546 = vld [vmem:[%s251 + $0x8a8] sm:$0xff]
        %v547 = vld [vmem:[%s251 + $0x8b0] sm:$0xff]
        %v548 = vld [vmem:[%s251 + $0x8b8] sm:$0xff]
        %v549 = vld [vmem:[%s251 + $0x8c0] sm:$0xff]
        %v550 = vld [vmem:[%s251 + $0x8c8] sm:$0xff]
        %v551 = vld [vmem:[%s251 + $0x8d0] sm:$0xff]
        %v552 = vld [vmem:[%s251 + $0x8d8] sm:$0xff]
        %v553 = vld [vmem:[%s251 + $0x8e0] sm:$0xff]
        %v554 = vld [vmem:[%s251 + $0x8e8] sm:$0xff]
        %v555 = vld [vmem:[%s251 + $0x8f0] sm:$0xff]
        %v556 = vld [vmem:[%s251 + $0x8f8] sm:$0xff]
        %v557 = vld [vmem:[%s251 + $0x900] sm:$0xff]
        %v558 = vld [vmem:[%s251 + $0x908] sm:$0xff]
        %v559 = vld [vmem:[%s251 + $0x910] sm:$0xff]
        %v560 = vld [vmem:[%s251 + $0x918] sm:$0xff]
        %v561 = vld [vmem:[%s251 + $0x920] sm:$0xff]
        %v562 = vld [vmem:[%s251 + $0x928] sm:$0xff]
        %v563 = vld [vmem:[%s251 + $0x930] sm:$0xff]
        %v564 = vld [vmem:[%s251 + $0x938] sm:$0xff]
        %v565 = vld [vmem:[%s251 + $0x940] sm:$0xff]
        %v566 = vld [vmem:[%s251 + $0x948] sm:$0xff]
        %v567 = vld [vmem:[%s251 + $0x950] sm:$0xff]
        %v568 = vld [vmem:[%s251 + $0x958] sm:$0xff]
        %v569 = vld [vmem:[%s251 + $0x960] sm:$0xff]
        %v570 = vld [vmem:[%s251 + $0x968] sm:$0xff]
        %v571 = vld [vmem:[%s251 + $0x970] sm:$0xff]
        %v572 = vld [vmem:[%s251 + $0x978] sm:$0xff]
        %v573 = vld [vmem:[%s251 + $0x980] sm:$0xff]
        %v574 = vld [vmem:[%s251 + $0x988] sm:$0xff]
        %v575 = vld [vmem:[%s251 + $0x990] sm:$0xff]
        %v576 = vld [vmem:[%s251 + $0x998] sm:$0xff]
        %v577 = vld [vmem:[%s251 + $0x9a0] sm:$0xff]
        %v578 = vld [vmem:[%s251 + $0x9a8] sm:$0xff]
        %v579 = vld [vmem:[%s251 + $0x9b0] sm:$0xff]
        %v580 = vld [vmem:[%s251 + $0x9b8] sm:$0xff]
        %v581 = vld [vmem:[%s251 + $0x9c0] sm:$0xff]
        %v582 = vld [vmem:[%s251 + $0x9c8] sm:$0xff]
        %v583 = vld [vmem:[%s251 + $0x9d0] sm:$0xff]
        %v584 = vld [vmem:[%s251 + $0x9d8] sm:$0xff]
        %v585 = vld [vmem:[%s251 + $0x9e0] sm:$0xff]
        %v586 = vld [vmem:[%s251 + $0x9e8] sm:$0xff]
        %v587 = vld [vmem:[%s251 + $0x9f0] sm:$0xff]
        %v588 = vld [vmem:[%s251 + $0x9f8] sm:$0xff]
        %v589 = vld [vmem:[%s251 + $0xa00] sm:$0xff]
        %v590 = vld [vmem:[%s251 + $0xa08] sm:$0xff]
        %v591 = vld [vmem:[%s251 + $0xa10] sm:$0xff]
        %v592 = vld [vmem:[%s251 + $0xa18] sm:$0xff]
        %v593 = vld [vmem:[%s251 + $0xa20] sm:$0xff]
        %v594 = vld [vmem:[%s251 + $0xa28] sm:$0xff]
        %v595 = vld [vmem:[%s251 + $0xa30] sm:$0xff]
        %v596 = vld [vmem:[%s251 + $0xa38] sm:$0xff]
        %v597 = vld [vmem:[%s251 + $0xa40] sm:$0xff]
        %v598 = vld [vmem:[%s251 + $0xa48] sm:$0xff]
        %v599 = vld [vmem:[%s251 + $0xa50] sm:$0xff]
        %v600 = vld [vmem:[%s251 + $0xa58] sm:$0xff]
        %v601 = vld [vmem:[%s251 + $0xa60] sm:$0xff]
        %v602 = vld [vmem:[%s251 + $0xa68] sm:$0xff]
        %v603 = vld [vmem:[%s251 + $0xa70] sm:$0xff]
        %v604 = vld [vmem:[%s251 + $0xa78] sm:$0xff]
        %v605 = vld [vmem:[%s251 + $0xa80] sm:$0xff]
        %v606 = vld [vmem:[%s251 + $0xa88] sm:$0xff]
        %v607 = vld [vmem:[%s251 + $0xa90] sm:$0xff]
        %v608 = vld [vmem:[%s251 + $0xa98] sm:$0xff]
        %v609 = vld [vmem:[%s251 + $0xaa0] sm:$0xff]
        %v610 = vld [vmem:[%s251 + $0xaa8] sm:$0xff]
        %v611 = vld [vmem:[%s251 + $0xab0] sm:$0xff]
        %v612 = vld [vmem:[%s251 + $0xab8] sm:$0xff]
        %v613 = vld [vmem:[%s251 + $0xac0] sm:$0xff]
        %v614 = vld [vmem:[%s251 + $0xac8] sm:$0xff]
        %v615 = vld [vmem:[%s251 + $0xad0] sm:$0xff]
        %v616 = vld [vmem:[%s251 + $0xad8] sm:$0xff]
        %v617 = vld [vmem:[%s251 + $0xae0] sm:$0xff]
        %v618 = vld [vmem:[%s251 + $0xae8] sm:$0xff]
        %v619 = vld [vmem:[%s251 + $0xaf0] sm:$0xff]
        %v620 = vld [vmem:[%s251 + $0xaf8] sm:$0xff]
        %v621 = vld [vmem:[%s251 + $0xb00] sm:$0xff]
        %v622 = vld [vmem:[%s251 + $0xb08] sm:$0xff]
        %v623 = vld [vmem:[%s251 + $0xb10] sm:$0xff]
        %v624 = vld [vmem:[%s251 + $0xb18] sm:$0xff]
        %v625 = vld [vmem:[%s251 + $0xb20] sm:$0xff]
        %v626 = vld [vmem:[%s251 + $0xb28] sm:$0xff]
        %v627 = vld [vmem:[%s251 + $0xb30] sm:$0xff]
        %v628 = vld [vmem:[%s251 + $0xb38] sm:$0xff]
        %v629 = vld [vmem:[%s251 + $0xb40] sm:$0xff]
        %v630 = vld [vmem:[%s251 + $0xb48] sm:$0xff]
        %v631 = vld [vmem:[%s251 + $0xb50] sm:$0xff]
        %v632 = vld [vmem:[%s251 + $0xb58] sm:$0xff]
        %v633 = vld [vmem:[%s251 + $0xb60] sm:$0xff]
        %v634 = vld [vmem:[%s251 + $0xb68] sm:$0xff]
        %v635 = vld [vmem:[%s251 + $0xb70] sm:$0xff]
        %v636 = vld [vmem:[%s251 + $0xb78] sm:$0xff]
        %v637 = vld [vmem:[%s251 + $0xb80] sm:$0xff]
        %v638 = vld [vmem:[%s251 + $0xb88] sm:$0xff]
        %v639 = vld [vmem:[%s251 + $0xb90] sm:$0xff]
        %v640 = vld [vmem:[%s251 + $0xb98] sm:$0xff]
        %v641 = vld [vmem:[%s251 + $0xba0] sm:$0xff]
        %v642 = vld [vmem:[%s251 + $0xba8] sm:$0xff]
        %v643 = vld [vmem:[%s251 + $0xbb0] sm:$0xff]
        %v644 = vld [vmem:[%s251 + $0xbb8] sm:$0xff]
        %v645 = vld [vmem:[%s251 + $0xbc0] sm:$0xff]
        %v646 = vld [vmem:[%s251 + $0xbc8] sm:$0xff]
        %v647 = vld [vmem:[%s251 + $0xbd0] sm:$0xff]
        %v648 = vld [vmem:[%s251 + $0xbd8] sm:$0xff]
        %v649 = vld [vmem:[%s251 + $0xbe0] sm:$0xff]
        %v650 = vld [vmem:[%s251 + $0xbe8] sm:$0xff]
        %v651 = vld [vmem:[%s251 + $0xbf0] sm:$0xff]
        %v652 = vld [vmem:[%s251 + $0xbf8] sm:$0xff]
        %v653 = vld [vmem:[%s251 + $0xc00] sm:$0xff]
        %v654 = vld [vmem:[%s251 + $0xc08] sm:$0xff]
        %v655 = vld [vmem:[%s251 + $0xc10] sm:$0xff]
        %v656 = vld [vmem:[%s251 + $0xc18] sm:$0xff]
        %v657 = vld [vmem:[%s251 + $0xc20] sm:$0xff]
        %v658 = vld [vmem:[%s251 + $0xc28] sm:$0xff]
        %v659 = vld [vmem:[%s251 + $0xc30] sm:$0xff]
        %v660 = vld [vmem:[%s251 + $0xc38] sm:$0xff]
        %v661 = vld [vmem:[%s251 + $0xc40] sm:$0xff]
        %v662 = vld [vmem:[%s251 + $0xc48] sm:$0xff]
        %v663 = vld [vmem:[%s251 + $0xc50] sm:$0xff]
        %v664 = vld [vmem:[%s251 + $0xc58] sm:$0xff]
        %v665 = vld [vmem:[%s251 + $0xc60] sm:$0xff]
        %v666 = vld [vmem:[%s251 + $0xc68] sm:$0xff]
        %v667 = vld [vmem:[%s251 + $0xc70] sm:$0xff]
        %v668 = vld [vmem:[%s251 + $0xc78] sm:$0xff]
        %v669 = vld [vmem:[%s251 + $0xc80] sm:$0xff]
        %v670 = vld [vmem:[%s251 + $0xc88] sm:$0xff]
        %v671 = vld [vmem:[%s251 + $0xc90] sm:$0xff]
        %v672 = vld [vmem:[%s251 + $0xc98] sm:$0xff]
        %v673 = vld [vmem:[%s251 + $0xca0] sm:$0xff]
        %v674 = vld [vmem:[%s251 + $0xca8] sm:$0xff]
        %v675 = vld [vmem:[%s251 + $0xcb0] sm:$0xff]
        %v676 = vld [vmem:[%s251 + $0xcb8] sm:$0xff]
        %v677 = vld [vmem:[%s251 + $0xcc0] sm:$0xff]
        %v678 = vld [vmem:[%s251 + $0xcc8] sm:$0xff]
        %v679 = vld [vmem:[%s251 + $0xcd0] sm:$0xff]
        %v680 = vld [vmem:[%s251 + $0xcd8] sm:$0xff]
        %v681 = vld [vmem:[%s251 + $0xce0] sm:$0xff]
        %v682 = vld [vmem:[%s251 + $0xce8] sm:$0xff]
        %v683 = vld [vmem:[%s251 + $0xcf0] sm:$0xff]
        %v684 = vld [vmem:[%s251 + $0xcf8] sm:$0xff]
        %v685 = vld [vmem:[%s251 + $0xd00] sm:$0xff]
        %v686 = vld [vmem:[%s251 + $0xd08] sm:$0xff]
        %v687 = vld [vmem:[%s251 + $0xd10] sm:$0xff]
        %v688 = vld [vmem:[%s251 + $0xd18] sm:$0xff]
        %v689 = vld [vmem:[%s251 + $0xd20] sm:$0xff]
        %v690 = vld [vmem:[%s251 + $0xd28] sm:$0xff]
        %v691 = vld [vmem:[%s251 + $0xd30] sm:$0xff]
        %v692 = vld [vmem:[%s251 + $0xd38] sm:$0xff]
        %v693 = vld [vmem:[%s251 + $0xd40] sm:$0xff]
        %v694 = vld [vmem:[%s251 + $0xd48] sm:$0xff]
        %v695 = vld [vmem:[%s251 + $0xd50] sm:$0xff]
        %v696 = vld [vmem:[%s251 + $0xd58] sm:$0xff]
        %v697 = vld [vmem:[%s251 + $0xd60] sm:$0xff]
        %v698 = vld [vmem:[%s251 + $0xd68] sm:$0xff]
        %v699 = vld [vmem:[%s251 + $0xd70] sm:$0xff]
        %v700 = vld [vmem:[%s251 + $0xd78] sm:$0xff]
        %v701 = vld [vmem:[%s251 + $0xd80] sm:$0xff]
        %v702 = vld [vmem:[%s251 + $0xd88] sm:$0xff]
        %v703 = vld [vmem:[%s251 + $0xd90] sm:$0xff]
        %v704 = vld [vmem:[%s251 + $0xd98] sm:$0xff]
        %v705 = vld [vmem:[%s251 + $0xda0] sm:$0xff]
        %v706 = vld [vmem:[%s251 + $0xda8] sm:$0xff]
        %v707 = vld [vmem:[%s251 + $0xdb0] sm:$0xff]
        %v708 = vld [vmem:[%s251 + $0xdb8] sm:$0xff]
        %v709 = vld [vmem:[%s251 + $0xdc0] sm:$0xff]
        %v710 = vld [vmem:[%s251 + $0xdc8] sm:$0xff]
        %v711 = vld [vmem:[%s251 + $0xdd0] sm:$0xff]
        %v712 = vld [vmem:[%s251 + $0xdd8] sm:$0xff]
        %v713 = vld [vmem:[%s251 + $0xde0] sm:$0xff]
        %v714 = vld [vmem:[%s251 + $0xde8] sm:$0xff]
        %v715 = vld [vmem:[%s251 + $0xdf0] sm:$0xff]
        %v716 = vld [vmem:[%s251 + $0xdf8] sm:$0xff]
        %v717 = vld [vmem:[%s251 + $0xe00] sm:$0xff]
        %v718 = vld [vmem:[%s251 + $0xe08] sm:$0xff]
        %v719 = vld [vmem:[%s251 + $0xe10] sm:$0xff]
        %v720 = vld [vmem:[%s251 + $0xe18] sm:$0xff]
        %v721 = vld [vmem:[%s251 + $0xe20] sm:$0xff]
        %v722 = vld [vmem:[%s251 + $0xe28] sm:$0xff]
        %v723 = vld [vmem:[%s251 + $0xe30] sm:$0xff]
        %v724 = vld [vmem:[%s251 + $0xe38] sm:$0xff]
        %v725 = vld [vmem:[%s251 + $0xe40] sm:$0xff]
        %v726 = vld [vmem:[%s251 + $0xe48] sm:$0xff]
        %v727 = vld [vmem:[%s251 + $0xe50] sm:$0xff]
        %v728 = vld [vmem:[%s251 + $0xe58] sm:$0xff]
        %v729 = vld [vmem:[%s251 + $0xe60] sm:$0xff]
        %v730 = vld [vmem:[%s251 + $0xe68] sm:$0xff]
        %v731 = vld [vmem:[%s251 + $0xe70] sm:$0xff]
        %v732 = vld [vmem:[%s251 + $0xe78] sm:$0xff]
        %v733 = vld [vmem:[%s251 + $0xe80] sm:$0xff]
        %v734 = vld [vmem:[%s251 + $0xe88] sm:$0xff]
        %v735 = vld [vmem:[%s251 + $0xe90] sm:$0xff]
        %v736 = vld [vmem:[%s251 + $0xe98] sm:$0xff]
        %v737 = vld [vmem:[%s251 + $0xea0] sm:$0xff]
        %v738 = vld [vmem:[%s251 + $0xea8] sm:$0xff]
        %v739 = vld [vmem:[%s251 + $0xeb0] sm:$0xff]
        %v740 = vld [vmem:[%s251 + $0xeb8] sm:$0xff]
        %v741 = vld [vmem:[%s251 + $0xec0] sm:$0xff]
        %v742 = vld [vmem:[%s251 + $0xec8] sm:$0xff]
        %v743 = vld [vmem:[%s251 + $0xed0] sm:$0xff]
        %v744 = vld [vmem:[%s251 + $0xed8] sm:$0xff]
        %v745 = vld [vmem:[%s251 + $0xee0] sm:$0xff]
        %v746 = vld [vmem:[%s251 + $0xee8] sm:$0xff]
        %v747 = vld [vmem:[%s251 + $0xef0] sm:$0xff]
        %v748 = vld [vmem:[%s251 + $0xef8] sm:$0xff]
        %v749 = vld [vmem:[%s251 + $0xf00] sm:$0xff]
        %v750 = vld [vmem:[%s251 + $0xf08] sm:$0xff]
        %v751 = vld [vmem:[%s251 + $0xf10] sm:$0xff]
        %v752 = vld [vmem:[%s251 + $0xf18] sm:$0xff]
        %v753 = vld [vmem:[%s251 + $0xf20] sm:$0xff]
        %v754 = vld [vmem:[%s251 + $0xf28] sm:$0xff]
        %v755 = vld [vmem:[%s251 + $0xf30] sm:$0xff]
        %v756 = vld [vmem:[%s251 + $0xf38] sm:$0xff]
        %v757 = vld [vmem:[%s251 + $0xf40] sm:$0xff]
        %v758 = vld [vmem:[%s251 + $0xf48] sm:$0xff]
        %v759 = vld [vmem:[%s251 + $0xf50] sm:$0xff]
        %v760 = vld [vmem:[%s251 + $0xf58] sm:$0xff]
        %v761 = vld [vmem:[%s251 + $0xf60] sm:$0xff]
        %v762 = vld [vmem:[%s251 + $0xf68] sm:$0xff]
        %v763 = vld [vmem:[%s251 + $0xf70] sm:$0xff]
        %v764 = vld [vmem:[%s251 + $0xf78] sm:$0xff]
        %v765 = vld [vmem:[%s251 + $0xf80] sm:$0xff]
        %v766 = vld [vmem:[%s251 + $0xf88] sm:$0xff]
        %v767 = vld [vmem:[%s251 + $0xf90] sm:$0xff]
        %v768 = vld [vmem:[%s251 + $0xf98] sm:$0xff]
        %v769 = vld [vmem:[%s251 + $0xfa0] sm:$0xff]
        %v770 = vld [vmem:[%s251 + $0xfa8] sm:$0xff]
        %v771 = vld [vmem:[%s251 + $0xfb0] sm:$0xff]
        %v772 = vld [vmem:[%s251 + $0xfb8] sm:$0xff]
        %v773 = vld [vmem:[%s251 + $0xfc0] sm:$0xff]
        %v774 = vld [vmem:[%s251 + $0xfc8] sm:$0xff]
        %v775 = vld [vmem:[%s251 + $0xfd0] sm:$0xff]
        %v776 = vld [vmem:[%s251 + $0xfd8] sm:$0xff]
        %v777 = vld [vmem:[%s251 + $0xfe0] sm:$0xff]
        %v778 = vld [vmem:[%s251 + $0xfe8] sm:$0xff]
        %v779 = vld [vmem:[%s251 + $0xff0] sm:$0xff]
        %v780 = vld [vmem:[%s251 + $0xff8] sm:$0xff]
        %v781 = vld [vmem:[%s211] sm:$0xff]
        %v782 = vld [vmem:[%s211 + $0x8] sm:$0xff]
        %v783 = vld [vmem:[%s211 + $0x10] sm:$0xff]
        %v784 = vld [vmem:[%s211 + $0x18] sm:$0xff]
        %v785 = vld [vmem:[%s211 + $0x20] sm:$0xff]
        %v786 = vld [vmem:[%s211 + $0x28] sm:$0xff]
        %v787 = vld [vmem:[%s211 + $0x30] sm:$0xff]
        %v788 = vld [vmem:[%s211 + $0x38] sm:$0xff]
        %v789 = vld [vmem:[%s211 + $0x40] sm:$0xff]
        %v790 = vld [vmem:[%s211 + $0x48] sm:$0xff]
        %v791 = vld [vmem:[%s211 + $0x50] sm:$0xff]
        %v792 = vld [vmem:[%s211 + $0x58] sm:$0xff]
        %v793 = vld [vmem:[%s211 + $0x60] sm:$0xff]
        %v794 = vld [vmem:[%s211 + $0x68] sm:$0xff]
        %v795 = vld [vmem:[%s211 + $0x70] sm:$0xff]
        %v796 = vld [vmem:[%s211 + $0x78] sm:$0xff]
        %v797 = vld [vmem:[%s211 + $0x80] sm:$0xff]
        %v798 = vld [vmem:[%s211 + $0x88] sm:$0xff]
        %v799 = vld [vmem:[%s211 + $0x90] sm:$0xff]
        %v800 = vld [vmem:[%s211 + $0x98] sm:$0xff]
        %v801 = vld [vmem:[%s211 + $0xa0] sm:$0xff]
        %v802 = vld [vmem:[%s211 + $0xa8] sm:$0xff]
        %v803 = vld [vmem:[%s211 + $0xb0] sm:$0xff]
        %v804 = vld [vmem:[%s211 + $0xb8] sm:$0xff]
        %v805 = vld [vmem:[%s211 + $0xc0] sm:$0xff]
        %v806 = vld [vmem:[%s211 + $0xc8] sm:$0xff]
        %v807 = vld [vmem:[%s211 + $0xd0] sm:$0xff]
        %v808 = vld [vmem:[%s211 + $0xd8] sm:$0xff]
        %v809 = vld [vmem:[%s211 + $0xe0] sm:$0xff]
        %v810 = vld [vmem:[%s211 + $0xe8] sm:$0xff]
        %v811 = vld [vmem:[%s211 + $0xf0] sm:$0xff]
        %v812 = vld [vmem:[%s211 + $0xf8] sm:$0xff]
        %v813 = vld [vmem:[%s211 + $0x100] sm:$0xff]
        %v814 = vld [vmem:[%s211 + $0x108] sm:$0xff]
        %v815 = vld [vmem:[%s211 + $0x110] sm:$0xff]
        %v816 = vld [vmem:[%s211 + $0x118] sm:$0xff]
        %v817 = vld [vmem:[%s211 + $0x120] sm:$0xff]
        %v818 = vld [vmem:[%s211 + $0x128] sm:$0xff]
        %v819 = vld [vmem:[%s211 + $0x130] sm:$0xff]
        %v820 = vld [vmem:[%s211 + $0x138] sm:$0xff]
        %v821 = vld [vmem:[%s211 + $0x140] sm:$0xff]
        %v822 = vld [vmem:[%s211 + $0x148] sm:$0xff]
        %v823 = vld [vmem:[%s211 + $0x150] sm:$0xff]
        %v824 = vld [vmem:[%s211 + $0x158] sm:$0xff]
        %v825 = vld [vmem:[%s211 + $0x160] sm:$0xff]
        %v826 = vld [vmem:[%s211 + $0x168] sm:$0xff]
        %v827 = vld [vmem:[%s211 + $0x170] sm:$0xff]
        %v828 = vld [vmem:[%s211 + $0x178] sm:$0xff]
        %v829 = vld [vmem:[%s211 + $0x180] sm:$0xff]
        %v830 = vld [vmem:[%s211 + $0x188] sm:$0xff]
        %v831 = vld [vmem:[%s211 + $0x190] sm:$0xff]
        %v832 = vld [vmem:[%s211 + $0x198] sm:$0xff]
        %v833 = vld [vmem:[%s211 + $0x1a0] sm:$0xff]
        %v834 = vld [vmem:[%s211 + $0x1a8] sm:$0xff]
        %v835 = vld [vmem:[%s211 + $0x1b0] sm:$0xff]
        %v836 = vld [vmem:[%s211 + $0x1b8] sm:$0xff]
        %v837 = vld [vmem:[%s211 + $0x1c0] sm:$0xff]
        %v838 = vld [vmem:[%s211 + $0x1c8] sm:$0xff]
        %v839 = vld [vmem:[%s211 + $0x1d0] sm:$0xff]
        %v840 = vld [vmem:[%s211 + $0x1d8] sm:$0xff]
        %v841 = vld [vmem:[%s211 + $0x1e0] sm:$0xff]
        %v842 = vld [vmem:[%s211 + $0x1e8] sm:$0xff]
        %v843 = vld [vmem:[%s211 + $0x1f0] sm:$0xff]
        %v844 = vld [vmem:[%s211 + $0x1f8] sm:$0xff]
        %v845 = vld [vmem:[%s211 + $0x200] sm:$0xff]
        %v846 = vld [vmem:[%s211 + $0x208] sm:$0xff]
        %v847 = vld [vmem:[%s211 + $0x210] sm:$0xff]
        %v848 = vld [vmem:[%s211 + $0x218] sm:$0xff]
        %v849 = vld [vmem:[%s211 + $0x220] sm:$0xff]
        %v850 = vld [vmem:[%s211 + $0x228] sm:$0xff]
        %v851 = vld [vmem:[%s211 + $0x230] sm:$0xff]
        %v852 = vld [vmem:[%s211 + $0x238] sm:$0xff]
        %v853 = vld [vmem:[%s211 + $0x240] sm:$0xff]
        %v854 = vld [vmem:[%s211 + $0x248] sm:$0xff]
        %v855 = vld [vmem:[%s211 + $0x250] sm:$0xff]
        %v856 = vld [vmem:[%s211 + $0x258] sm:$0xff]
        %v857 = vld [vmem:[%s211 + $0x260] sm:$0xff]
        %v858 = vld [vmem:[%s211 + $0x268] sm:$0xff]
        %v859 = vld [vmem:[%s211 + $0x270] sm:$0xff]
        %v860 = vld [vmem:[%s211 + $0x278] sm:$0xff]
        %v861 = vld [vmem:[%s211 + $0x280] sm:$0xff]
        %v862 = vld [vmem:[%s211 + $0x288] sm:$0xff]
        %v863 = vld [vmem:[%s211 + $0x290] sm:$0xff]
        %v864 = vld [vmem:[%s211 + $0x298] sm:$0xff]
        %v865 = vld [vmem:[%s211 + $0x2a0] sm:$0xff]
        %v866 = vld [vmem:[%s211 + $0x2a8] sm:$0xff]
        %v867 = vld [vmem:[%s211 + $0x2b0] sm:$0xff]
        %v868 = vld [vmem:[%s211 + $0x2b8] sm:$0xff]
        %v869 = vld [vmem:[%s211 + $0x2c0] sm:$0xff]
        %v870 = vld [vmem:[%s211 + $0x2c8] sm:$0xff]
        %v871 = vld [vmem:[%s211 + $0x2d0] sm:$0xff]
        %v872 = vld [vmem:[%s211 + $0x2d8] sm:$0xff]
        %v873 = vld [vmem:[%s211 + $0x2e0] sm:$0xff]
        %v874 = vld [vmem:[%s211 + $0x2e8] sm:$0xff]
        %v875 = vld [vmem:[%s211 + $0x2f0] sm:$0xff]
        %v876 = vld [vmem:[%s211 + $0x2f8] sm:$0xff]
        %v877 = vld [vmem:[%s211 + $0x300] sm:$0xff]
        %v878 = vld [vmem:[%s211 + $0x308] sm:$0xff]
        %v879 = vld [vmem:[%s211 + $0x310] sm:$0xff]
        %v880 = vld [vmem:[%s211 + $0x318] sm:$0xff]
        %v881 = vld [vmem:[%s211 + $0x320] sm:$0xff]
        %v882 = vld [vmem:[%s211 + $0x328] sm:$0xff]
        %v883 = vld [vmem:[%s211 + $0x330] sm:$0xff]
        %v884 = vld [vmem:[%s211 + $0x338] sm:$0xff]
        %v885 = vld [vmem:[%s211 + $0x340] sm:$0xff]
        %v886 = vld [vmem:[%s211 + $0x348] sm:$0xff]
        %v887 = vld [vmem:[%s211 + $0x350] sm:$0xff]
        %v888 = vld [vmem:[%s211 + $0x358] sm:$0xff]
        %v889 = vld [vmem:[%s211 + $0x360] sm:$0xff]
        %v890 = vld [vmem:[%s211 + $0x368] sm:$0xff]
        %v891 = vld [vmem:[%s211 + $0x370] sm:$0xff]
        %v892 = vld [vmem:[%s211 + $0x378] sm:$0xff]
        %v893 = vld [vmem:[%s211 + $0x380] sm:$0xff]
        %v894 = vld [vmem:[%s211 + $0x388] sm:$0xff]
        %v895 = vld [vmem:[%s211 + $0x390] sm:$0xff]
        %v896 = vld [vmem:[%s211 + $0x398] sm:$0xff]
        %v897 = vld [vmem:[%s211 + $0x3a0] sm:$0xff]
        %v898 = vld [vmem:[%s211 + $0x3a8] sm:$0xff]
        %v899 = vld [vmem:[%s211 + $0x3b0] sm:$0xff]
        %v900 = vld [vmem:[%s211 + $0x3b8] sm:$0xff]
        %v901 = vld [vmem:[%s211 + $0x3c0] sm:$0xff]
        %v902 = vld [vmem:[%s211 + $0x3c8] sm:$0xff]
        %v903 = vld [vmem:[%s211 + $0x3d0] sm:$0xff]
        %v904 = vld [vmem:[%s211 + $0x3d8] sm:$0xff]
        %v905 = vld [vmem:[%s211 + $0x3e0] sm:$0xff]
        %v906 = vld [vmem:[%s211 + $0x3e8] sm:$0xff]
        %v907 = vld [vmem:[%s211 + $0x3f0] sm:$0xff]
        %v908 = vld [vmem:[%s211 + $0x3f8] sm:$0xff]
        %v909 = vld [vmem:[%s211 + $0x400] sm:$0xff]
        %v910 = vld [vmem:[%s211 + $0x408] sm:$0xff]
        %v911 = vld [vmem:[%s211 + $0x410] sm:$0xff]
        %v912 = vld [vmem:[%s211 + $0x418] sm:$0xff]
        %v913 = vld [vmem:[%s211 + $0x420] sm:$0xff]
        %v914 = vld [vmem:[%s211 + $0x428] sm:$0xff]
        %v915 = vld [vmem:[%s211 + $0x430] sm:$0xff]
        %v916 = vld [vmem:[%s211 + $0x438] sm:$0xff]
        %v917 = vld [vmem:[%s211 + $0x440] sm:$0xff]
        %v918 = vld [vmem:[%s211 + $0x448] sm:$0xff]
        %v919 = vld [vmem:[%s211 + $0x450] sm:$0xff]
        %v920 = vld [vmem:[%s211 + $0x458] sm:$0xff]
        %v921 = vld [vmem:[%s211 + $0x460] sm:$0xff]
        %v922 = vld [vmem:[%s211 + $0x468] sm:$0xff]
        %v923 = vld [vmem:[%s211 + $0x470] sm:$0xff]
        %v924 = vld [vmem:[%s211 + $0x478] sm:$0xff]
        %v925 = vld [vmem:[%s211 + $0x480] sm:$0xff]
        %v926 = vld [vmem:[%s211 + $0x488] sm:$0xff]
        %v927 = vld [vmem:[%s211 + $0x490] sm:$0xff]
        %v928 = vld [vmem:[%s211 + $0x498] sm:$0xff]
        %v929 = vld [vmem:[%s211 + $0x4a0] sm:$0xff]
        %v930 = vld [vmem:[%s211 + $0x4a8] sm:$0xff]
        %v931 = vld [vmem:[%s211 + $0x4b0] sm:$0xff]
        %v932 = vld [vmem:[%s211 + $0x4b8] sm:$0xff]
        %v933 = vld [vmem:[%s211 + $0x4c0] sm:$0xff]
        %v934 = vld [vmem:[%s211 + $0x4c8] sm:$0xff]
        %v935 = vld [vmem:[%s211 + $0x4d0] sm:$0xff]
        %v936 = vld [vmem:[%s211 + $0x4d8] sm:$0xff]
        %v937 = vld [vmem:[%s211 + $0x4e0] sm:$0xff]
        %v938 = vld [vmem:[%s211 + $0x4e8] sm:$0xff]
        %v939 = vld [vmem:[%s211 + $0x4f0] sm:$0xff]
        %v940 = vld [vmem:[%s211 + $0x4f8] sm:$0xff]
        %v941 = vld [vmem:[%s211 + $0x500] sm:$0xff]
        %v942 = vld [vmem:[%s211 + $0x508] sm:$0xff]
        %v943 = vld [vmem:[%s211 + $0x510] sm:$0xff]
        %v944 = vld [vmem:[%s211 + $0x518] sm:$0xff]
        %v945 = vld [vmem:[%s211 + $0x520] sm:$0xff]
        %v946 = vld [vmem:[%s211 + $0x528] sm:$0xff]
        %v947 = vld [vmem:[%s211 + $0x530] sm:$0xff]
        %v948 = vld [vmem:[%s211 + $0x538] sm:$0xff]
        %v949 = vld [vmem:[%s211 + $0x540] sm:$0xff]
        %v950 = vld [vmem:[%s211 + $0x548] sm:$0xff]
        %v951 = vld [vmem:[%s211 + $0x550] sm:$0xff]
        %v952 = vld [vmem:[%s211 + $0x558] sm:$0xff]
        %v953 = vld [vmem:[%s211 + $0x560] sm:$0xff]
        %v954 = vld [vmem:[%s211 + $0x568] sm:$0xff]
        %v955 = vld [vmem:[%s211 + $0x570] sm:$0xff]
        %v956 = vld [vmem:[%s211 + $0x578] sm:$0xff]
        %v957 = vld [vmem:[%s211 + $0x580] sm:$0xff]
        %v958 = vld [vmem:[%s211 + $0x588] sm:$0xff]
        %v959 = vld [vmem:[%s211 + $0x590] sm:$0xff]
        %v960 = vld [vmem:[%s211 + $0x598] sm:$0xff]
        %v961 = vld [vmem:[%s211 + $0x5a0] sm:$0xff]
        %v962 = vld [vmem:[%s211 + $0x5a8] sm:$0xff]
        %v963 = vld [vmem:[%s211 + $0x5b0] sm:$0xff]
        %v964 = vld [vmem:[%s211 + $0x5b8] sm:$0xff]
        %v965 = vld [vmem:[%s211 + $0x5c0] sm:$0xff]
        %v966 = vld [vmem:[%s211 + $0x5c8] sm:$0xff]
        %v967 = vld [vmem:[%s211 + $0x5d0] sm:$0xff]
        %v968 = vld [vmem:[%s211 + $0x5d8] sm:$0xff]
        %v969 = vld [vmem:[%s211 + $0x5e0] sm:$0xff]
        %v970 = vld [vmem:[%s211 + $0x5e8] sm:$0xff]
        %v971 = vld [vmem:[%s211 + $0x5f0] sm:$0xff]
        %v972 = vld [vmem:[%s211 + $0x5f8] sm:$0xff]
        %v973 = vld [vmem:[%s211 + $0x600] sm:$0xff]
        %v974 = vld [vmem:[%s211 + $0x608] sm:$0xff]
        %v975 = vld [vmem:[%s211 + $0x610] sm:$0xff]
        %v976 = vld [vmem:[%s211 + $0x618] sm:$0xff]
        %v977 = vld [vmem:[%s211 + $0x620] sm:$0xff]
        %v978 = vld [vmem:[%s211 + $0x628] sm:$0xff]
        %v979 = vld [vmem:[%s211 + $0x630] sm:$0xff]
        %v980 = vld [vmem:[%s211 + $0x638] sm:$0xff]
        %v981 = vld [vmem:[%s211 + $0x640] sm:$0xff]
        %v982 = vld [vmem:[%s211 + $0x648] sm:$0xff]
        %v983 = vld [vmem:[%s211 + $0x650] sm:$0xff]
        %v984 = vld [vmem:[%s211 + $0x658] sm:$0xff]
        %v985 = vld [vmem:[%s211 + $0x660] sm:$0xff]
        %v986 = vld [vmem:[%s211 + $0x668] sm:$0xff]
        %v987 = vld [vmem:[%s211 + $0x670] sm:$0xff]
        %v988 = vld [vmem:[%s211 + $0x678] sm:$0xff]
        %v989 = vld [vmem:[%s211 + $0x680] sm:$0xff]
        %v990 = vld [vmem:[%s211 + $0x688] sm:$0xff]
        %v991 = vld [vmem:[%s211 + $0x690] sm:$0xff]
        %v992 = vld [vmem:[%s211 + $0x698] sm:$0xff]
        %v993 = vld [vmem:[%s211 + $0x6a0] sm:$0xff]
        %v994 = vld [vmem:[%s211 + $0x6a8] sm:$0xff]
        %v995 = vld [vmem:[%s211 + $0x6b0] sm:$0xff]
        %v996 = vld [vmem:[%s211 + $0x6b8] sm:$0xff]
        %v997 = vld [vmem:[%s211 + $0x6c0] sm:$0xff]
        %v998 = vld [vmem:[%s211 + $0x6c8] sm:$0xff]
        %v999 = vld [vmem:[%s211 + $0x6d0] sm:$0xff]
        %v1000 = vld [vmem:[%s211 + $0x6d8] sm:$0xff]
        %v1001 = vld [vmem:[%s211 + $0x6e0] sm:$0xff]
        %v1002 = vld [vmem:[%s211 + $0x6e8] sm:$0xff]
        %v1003 = vld [vmem:[%s211 + $0x6f0] sm:$0xff]
        %v1004 = vld [vmem:[%s211 + $0x6f8] sm:$0xff]
        %v1005 = vld [vmem:[%s211 + $0x700] sm:$0xff]
        %v1006 = vld [vmem:[%s211 + $0x708] sm:$0xff]
        %v1007 = vld [vmem:[%s211 + $0x710] sm:$0xff]
        %v1008 = vld [vmem:[%s211 + $0x718] sm:$0xff]
        %v1009 = vld [vmem:[%s211 + $0x720] sm:$0xff]
        %v1010 = vld [vmem:[%s211 + $0x728] sm:$0xff]
        %v1011 = vld [vmem:[%s211 + $0x730] sm:$0xff]
        %v1012 = vld [vmem:[%s211 + $0x738] sm:$0xff]
        %v1013 = vld [vmem:[%s211 + $0x740] sm:$0xff]
        %v1014 = vld [vmem:[%s211 + $0x748] sm:$0xff]
        %v1015 = vld [vmem:[%s211 + $0x750] sm:$0xff]
        %v1016 = vld [vmem:[%s211 + $0x758] sm:$0xff]
        %v1017 = vld [vmem:[%s211 + $0x760] sm:$0xff]
        %v1018 = vld [vmem:[%s211 + $0x768] sm:$0xff]
        %v1019 = vld [vmem:[%s211 + $0x770] sm:$0xff]
        %v1020 = vld [vmem:[%s211 + $0x778] sm:$0xff]
        %v1021 = vld [vmem:[%s211 + $0x780] sm:$0xff]
        %v1022 = vld [vmem:[%s211 + $0x788] sm:$0xff]
        %v1023 = vld [vmem:[%s211 + $0x790] sm:$0xff]
        %v1024 = vld [vmem:[%s211 + $0x798] sm:$0xff]
        %v1025 = vld [vmem:[%s211 + $0x7a0] sm:$0xff]
        %v1026 = vld [vmem:[%s211 + $0x7a8] sm:$0xff]
        %v1027 = vld [vmem:[%s211 + $0x7b0] sm:$0xff]
        %v1028 = vld [vmem:[%s211 + $0x7b8] sm:$0xff]
        %v1029 = vld [vmem:[%s211 + $0x7c0] sm:$0xff]
        %v1030 = vld [vmem:[%s211 + $0x7c8] sm:$0xff]
        %v1031 = vld [vmem:[%s211 + $0x7d0] sm:$0xff]
        %v1032 = vld [vmem:[%s211 + $0x7d8] sm:$0xff]
        %v1033 = vld [vmem:[%s211 + $0x7e0] sm:$0xff]
        %v1034 = vld [vmem:[%s211 + $0x7e8] sm:$0xff]
        %v1035 = vld [vmem:[%s211 + $0x7f0] sm:$0xff]
        %v1036 = vld [vmem:[%s211 + $0x7f8] sm:$0xff]
        %v1037 = vld [vmem:[%s211 + $0x800] sm:$0xff]
        %v1038 = vld [vmem:[%s211 + $0x808] sm:$0xff]
        %v1039 = vld [vmem:[%s211 + $0x810] sm:$0xff]
        %v1040 = vld [vmem:[%s211 + $0x818] sm:$0xff]
        %v1041 = vld [vmem:[%s211 + $0x820] sm:$0xff]
        %v1042 = vld [vmem:[%s211 + $0x828] sm:$0xff]
        %v1043 = vld [vmem:[%s211 + $0x830] sm:$0xff]
        %v1044 = vld [vmem:[%s211 + $0x838] sm:$0xff]
        %v1045 = vld [vmem:[%s211 + $0x840] sm:$0xff]
        %v1046 = vld [vmem:[%s211 + $0x848] sm:$0xff]
        %v1047 = vld [vmem:[%s211 + $0x850] sm:$0xff]
        %v1048 = vld [vmem:[%s211 + $0x858] sm:$0xff]
        %v1049 = vld [vmem:[%s211 + $0x860] sm:$0xff]
        %v1050 = vld [vmem:[%s211 + $0x868] sm:$0xff]
        %v1051 = vld [vmem:[%s211 + $0x870] sm:$0xff]
        %v1052 = vld [vmem:[%s211 + $0x878] sm:$0xff]
        %v1053 = vld [vmem:[%s211 + $0x880] sm:$0xff]
        %v1054 = vld [vmem:[%s211 + $0x888] sm:$0xff]
        %v1055 = vld [vmem:[%s211 + $0x890] sm:$0xff]
        %v1056 = vld [vmem:[%s211 + $0x898] sm:$0xff]
        %v1057 = vld [vmem:[%s211 + $0x8a0] sm:$0xff]
        %v1058 = vld [vmem:[%s211 + $0x8a8] sm:$0xff]
        %v1059 = vld [vmem:[%s211 + $0x8b0] sm:$0xff]
        %v1060 = vld [vmem:[%s211 + $0x8b8] sm:$0xff]
        %v1061 = vld [vmem:[%s211 + $0x8c0] sm:$0xff]
        %v1062 = vld [vmem:[%s211 + $0x8c8] sm:$0xff]
        %v1063 = vld [vmem:[%s211 + $0x8d0] sm:$0xff]
        %v1064 = vld [vmem:[%s211 + $0x8d8] sm:$0xff]
        %v1065 = vld [vmem:[%s211 + $0x8e0] sm:$0xff]
        %v1066 = vld [vmem:[%s211 + $0x8e8] sm:$0xff]
        %v1067 = vld [vmem:[%s211 + $0x8f0] sm:$0xff]
        %v1068 = vld [vmem:[%s211 + $0x8f8] sm:$0xff]
        %v1069 = vld [vmem:[%s211 + $0x900] sm:$0xff]
        %v1070 = vld [vmem:[%s211 + $0x908] sm:$0xff]
        %v1071 = vld [vmem:[%s211 + $0x910] sm:$0xff]
        %v1072 = vld [vmem:[%s211 + $0x918] sm:$0xff]
        %v1073 = vld [vmem:[%s211 + $0x920] sm:$0xff]
        %v1074 = vld [vmem:[%s211 + $0x928] sm:$0xff]
        %v1075 = vld [vmem:[%s211 + $0x930] sm:$0xff]
        %v1076 = vld [vmem:[%s211 + $0x938] sm:$0xff]
        %v1077 = vld [vmem:[%s211 + $0x940] sm:$0xff]
        %v1078 = vld [vmem:[%s211 + $0x948] sm:$0xff]
        %v1079 = vld [vmem:[%s211 + $0x950] sm:$0xff]
        %v1080 = vld [vmem:[%s211 + $0x958] sm:$0xff]
        %v1081 = vld [vmem:[%s211 + $0x960] sm:$0xff]
        %v1082 = vld [vmem:[%s211 + $0x968] sm:$0xff]
        %v1083 = vld [vmem:[%s211 + $0x970] sm:$0xff]
        %v1084 = vld [vmem:[%s211 + $0x978] sm:$0xff]
        %v1085 = vld [vmem:[%s211 + $0x980] sm:$0xff]
        %v1086 = vld [vmem:[%s211 + $0x988] sm:$0xff]
        %v1087 = vld [vmem:[%s211 + $0x990] sm:$0xff]
        %v1088 = vld [vmem:[%s211 + $0x998] sm:$0xff]
        %v1089 = vld [vmem:[%s211 + $0x9a0] sm:$0xff]
        %v1090 = vld [vmem:[%s211 + $0x9a8] sm:$0xff]
        %v1091 = vld [vmem:[%s211 + $0x9b0] sm:$0xff]
        %v1092 = vld [vmem:[%s211 + $0x9b8] sm:$0xff]
        %v1093 = vld [vmem:[%s211 + $0x9c0] sm:$0xff]
        %v1094 = vld [vmem:[%s211 + $0x9c8] sm:$0xff]
        %v1095 = vld [vmem:[%s211 + $0x9d0] sm:$0xff]
        %v1096 = vld [vmem:[%s211 + $0x9d8] sm:$0xff]
        %v1097 = vld [vmem:[%s211 + $0x9e0] sm:$0xff]
        %v1098 = vld [vmem:[%s211 + $0x9e8] sm:$0xff]
        %v1099 = vld [vmem:[%s211 + $0x9f0] sm:$0xff]
        %v1100 = vld [vmem:[%s211 + $0x9f8] sm:$0xff]
        %v1101 = vld [vmem:[%s211 + $0xa00] sm:$0xff]
        %v1102 = vld [vmem:[%s211 + $0xa08] sm:$0xff]
        %v1103 = vld [vmem:[%s211 + $0xa10] sm:$0xff]
        %v1104 = vld [vmem:[%s211 + $0xa18] sm:$0xff]
        %v1105 = vld [vmem:[%s211 + $0xa20] sm:$0xff]
        %v1106 = vld [vmem:[%s211 + $0xa28] sm:$0xff]
        %v1107 = vld [vmem:[%s211 + $0xa30] sm:$0xff]
        %v1108 = vld [vmem:[%s211 + $0xa38] sm:$0xff]
        %v1109 = vld [vmem:[%s211 + $0xa40] sm:$0xff]
        %v1110 = vld [vmem:[%s211 + $0xa48] sm:$0xff]
        %v1111 = vld [vmem:[%s211 + $0xa50] sm:$0xff]
        %v1112 = vld [vmem:[%s211 + $0xa58] sm:$0xff]
        %v1113 = vld [vmem:[%s211 + $0xa60] sm:$0xff]
        %v1114 = vld [vmem:[%s211 + $0xa68] sm:$0xff]
        %v1115 = vld [vmem:[%s211 + $0xa70] sm:$0xff]
        %v1116 = vld [vmem:[%s211 + $0xa78] sm:$0xff]
        %v1117 = vld [vmem:[%s211 + $0xa80] sm:$0xff]
        %v1118 = vld [vmem:[%s211 + $0xa88] sm:$0xff]
        %v1119 = vld [vmem:[%s211 + $0xa90] sm:$0xff]
        %v1120 = vld [vmem:[%s211 + $0xa98] sm:$0xff]
        %v1121 = vld [vmem:[%s211 + $0xaa0] sm:$0xff]
        %v1122 = vld [vmem:[%s211 + $0xaa8] sm:$0xff]
        %v1123 = vld [vmem:[%s211 + $0xab0] sm:$0xff]
        %v1124 = vld [vmem:[%s211 + $0xab8] sm:$0xff]
        %v1125 = vld [vmem:[%s211 + $0xac0] sm:$0xff]
        %v1126 = vld [vmem:[%s211 + $0xac8] sm:$0xff]
        %v1127 = vld [vmem:[%s211 + $0xad0] sm:$0xff]
        %v1128 = vld [vmem:[%s211 + $0xad8] sm:$0xff]
        %v1129 = vld [vmem:[%s211 + $0xae0] sm:$0xff]
        %v1130 = vld [vmem:[%s211 + $0xae8] sm:$0xff]
        %v1131 = vld [vmem:[%s211 + $0xaf0] sm:$0xff]
        %v1132 = vld [vmem:[%s211 + $0xaf8] sm:$0xff]
        %v1133 = vld [vmem:[%s211 + $0xb00] sm:$0xff]
        %v1134 = vld [vmem:[%s211 + $0xb08] sm:$0xff]
        %v1135 = vld [vmem:[%s211 + $0xb10] sm:$0xff]
        %v1136 = vld [vmem:[%s211 + $0xb18] sm:$0xff]
        %v1137 = vld [vmem:[%s211 + $0xb20] sm:$0xff]
        %v1138 = vld [vmem:[%s211 + $0xb28] sm:$0xff]
        %v1139 = vld [vmem:[%s211 + $0xb30] sm:$0xff]
        %v1140 = vld [vmem:[%s211 + $0xb38] sm:$0xff]
        %v1141 = vld [vmem:[%s211 + $0xb40] sm:$0xff]
        %v1142 = vld [vmem:[%s211 + $0xb48] sm:$0xff]
        %v1143 = vld [vmem:[%s211 + $0xb50] sm:$0xff]
        %v1144 = vld [vmem:[%s211 + $0xb58] sm:$0xff]
        %v1145 = vld [vmem:[%s211 + $0xb60] sm:$0xff]
        %v1146 = vld [vmem:[%s211 + $0xb68] sm:$0xff]
        %v1147 = vld [vmem:[%s211 + $0xb70] sm:$0xff]
        %v1148 = vld [vmem:[%s211 + $0xb78] sm:$0xff]
        %v1149 = vld [vmem:[%s211 + $0xb80] sm:$0xff]
        %v1150 = vld [vmem:[%s211 + $0xb88] sm:$0xff]
        %v1151 = vld [vmem:[%s211 + $0xb90] sm:$0xff]
        %v1152 = vld [vmem:[%s211 + $0xb98] sm:$0xff]
        %v1153 = vld [vmem:[%s211 + $0xba0] sm:$0xff]
        %v1154 = vld [vmem:[%s211 + $0xba8] sm:$0xff]
        %v1155 = vld [vmem:[%s211 + $0xbb0] sm:$0xff]
        %v1156 = vld [vmem:[%s211 + $0xbb8] sm:$0xff]
        %v1157 = vld [vmem:[%s211 + $0xbc0] sm:$0xff]
        %v1158 = vld [vmem:[%s211 + $0xbc8] sm:$0xff]
        %v1159 = vld [vmem:[%s211 + $0xbd0] sm:$0xff]
        %v1160 = vld [vmem:[%s211 + $0xbd8] sm:$0xff]
        %v1161 = vld [vmem:[%s211 + $0xbe0] sm:$0xff]
        %v1162 = vld [vmem:[%s211 + $0xbe8] sm:$0xff]
        %v1163 = vld [vmem:[%s211 + $0xbf0] sm:$0xff]
        %v1164 = vld [vmem:[%s211 + $0xbf8] sm:$0xff]
        %v1165 = vld [vmem:[%s211 + $0xc00] sm:$0xff]
        %v1166 = vld [vmem:[%s211 + $0xc08] sm:$0xff]
        %v1167 = vld [vmem:[%s211 + $0xc10] sm:$0xff]
        %v1168 = vld [vmem:[%s211 + $0xc18] sm:$0xff]
        %v1169 = vld [vmem:[%s211 + $0xc20] sm:$0xff]
        %v1170 = vld [vmem:[%s211 + $0xc28] sm:$0xff]
        %v1171 = vld [vmem:[%s211 + $0xc30] sm:$0xff]
        %v1172 = vld [vmem:[%s211 + $0xc38] sm:$0xff]
        %v1173 = vld [vmem:[%s211 + $0xc40] sm:$0xff]
        %v1174 = vld [vmem:[%s211 + $0xc48] sm:$0xff]
        %v1175 = vld [vmem:[%s211 + $0xc50] sm:$0xff]
        %v1176 = vld [vmem:[%s211 + $0xc58] sm:$0xff]
        %v1177 = vld [vmem:[%s211 + $0xc60] sm:$0xff]
        %v1178 = vld [vmem:[%s211 + $0xc68] sm:$0xff]
        %v1179 = vld [vmem:[%s211 + $0xc70] sm:$0xff]
        %v1180 = vld [vmem:[%s211 + $0xc78] sm:$0xff]
        %v1181 = vld [vmem:[%s211 + $0xc80] sm:$0xff]
        %v1182 = vld [vmem:[%s211 + $0xc88] sm:$0xff]
        %v1183 = vld [vmem:[%s211 + $0xc90] sm:$0xff]
        %v1184 = vld [vmem:[%s211 + $0xc98] sm:$0xff]
        %v1185 = vld [vmem:[%s211 + $0xca0] sm:$0xff]
        %v1186 = vld [vmem:[%s211 + $0xca8] sm:$0xff]
        %v1187 = vld [vmem:[%s211 + $0xcb0] sm:$0xff]
        %v1188 = vld [vmem:[%s211 + $0xcb8] sm:$0xff]
        %v1189 = vld [vmem:[%s211 + $0xcc0] sm:$0xff]
        %v1190 = vld [vmem:[%s211 + $0xcc8] sm:$0xff]
        %v1191 = vld [vmem:[%s211 + $0xcd0] sm:$0xff]
        %v1192 = vld [vmem:[%s211 + $0xcd8] sm:$0xff]
        %v1193 = vld [vmem:[%s211 + $0xce0] sm:$0xff]
        %v1194 = vld [vmem:[%s211 + $0xce8] sm:$0xff]
        %v1195 = vld [vmem:[%s211 + $0xcf0] sm:$0xff]
        %v1196 = vld [vmem:[%s211 + $0xcf8] sm:$0xff]
        %v1197 = vld [vmem:[%s211 + $0xd00] sm:$0xff]
        %v1198 = vld [vmem:[%s211 + $0xd08] sm:$0xff]
        %v1199 = vld [vmem:[%s211 + $0xd10] sm:$0xff]
        %v1200 = vld [vmem:[%s211 + $0xd18] sm:$0xff]
        %v1201 = vld [vmem:[%s211 + $0xd20] sm:$0xff]
        %v1202 = vld [vmem:[%s211 + $0xd28] sm:$0xff]
        %v1203 = vld [vmem:[%s211 + $0xd30] sm:$0xff]
        %v1204 = vld [vmem:[%s211 + $0xd38] sm:$0xff]
        %v1205 = vld [vmem:[%s211 + $0xd40] sm:$0xff]
        %v1206 = vld [vmem:[%s211 + $0xd48] sm:$0xff]
        %v1207 = vld [vmem:[%s211 + $0xd50] sm:$0xff]
        %v1208 = vld [vmem:[%s211 + $0xd58] sm:$0xff]
        %v1209 = vld [vmem:[%s211 + $0xd60] sm:$0xff]
        %v1210 = vld [vmem:[%s211 + $0xd68] sm:$0xff]
        %v1211 = vld [vmem:[%s211 + $0xd70] sm:$0xff]
        %v1212 = vld [vmem:[%s211 + $0xd78] sm:$0xff]
        %v1213 = vld [vmem:[%s211 + $0xd80] sm:$0xff]
        %v1214 = vld [vmem:[%s211 + $0xd88] sm:$0xff]
        %v1215 = vld [vmem:[%s211 + $0xd90] sm:$0xff]
        %v1216 = vld [vmem:[%s211 + $0xd98] sm:$0xff]
        %v1217 = vld [vmem:[%s211 + $0xda0] sm:$0xff]
        %v1218 = vld [vmem:[%s211 + $0xda8] sm:$0xff]
        %v1219 = vld [vmem:[%s211 + $0xdb0] sm:$0xff]
        %v1220 = vld [vmem:[%s211 + $0xdb8] sm:$0xff]
        %v1221 = vld [vmem:[%s211 + $0xdc0] sm:$0xff]
        %v1222 = vld [vmem:[%s211 + $0xdc8] sm:$0xff]
        %v1223 = vld [vmem:[%s211 + $0xdd0] sm:$0xff]
        %v1224 = vld [vmem:[%s211 + $0xdd8] sm:$0xff]
        %v1225 = vld [vmem:[%s211 + $0xde0] sm:$0xff]
        %v1226 = vld [vmem:[%s211 + $0xde8] sm:$0xff]
        %v1227 = vld [vmem:[%s211 + $0xdf0] sm:$0xff]
        %v1228 = vld [vmem:[%s211 + $0xdf8] sm:$0xff]
        %v1229 = vld [vmem:[%s211 + $0xe00] sm:$0xff]
        %v1230 = vld [vmem:[%s211 + $0xe08] sm:$0xff]
        %v1231 = vld [vmem:[%s211 + $0xe10] sm:$0xff]
        %v1232 = vld [vmem:[%s211 + $0xe18] sm:$0xff]
        %v1233 = vld [vmem:[%s211 + $0xe20] sm:$0xff]
        %v1234 = vld [vmem:[%s211 + $0xe28] sm:$0xff]
        %v1235 = vld [vmem:[%s211 + $0xe30] sm:$0xff]
        %v1236 = vld [vmem:[%s211 + $0xe38] sm:$0xff]
        %v1237 = vld [vmem:[%s211 + $0xe40] sm:$0xff]
        %v1238 = vld [vmem:[%s211 + $0xe48] sm:$0xff]
        %v1239 = vld [vmem:[%s211 + $0xe50] sm:$0xff]
        %v1240 = vld [vmem:[%s211 + $0xe58] sm:$0xff]
        %v1241 = vld [vmem:[%s211 + $0xe60] sm:$0xff]
        %v1242 = vld [vmem:[%s211 + $0xe68] sm:$0xff]
        %v1243 = vld [vmem:[%s211 + $0xe70] sm:$0xff]
        %v1244 = vld [vmem:[%s211 + $0xe78] sm:$0xff]
        %v1245 = vld [vmem:[%s211 + $0xe80] sm:$0xff]
        %v1246 = vld [vmem:[%s211 + $0xe88] sm:$0xff]
        %v1247 = vld [vmem:[%s211 + $0xe90] sm:$0xff]
        %v1248 = vld [vmem:[%s211 + $0xe98] sm:$0xff]
        %v1249 = vld [vmem:[%s211 + $0xea0] sm:$0xff]
        %v1250 = vld [vmem:[%s211 + $0xea8] sm:$0xff]
        %v1251 = vld [vmem:[%s211 + $0xeb0] sm:$0xff]
        %v1252 = vld [vmem:[%s211 + $0xeb8] sm:$0xff]
        %v1253 = vld [vmem:[%s211 + $0xec0] sm:$0xff]
        %v1254 = vld [vmem:[%s211 + $0xec8] sm:$0xff]
        %v1255 = vld [vmem:[%s211 + $0xed0] sm:$0xff]
        %v1256 = vld [vmem:[%s211 + $0xed8] sm:$0xff]
        %v1257 = vld [vmem:[%s211 + $0xee0] sm:$0xff]
        %v1258 = vld [vmem:[%s211 + $0xee8] sm:$0xff]
        %v1259 = vld [vmem:[%s211 + $0xef0] sm:$0xff]
        %v1260 = vld [vmem:[%s211 + $0xef8] sm:$0xff]
        %v1261 = vld [vmem:[%s211 + $0xf00] sm:$0xff]
        %v1262 = vld [vmem:[%s211 + $0xf08] sm:$0xff]
        %v1263 = vld [vmem:[%s211 + $0xf10] sm:$0xff]
        %v1264 = vld [vmem:[%s211 + $0xf18] sm:$0xff]
        %v1265 = vld [vmem:[%s211 + $0xf20] sm:$0xff]
        %v1266 = vld [vmem:[%s211 + $0xf28] sm:$0xff]
        %v1267 = vld [vmem:[%s211 + $0xf30] sm:$0xff]
        %v1268 = vld [vmem:[%s211 + $0xf38] sm:$0xff]
        %v1269 = vld [vmem:[%s211 + $0xf40] sm:$0xff]
        %v1270 = vld [vmem:[%s211 + $0xf48] sm:$0xff]
        %v1271 = vld [vmem:[%s211 + $0xf50] sm:$0xff]
        %v1272 = vld [vmem:[%s211 + $0xf58] sm:$0xff]
        %v1273 = vld [vmem:[%s211 + $0xf60] sm:$0xff]
        %v1274 = vld [vmem:[%s211 + $0xf68] sm:$0xff]
        %v1275 = vld [vmem:[%s211 + $0xf70] sm:$0xff]
        %v1276 = vld [vmem:[%s211 + $0xf78] sm:$0xff]
        %v1277 = vld [vmem:[%s211 + $0xf80] sm:$0xff]
        %v1278 = vld [vmem:[%s211 + $0xf88] sm:$0xff]
        %v1279 = vld [vmem:[%s211 + $0xf90] sm:$0xff]
        %v1280 = vld [vmem:[%s211 + $0xf98] sm:$0xff]
        %v1281 = vld [vmem:[%s211 + $0xfa0] sm:$0xff]
        %v1282 = vld [vmem:[%s211 + $0xfa8] sm:$0xff]
        %v1283 = vld [vmem:[%s211 + $0xfb0] sm:$0xff]
        %v1284 = vld [vmem:[%s211 + $0xfb8] sm:$0xff]
        %v1285 = vld [vmem:[%s211 + $0xfc0] sm:$0xff]
        %v1286 = vld [vmem:[%s211 + $0xfc8] sm:$0xff]
        %v1287 = vld [vmem:[%s211 + $0xfd0] sm:$0xff]
        %v1288 = vld [vmem:[%s211 + $0xfd8] sm:$0xff]
        %v1289 = vld [vmem:[%s211 + $0xfe0] sm:$0xff]
        %v1290 = vld [vmem:[%s211 + $0xfe8] sm:$0xff]
        %v1291 = vld [vmem:[%s211 + $0xff0] sm:$0xff]
        %v1292 = vld [vmem:[%s211 + $0xff8] sm:$0xff]
        %v1293 = vsub.f32 %v269, %v781
        %v1294 = vsub.f32 %v270, %v782
        %v1295 = vsub.f32 %v271, %v783
        %v1296 = vsub.f32 %v272, %v784
        %v1297 = vsub.f32 %v273, %v785
        %v1298 = vsub.f32 %v274, %v786
        %v1299 = vsub.f32 %v275, %v787
        %v1300 = vsub.f32 %v276, %v788
        %v1301 = vsub.f32 %v277, %v789
        %v1302 = vsub.f32 %v278, %v790
        %v1303 = vsub.f32 %v279, %v791
        %v1304 = vsub.f32 %v280, %v792
        %v1305 = vsub.f32 %v281, %v793
        %v1306 = vsub.f32 %v282, %v794
        %v1307 = vsub.f32 %v283, %v795
        %v1308 = vsub.f32 %v284, %v796
        %v1309 = vsub.f32 %v285, %v797
        %v1310 = vsub.f32 %v286, %v798
        %v1311 = vsub.f32 %v287, %v799
        %v1312 = vsub.f32 %v288, %v800
        %v1313 = vsub.f32 %v289, %v801
        %v1314 = vsub.f32 %v290, %v802
        %v1315 = vsub.f32 %v291, %v803
        %v1316 = vsub.f32 %v292, %v804
        %v1317 = vsub.f32 %v293, %v805
        %v1318 = vsub.f32 %v294, %v806
        %v1319 = vsub.f32 %v295, %v807
        %v1320 = vsub.f32 %v296, %v808
        %v1321 = vsub.f32 %v297, %v809
        %v1322 = vsub.f32 %v298, %v810
        %v1323 = vsub.f32 %v299, %v811
        %v1324 = vsub.f32 %v300, %v812
        %v1325 = vsub.f32 %v301, %v813
        %v1326 = vsub.f32 %v302, %v814
        %v1327 = vsub.f32 %v303, %v815
        %v1328 = vsub.f32 %v304, %v816
        %v1329 = vsub.f32 %v305, %v817
        %v1330 = vsub.f32 %v306, %v818
        %v1331 = vsub.f32 %v307, %v819
        %v1332 = vsub.f32 %v308, %v820
        %v1333 = vsub.f32 %v309, %v821
        %v1334 = vsub.f32 %v310, %v822
        %v1335 = vsub.f32 %v311, %v823
        %v1336 = vsub.f32 %v312, %v824
        %v1337 = vsub.f32 %v313, %v825
        %v1338 = vsub.f32 %v314, %v826
        %v1339 = vsub.f32 %v315, %v827
        %v1340 = vsub.f32 %v316, %v828
        %v1341 = vsub.f32 %v317, %v829
        %v1342 = vsub.f32 %v318, %v830
        %v1343 = vsub.f32 %v319, %v831
        %v1344 = vsub.f32 %v320, %v832
        %v1345 = vsub.f32 %v321, %v833
        %v1346 = vsub.f32 %v322, %v834
        %v1347 = vsub.f32 %v323, %v835
        %v1348 = vsub.f32 %v324, %v836
        %v1349 = vsub.f32 %v325, %v837
        %v1350 = vsub.f32 %v326, %v838
        %v1351 = vsub.f32 %v327, %v839
        %v1352 = vsub.f32 %v328, %v840
        %v1353 = vsub.f32 %v329, %v841
        %v1354 = vsub.f32 %v330, %v842
        %v1355 = vsub.f32 %v331, %v843
        %v1356 = vsub.f32 %v332, %v844
        %v1357 = vsub.f32 %v333, %v845
        %v1358 = vsub.f32 %v334, %v846
        %v1359 = vsub.f32 %v335, %v847
        %v1360 = vsub.f32 %v336, %v848
        %v1361 = vsub.f32 %v337, %v849
        %v1362 = vsub.f32 %v338, %v850
        %v1363 = vsub.f32 %v339, %v851
        %v1364 = vsub.f32 %v340, %v852
        %v1365 = vsub.f32 %v341, %v853
        %v1366 = vsub.f32 %v342, %v854
        %v1367 = vsub.f32 %v343, %v855
        %v1368 = vsub.f32 %v344, %v856
        %v1369 = vsub.f32 %v345, %v857
        %v1370 = vsub.f32 %v346, %v858
        %v1371 = vsub.f32 %v347, %v859
        %v1372 = vsub.f32 %v348, %v860
        %v1373 = vsub.f32 %v349, %v861
        %v1374 = vsub.f32 %v350, %v862
        %v1375 = vsub.f32 %v351, %v863
        %v1376 = vsub.f32 %v352, %v864
        %v1377 = vsub.f32 %v353, %v865
        %v1378 = vsub.f32 %v354, %v866
        %v1379 = vsub.f32 %v355, %v867
        %v1380 = vsub.f32 %v356, %v868
        %v1381 = vsub.f32 %v357, %v869
        %v1382 = vsub.f32 %v358, %v870
        %v1383 = vsub.f32 %v359, %v871
        %v1384 = vsub.f32 %v360, %v872
        %v1385 = vsub.f32 %v361, %v873
        %v1386 = vsub.f32 %v362, %v874
        %v1387 = vsub.f32 %v363, %v875
        %v1388 = vsub.f32 %v364, %v876
        %v1389 = vsub.f32 %v365, %v877
        %v1390 = vsub.f32 %v366, %v878
        %v1391 = vsub.f32 %v367, %v879
        %v1392 = vsub.f32 %v368, %v880
        %v1393 = vsub.f32 %v369, %v881
        %v1394 = vsub.f32 %v370, %v882
        %v1395 = vsub.f32 %v371, %v883
        %v1396 = vsub.f32 %v372, %v884
        %v1397 = vsub.f32 %v373, %v885
        %v1398 = vsub.f32 %v374, %v886
        %v1399 = vsub.f32 %v375, %v887
        %v1400 = vsub.f32 %v376, %v888
        %v1401 = vsub.f32 %v377, %v889
        %v1402 = vsub.f32 %v378, %v890
        %v1403 = vsub.f32 %v379, %v891
        %v1404 = vsub.f32 %v380, %v892
        %v1405 = vsub.f32 %v381, %v893
        %v1406 = vsub.f32 %v382, %v894
        %v1407 = vsub.f32 %v383, %v895
        %v1408 = vsub.f32 %v384, %v896
        %v1409 = vsub.f32 %v385, %v897
        %v1410 = vsub.f32 %v386, %v898
        %v1411 = vsub.f32 %v387, %v899
        %v1412 = vsub.f32 %v388, %v900
        %v1413 = vsub.f32 %v389, %v901
        %v1414 = vsub.f32 %v390, %v902
        %v1415 = vsub.f32 %v391, %v903
        %v1416 = vsub.f32 %v392, %v904
        %v1417 = vsub.f32 %v393, %v905
        %v1418 = vsub.f32 %v394, %v906
        %v1419 = vsub.f32 %v395, %v907
        %v1420 = vsub.f32 %v396, %v908
        %v1421 = vsub.f32 %v397, %v909
        %v1422 = vsub.f32 %v398, %v910
        %v1423 = vsub.f32 %v399, %v911
        %v1424 = vsub.f32 %v400, %v912
        %v1425 = vsub.f32 %v401, %v913
        %v1426 = vsub.f32 %v402, %v914
        %v1427 = vsub.f32 %v403, %v915
        %v1428 = vsub.f32 %v404, %v916
        %v1429 = vsub.f32 %v405, %v917
        %v1430 = vsub.f32 %v406, %v918
        %v1431 = vsub.f32 %v407, %v919
        %v1432 = vsub.f32 %v408, %v920
        %v1433 = vsub.f32 %v409, %v921
        %v1434 = vsub.f32 %v410, %v922
        %v1435 = vsub.f32 %v411, %v923
        %v1436 = vsub.f32 %v412, %v924
        %v1437 = vsub.f32 %v413, %v925
        %v1438 = vsub.f32 %v414, %v926
        %v1439 = vsub.f32 %v415, %v927
        %v1440 = vsub.f32 %v416, %v928
        %v1441 = vsub.f32 %v417, %v929
        %v1442 = vsub.f32 %v418, %v930
        %v1443 = vsub.f32 %v419, %v931
        %v1444 = vsub.f32 %v420, %v932
        %v1445 = vsub.f32 %v421, %v933
        %v1446 = vsub.f32 %v422, %v934
        %v1447 = vsub.f32 %v423, %v935
        %v1448 = vsub.f32 %v424, %v936
        %v1449 = vsub.f32 %v425, %v937
        %v1450 = vsub.f32 %v426, %v938
        %v1451 = vsub.f32 %v427, %v939
        %v1452 = vsub.f32 %v428, %v940
        %v1453 = vsub.f32 %v429, %v941
        %v1454 = vsub.f32 %v430, %v942
        %v1455 = vsub.f32 %v431, %v943
        %v1456 = vsub.f32 %v432, %v944
        %v1457 = vsub.f32 %v433, %v945
        %v1458 = vsub.f32 %v434, %v946
        %v1459 = vsub.f32 %v435, %v947
        %v1460 = vsub.f32 %v436, %v948
        %v1461 = vsub.f32 %v437, %v949
        %v1462 = vsub.f32 %v438, %v950
        %v1463 = vsub.f32 %v439, %v951
        %v1464 = vsub.f32 %v440, %v952
        %v1465 = vsub.f32 %v441, %v953
        %v1466 = vsub.f32 %v442, %v954
        %v1467 = vsub.f32 %v443, %v955
        %v1468 = vsub.f32 %v444, %v956
        %v1469 = vsub.f32 %v445, %v957
        %v1470 = vsub.f32 %v446, %v958
        %v1471 = vsub.f32 %v447, %v959
        %v1472 = vsub.f32 %v448, %v960
        %v1473 = vsub.f32 %v449, %v961
        %v1474 = vsub.f32 %v450, %v962
        %v1475 = vsub.f32 %v451, %v963
        %v1476 = vsub.f32 %v452, %v964
        %v1477 = vsub.f32 %v453, %v965
        %v1478 = vsub.f32 %v454, %v966
        %v1479 = vsub.f32 %v455, %v967
        %v1480 = vsub.f32 %v456, %v968
        %v1481 = vsub.f32 %v457, %v969
        %v1482 = vsub.f32 %v458, %v970
        %v1483 = vsub.f32 %v459, %v971
        %v1484 = vsub.f32 %v460, %v972
        %v1485 = vsub.f32 %v461, %v973
        %v1486 = vsub.f32 %v462, %v974
        %v1487 = vsub.f32 %v463, %v975
        %v1488 = vsub.f32 %v464, %v976
        %v1489 = vsub.f32 %v465, %v977
        %v1490 = vsub.f32 %v466, %v978
        %v1491 = vsub.f32 %v467, %v979
        %v1492 = vsub.f32 %v468, %v980
        %v1493 = vsub.f32 %v469, %v981
        %v1494 = vsub.f32 %v470, %v982
        %v1495 = vsub.f32 %v471, %v983
        %v1496 = vsub.f32 %v472, %v984
        %v1497 = vsub.f32 %v473, %v985
        %v1498 = vsub.f32 %v474, %v986
        %v1499 = vsub.f32 %v475, %v987
        %v1500 = vsub.f32 %v476, %v988
        %v1501 = vsub.f32 %v477, %v989
        %v1502 = vsub.f32 %v478, %v990
        %v1503 = vsub.f32 %v479, %v991
        %v1504 = vsub.f32 %v480, %v992
        %v1505 = vsub.f32 %v481, %v993
        %v1506 = vsub.f32 %v482, %v994
        %v1507 = vsub.f32 %v483, %v995
        %v1508 = vsub.f32 %v484, %v996
        %v1509 = vsub.f32 %v485, %v997
        %v1510 = vsub.f32 %v486, %v998
        %v1511 = vsub.f32 %v487, %v999
        %v1512 = vsub.f32 %v488, %v1000
        %v1513 = vsub.f32 %v489, %v1001
        %v1514 = vsub.f32 %v490, %v1002
        %v1515 = vsub.f32 %v491, %v1003
        %v1516 = vsub.f32 %v492, %v1004
        %v1517 = vsub.f32 %v493, %v1005
        %v1518 = vsub.f32 %v494, %v1006
        %v1519 = vsub.f32 %v495, %v1007
        %v1520 = vsub.f32 %v496, %v1008
        %v1521 = vsub.f32 %v497, %v1009
        %v1522 = vsub.f32 %v498, %v1010
        %v1523 = vsub.f32 %v499, %v1011
        %v1524 = vsub.f32 %v500, %v1012
        %v1525 = vsub.f32 %v501, %v1013
        %v1526 = vsub.f32 %v502, %v1014
        %v1527 = vsub.f32 %v503, %v1015
        %v1528 = vsub.f32 %v504, %v1016
        %v1529 = vsub.f32 %v505, %v1017
        %v1530 = vsub.f32 %v506, %v1018
        %v1531 = vsub.f32 %v507, %v1019
        %v1532 = vsub.f32 %v508, %v1020
        %v1533 = vsub.f32 %v509, %v1021
        %v1534 = vsub.f32 %v510, %v1022
        %v1535 = vsub.f32 %v511, %v1023
        %v1536 = vsub.f32 %v512, %v1024
        %v1537 = vsub.f32 %v513, %v1025
        %v1538 = vsub.f32 %v514, %v1026
        %v1539 = vsub.f32 %v515, %v1027
        %v1540 = vsub.f32 %v516, %v1028
        %v1541 = vsub.f32 %v517, %v1029
        %v1542 = vsub.f32 %v518, %v1030
        %v1543 = vsub.f32 %v519, %v1031
        %v1544 = vsub.f32 %v520, %v1032
        %v1545 = vsub.f32 %v521, %v1033
        %v1546 = vsub.f32 %v522, %v1034
        %v1547 = vsub.f32 %v523, %v1035
        %v1548 = vsub.f32 %v524, %v1036
        %v1549 = vsub.f32 %v525, %v1037
        %v1550 = vsub.f32 %v526, %v1038
        %v1551 = vsub.f32 %v527, %v1039
        %v1552 = vsub.f32 %v528, %v1040
        %v1553 = vsub.f32 %v529, %v1041
        %v1554 = vsub.f32 %v530, %v1042
        %v1555 = vsub.f32 %v531, %v1043
        %v1556 = vsub.f32 %v532, %v1044
        %v1557 = vsub.f32 %v533, %v1045
        %v1558 = vsub.f32 %v534, %v1046
        %v1559 = vsub.f32 %v535, %v1047
        %v1560 = vsub.f32 %v536, %v1048
        %v1561 = vsub.f32 %v537, %v1049
        %v1562 = vsub.f32 %v538, %v1050
        %v1563 = vsub.f32 %v539, %v1051
        %v1564 = vsub.f32 %v540, %v1052
        %v1565 = vsub.f32 %v541, %v1053
        %v1566 = vsub.f32 %v542, %v1054
        %v1567 = vsub.f32 %v543, %v1055
        %v1568 = vsub.f32 %v544, %v1056
        %v1569 = vsub.f32 %v545, %v1057
        %v1570 = vsub.f32 %v546, %v1058
        %v1571 = vsub.f32 %v547, %v1059
        %v1572 = vsub.f32 %v548, %v1060
        %v1573 = vsub.f32 %v549, %v1061
        %v1574 = vsub.f32 %v550, %v1062
        %v1575 = vsub.f32 %v551, %v1063
        %v1576 = vsub.f32 %v552, %v1064
        %v1577 = vsub.f32 %v553, %v1065
        %v1578 = vsub.f32 %v554, %v1066
        %v1579 = vsub.f32 %v555, %v1067
        %v1580 = vsub.f32 %v556, %v1068
        %v1581 = vsub.f32 %v557, %v1069
        %v1582 = vsub.f32 %v558, %v1070
        %v1583 = vsub.f32 %v559, %v1071
        %v1584 = vsub.f32 %v560, %v1072
        %v1585 = vsub.f32 %v561, %v1073
        %v1586 = vsub.f32 %v562, %v1074
        %v1587 = vsub.f32 %v563, %v1075
        %v1588 = vsub.f32 %v564, %v1076
        %v1589 = vsub.f32 %v565, %v1077
        %v1590 = vsub.f32 %v566, %v1078
        %v1591 = vsub.f32 %v567, %v1079
        %v1592 = vsub.f32 %v568, %v1080
        %v1593 = vsub.f32 %v569, %v1081
        %v1594 = vsub.f32 %v570, %v1082
        %v1595 = vsub.f32 %v571, %v1083
        %v1596 = vsub.f32 %v572, %v1084
        %v1597 = vsub.f32 %v573, %v1085
        %v1598 = vsub.f32 %v574, %v1086
        %v1599 = vsub.f32 %v575, %v1087
        %v1600 = vsub.f32 %v576, %v1088
        %v1601 = vsub.f32 %v577, %v1089
        %v1602 = vsub.f32 %v578, %v1090
        %v1603 = vsub.f32 %v579, %v1091
        %v1604 = vsub.f32 %v580, %v1092
        %v1605 = vsub.f32 %v581, %v1093
        %v1606 = vsub.f32 %v582, %v1094
        %v1607 = vsub.f32 %v583, %v1095
        %v1608 = vsub.f32 %v584, %v1096
        %v1609 = vsub.f32 %v585, %v1097
        %v1610 = vsub.f32 %v586, %v1098
        %v1611 = vsub.f32 %v587, %v1099
        %v1612 = vsub.f32 %v588, %v1100
        %v1613 = vsub.f32 %v589, %v1101
        %v1614 = vsub.f32 %v590, %v1102
        %v1615 = vsub.f32 %v591, %v1103
        %v1616 = vsub.f32 %v592, %v1104
        %v1617 = vsub.f32 %v593, %v1105
        %v1618 = vsub.f32 %v594, %v1106
        %v1619 = vsub.f32 %v595, %v1107
        %v1620 = vsub.f32 %v596, %v1108
        %v1621 = vsub.f32 %v597, %v1109
        %v1622 = vsub.f32 %v598, %v1110
        %v1623 = vsub.f32 %v599, %v1111
        %v1624 = vsub.f32 %v600, %v1112
        %v1625 = vsub.f32 %v601, %v1113
        %v1626 = vsub.f32 %v602, %v1114
        %v1627 = vsub.f32 %v603, %v1115
        %v1628 = vsub.f32 %v604, %v1116
        %v1629 = vsub.f32 %v605, %v1117
        %v1630 = vsub.f32 %v606, %v1118
        %v1631 = vsub.f32 %v607, %v1119
        %v1632 = vsub.f32 %v608, %v1120
        %v1633 = vsub.f32 %v609, %v1121
        %v1634 = vsub.f32 %v610, %v1122
        %v1635 = vsub.f32 %v611, %v1123
        %v1636 = vsub.f32 %v612, %v1124
        %v1637 = vsub.f32 %v613, %v1125
        %v1638 = vsub.f32 %v614, %v1126
        %v1639 = vsub.f32 %v615, %v1127
        %v1640 = vsub.f32 %v616, %v1128
        %v1641 = vsub.f32 %v617, %v1129
        %v1642 = vsub.f32 %v618, %v1130
        %v1643 = vsub.f32 %v619, %v1131
        %v1644 = vsub.f32 %v620, %v1132
        %v1645 = vsub.f32 %v621, %v1133
        %v1646 = vsub.f32 %v622, %v1134
        %v1647 = vsub.f32 %v623, %v1135
        %v1648 = vsub.f32 %v624, %v1136
        %v1649 = vsub.f32 %v625, %v1137
        %v1650 = vsub.f32 %v626, %v1138
        %v1651 = vsub.f32 %v627, %v1139
        %v1652 = vsub.f32 %v628, %v1140
        %v1653 = vsub.f32 %v629, %v1141
        %v1654 = vsub.f32 %v630, %v1142
        %v1655 = vsub.f32 %v631, %v1143
        %v1656 = vsub.f32 %v632, %v1144
        %v1657 = vsub.f32 %v633, %v1145
        %v1658 = vsub.f32 %v634, %v1146
        %v1659 = vsub.f32 %v635, %v1147
        %v1660 = vsub.f32 %v636, %v1148
        %v1661 = vsub.f32 %v637, %v1149
        %v1662 = vsub.f32 %v638, %v1150
        %v1663 = vsub.f32 %v639, %v1151
        %v1664 = vsub.f32 %v640, %v1152
        %v1665 = vsub.f32 %v641, %v1153
        %v1666 = vsub.f32 %v642, %v1154
        %v1667 = vsub.f32 %v643, %v1155
        %v1668 = vsub.f32 %v644, %v1156
        %v1669 = vsub.f32 %v645, %v1157
        %v1670 = vsub.f32 %v646, %v1158
        %v1671 = vsub.f32 %v647, %v1159
        %v1672 = vsub.f32 %v648, %v1160
        %v1673 = vsub.f32 %v649, %v1161
        %v1674 = vsub.f32 %v650, %v1162
        %v1675 = vsub.f32 %v651, %v1163
        %v1676 = vsub.f32 %v652, %v1164
        %v1677 = vsub.f32 %v653, %v1165
        %v1678 = vsub.f32 %v654, %v1166
        %v1679 = vsub.f32 %v655, %v1167
        %v1680 = vsub.f32 %v656, %v1168
        %v1681 = vsub.f32 %v657, %v1169
        %v1682 = vsub.f32 %v658, %v1170
        %v1683 = vsub.f32 %v659, %v1171
        %v1684 = vsub.f32 %v660, %v1172
        %v1685 = vsub.f32 %v661, %v1173
        %v1686 = vsub.f32 %v662, %v1174
        %v1687 = vsub.f32 %v663, %v1175
        %v1688 = vsub.f32 %v664, %v1176
        %v1689 = vsub.f32 %v665, %v1177
        %v1690 = vsub.f32 %v666, %v1178
        %v1691 = vsub.f32 %v667, %v1179
        %v1692 = vsub.f32 %v668, %v1180
        %v1693 = vsub.f32 %v669, %v1181
        %v1694 = vsub.f32 %v670, %v1182
        %v1695 = vsub.f32 %v671, %v1183
        %v1696 = vsub.f32 %v672, %v1184
        %v1697 = vsub.f32 %v673, %v1185
        %v1698 = vsub.f32 %v674, %v1186
        %v1699 = vsub.f32 %v675, %v1187
        %v1700 = vsub.f32 %v676, %v1188
        %v1701 = vsub.f32 %v677, %v1189
        %v1702 = vsub.f32 %v678, %v1190
        %v1703 = vsub.f32 %v679, %v1191
        %v1704 = vsub.f32 %v680, %v1192
        %v1705 = vsub.f32 %v681, %v1193
        %v1706 = vsub.f32 %v682, %v1194
        %v1707 = vsub.f32 %v683, %v1195
        %v1708 = vsub.f32 %v684, %v1196
        %v1709 = vsub.f32 %v685, %v1197
        %v1710 = vsub.f32 %v686, %v1198
        %v1711 = vsub.f32 %v687, %v1199
        %v1712 = vsub.f32 %v688, %v1200
        %v1713 = vsub.f32 %v689, %v1201
        %v1714 = vsub.f32 %v690, %v1202
        %v1715 = vsub.f32 %v691, %v1203
        %v1716 = vsub.f32 %v692, %v1204
        %v1717 = vsub.f32 %v693, %v1205
        %v1718 = vsub.f32 %v694, %v1206
        %v1719 = vsub.f32 %v695, %v1207
        %v1720 = vsub.f32 %v696, %v1208
        %v1721 = vsub.f32 %v697, %v1209
        %v1722 = vsub.f32 %v698, %v1210
        %v1723 = vsub.f32 %v699, %v1211
        %v1724 = vsub.f32 %v700, %v1212
        %v1725 = vsub.f32 %v701, %v1213
        %v1726 = vsub.f32 %v702, %v1214
        %v1727 = vsub.f32 %v703, %v1215
        %v1728 = vsub.f32 %v704, %v1216
        %v1729 = vsub.f32 %v705, %v1217
        %v1730 = vsub.f32 %v706, %v1218
        %v1731 = vsub.f32 %v707, %v1219
        %v1732 = vsub.f32 %v708, %v1220
        %v1733 = vsub.f32 %v709, %v1221
        %v1734 = vsub.f32 %v710, %v1222
        %v1735 = vsub.f32 %v711, %v1223
        %v1736 = vsub.f32 %v712, %v1224
        %v1737 = vsub.f32 %v713, %v1225
        %v1738 = vsub.f32 %v714, %v1226
        %v1739 = vsub.f32 %v715, %v1227
        %v1740 = vsub.f32 %v716, %v1228
        %v1741 = vsub.f32 %v717, %v1229
        %v1742 = vsub.f32 %v718, %v1230
        %v1743 = vsub.f32 %v719, %v1231
        %v1744 = vsub.f32 %v720, %v1232
        %v1745 = vsub.f32 %v721, %v1233
        %v1746 = vsub.f32 %v722, %v1234
        %v1747 = vsub.f32 %v723, %v1235
        %v1748 = vsub.f32 %v724, %v1236
        %v1749 = vsub.f32 %v725, %v1237
        %v1750 = vsub.f32 %v726, %v1238
        %v1751 = vsub.f32 %v727, %v1239
        %v1752 = vsub.f32 %v728, %v1240
        %v1753 = vsub.f32 %v729, %v1241
        %v1754 = vsub.f32 %v730, %v1242
        %v1755 = vsub.f32 %v731, %v1243
        %v1756 = vsub.f32 %v732, %v1244
        %v1757 = vsub.f32 %v733, %v1245
        %v1758 = vsub.f32 %v734, %v1246
        %v1759 = vsub.f32 %v735, %v1247
        %v1760 = vsub.f32 %v736, %v1248
        %v1761 = vsub.f32 %v737, %v1249
        %v1762 = vsub.f32 %v738, %v1250
        %v1763 = vsub.f32 %v739, %v1251
        %v1764 = vsub.f32 %v740, %v1252
        %v1765 = vsub.f32 %v741, %v1253
        %v1766 = vsub.f32 %v742, %v1254
        %v1767 = vsub.f32 %v743, %v1255
        %v1768 = vsub.f32 %v744, %v1256
        %v1769 = vsub.f32 %v745, %v1257
        %v1770 = vsub.f32 %v746, %v1258
        %v1771 = vsub.f32 %v747, %v1259
        %v1772 = vsub.f32 %v748, %v1260
        %v1773 = vsub.f32 %v749, %v1261
        %v1774 = vsub.f32 %v750, %v1262
        %v1775 = vsub.f32 %v751, %v1263
        %v1776 = vsub.f32 %v752, %v1264
        %v1777 = vsub.f32 %v753, %v1265
        %v1778 = vsub.f32 %v754, %v1266
        %v1779 = vsub.f32 %v755, %v1267
        %v1780 = vsub.f32 %v756, %v1268
        %v1781 = vsub.f32 %v757, %v1269
        %v1782 = vsub.f32 %v758, %v1270
        %v1783 = vsub.f32 %v759, %v1271
        %v1784 = vsub.f32 %v760, %v1272
        %v1785 = vsub.f32 %v761, %v1273
        %v1786 = vsub.f32 %v762, %v1274
        %v1787 = vsub.f32 %v763, %v1275
        %v1788 = vsub.f32 %v764, %v1276
        %v1789 = vsub.f32 %v765, %v1277
        %v1790 = vsub.f32 %v766, %v1278
        %v1791 = vsub.f32 %v767, %v1279
        %v1792 = vsub.f32 %v768, %v1280
        %v1793 = vsub.f32 %v769, %v1281
        %v1794 = vsub.f32 %v770, %v1282
        %v1795 = vsub.f32 %v771, %v1283
        %v1796 = vsub.f32 %v772, %v1284
        %v1797 = vsub.f32 %v773, %v1285
        %v1798 = vsub.f32 %v774, %v1286
        %v1799 = vsub.f32 %v775, %v1287
        %v1800 = vsub.f32 %v776, %v1288
        %v1801 = vsub.f32 %v777, %v1289
        %v1802 = vsub.f32 %v778, %v1290
        %v1803 = vsub.f32 %v779, %v1291
        %v1804 = vsub.f32 %v780, %v1292
        %v1805 = vand.u32 2147483647, %v1293
        %v1806 = vand.u32 2147483647, %v1294
        %v1807 = vand.u32 2147483647, %v1295
        %v1808 = vand.u32 2147483647, %v1296
        %v1809 = vand.u32 2147483647, %v1297
        %v1810 = vand.u32 2147483647, %v1298
        %v1811 = vand.u32 2147483647, %v1299
        %v1812 = vand.u32 2147483647, %v1300
        %v1813 = vand.u32 2147483647, %v1301
        %v1814 = vand.u32 2147483647, %v1302
        %v1815 = vand.u32 2147483647, %v1303
        %v1816 = vand.u32 2147483647, %v1304
        %v1817 = vand.u32 2147483647, %v1305
        %v1818 = vand.u32 2147483647, %v1306
        %v1819 = vand.u32 2147483647, %v1307
        %v1820 = vand.u32 2147483647, %v1308
        %v1821 = vand.u32 2147483647, %v1309
        %v1822 = vand.u32 2147483647, %v1310
        %v1823 = vand.u32 2147483647, %v1311
        %v1824 = vand.u32 2147483647, %v1312
        %v1825 = vand.u32 2147483647, %v1313
        %v1826 = vand.u32 2147483647, %v1314
        %v1827 = vand.u32 2147483647, %v1315
        %v1828 = vand.u32 2147483647, %v1316
        %v1829 = vand.u32 2147483647, %v1317
        %v1830 = vand.u32 2147483647, %v1318
        %v1831 = vand.u32 2147483647, %v1319
        %v1832 = vand.u32 2147483647, %v1320
        %v1833 = vand.u32 2147483647, %v1321
        %v1834 = vand.u32 2147483647, %v1322
        %v1835 = vand.u32 2147483647, %v1323
        %v1836 = vand.u32 2147483647, %v1324
        %v1837 = vand.u32 2147483647, %v1325
        %v1838 = vand.u32 2147483647, %v1326
        %v1839 = vand.u32 2147483647, %v1327
        %v1840 = vand.u32 2147483647, %v1328
        %v1841 = vand.u32 2147483647, %v1329
        %v1842 = vand.u32 2147483647, %v1330
        %v1843 = vand.u32 2147483647, %v1331
        %v1844 = vand.u32 2147483647, %v1332
        %v1845 = vand.u32 2147483647, %v1333
        %v1846 = vand.u32 2147483647, %v1334
        %v1847 = vand.u32 2147483647, %v1335
        %v1848 = vand.u32 2147483647, %v1336
        %v1849 = vand.u32 2147483647, %v1337
        %v1850 = vand.u32 2147483647, %v1338
        %v1851 = vand.u32 2147483647, %v1339
        %v1852 = vand.u32 2147483647, %v1340
        %v1853 = vand.u32 2147483647, %v1341
        %v1854 = vand.u32 2147483647, %v1342
        %v1855 = vand.u32 2147483647, %v1343
        %v1856 = vand.u32 2147483647, %v1344
        %v1857 = vand.u32 2147483647, %v1345
        %v1858 = vand.u32 2147483647, %v1346
        %v1859 = vand.u32 2147483647, %v1347
        %v1860 = vand.u32 2147483647, %v1348
        %v1861 = vand.u32 2147483647, %v1349
        %v1862 = vand.u32 2147483647, %v1350
        %v1863 = vand.u32 2147483647, %v1351
        %v1864 = vand.u32 2147483647, %v1352
        %v1865 = vand.u32 2147483647, %v1353
        %v1866 = vand.u32 2147483647, %v1354
        %v1867 = vand.u32 2147483647, %v1355
        %v1868 = vand.u32 2147483647, %v1356
        %v1869 = vand.u32 2147483647, %v1357
        %v1870 = vand.u32 2147483647, %v1358
        %v1871 = vand.u32 2147483647, %v1359
        %v1872 = vand.u32 2147483647, %v1360
        %v1873 = vand.u32 2147483647, %v1361
        %v1874 = vand.u32 2147483647, %v1362
        %v1875 = vand.u32 2147483647, %v1363
        %v1876 = vand.u32 2147483647, %v1364
        %v1877 = vand.u32 2147483647, %v1365
        %v1878 = vand.u32 2147483647, %v1366
        %v1879 = vand.u32 2147483647, %v1367
        %v1880 = vand.u32 2147483647, %v1368
        %v1881 = vand.u32 2147483647, %v1369
        %v1882 = vand.u32 2147483647, %v1370
        %v1883 = vand.u32 2147483647, %v1371
        %v1884 = vand.u32 2147483647, %v1372
        %v1885 = vand.u32 2147483647, %v1373
        %v1886 = vand.u32 2147483647, %v1374
        %v1887 = vand.u32 2147483647, %v1375
        %v1888 = vand.u32 2147483647, %v1376
        %v1889 = vand.u32 2147483647, %v1377
        %v1890 = vand.u32 2147483647, %v1378
        %v1891 = vand.u32 2147483647, %v1379
        %v1892 = vand.u32 2147483647, %v1380
        %v1893 = vand.u32 2147483647, %v1381
        %v1894 = vand.u32 2147483647, %v1382
        %v1895 = vand.u32 2147483647, %v1383
        %v1896 = vand.u32 2147483647, %v1384
        %v1897 = vand.u32 2147483647, %v1385
        %v1898 = vand.u32 2147483647, %v1386
        %v1899 = vand.u32 2147483647, %v1387
        %v1900 = vand.u32 2147483647, %v1388
        %v1901 = vand.u32 2147483647, %v1389
        %v1902 = vand.u32 2147483647, %v1390
        %v1903 = vand.u32 2147483647, %v1391
        %v1904 = vand.u32 2147483647, %v1392
        %v1905 = vand.u32 2147483647, %v1393
        %v1906 = vand.u32 2147483647, %v1394
        %v1907 = vand.u32 2147483647, %v1395
        %v1908 = vand.u32 2147483647, %v1396
        %v1909 = vand.u32 2147483647, %v1397
        %v1910 = vand.u32 2147483647, %v1398
        %v1911 = vand.u32 2147483647, %v1399
        %v1912 = vand.u32 2147483647, %v1400
        %v1913 = vand.u32 2147483647, %v1401
        %v1914 = vand.u32 2147483647, %v1402
        %v1915 = vand.u32 2147483647, %v1403
        %v1916 = vand.u32 2147483647, %v1404
        %v1917 = vand.u32 2147483647, %v1405
        %v1918 = vand.u32 2147483647, %v1406
        %v1919 = vand.u32 2147483647, %v1407
        %v1920 = vand.u32 2147483647, %v1408
        %v1921 = vand.u32 2147483647, %v1409
        %v1922 = vand.u32 2147483647, %v1410
        %v1923 = vand.u32 2147483647, %v1411
        %v1924 = vand.u32 2147483647, %v1412
        %v1925 = vand.u32 2147483647, %v1413
        %v1926 = vand.u32 2147483647, %v1414
        %v1927 = vand.u32 2147483647, %v1415
        %v1928 = vand.u32 2147483647, %v1416
        %v1929 = vand.u32 2147483647, %v1417
        %v1930 = vand.u32 2147483647, %v1418
        %v1931 = vand.u32 2147483647, %v1419
        %v1932 = vand.u32 2147483647, %v1420
        %v1933 = vand.u32 2147483647, %v1421
        %v1934 = vand.u32 2147483647, %v1422
        %v1935 = vand.u32 2147483647, %v1423
        %v1936 = vand.u32 2147483647, %v1424
        %v1937 = vand.u32 2147483647, %v1425
        %v1938 = vand.u32 2147483647, %v1426
        %v1939 = vand.u32 2147483647, %v1427
        %v1940 = vand.u32 2147483647, %v1428
        %v1941 = vand.u32 2147483647, %v1429
        %v1942 = vand.u32 2147483647, %v1430
        %v1943 = vand.u32 2147483647, %v1431
        %v1944 = vand.u32 2147483647, %v1432
        %v1945 = vand.u32 2147483647, %v1433
        %v1946 = vand.u32 2147483647, %v1434
        %v1947 = vand.u32 2147483647, %v1435
        %v1948 = vand.u32 2147483647, %v1436
        %v1949 = vand.u32 2147483647, %v1437
        %v1950 = vand.u32 2147483647, %v1438
        %v1951 = vand.u32 2147483647, %v1439
        %v1952 = vand.u32 2147483647, %v1440
        %v1953 = vand.u32 2147483647, %v1441
        %v1954 = vand.u32 2147483647, %v1442
        %v1955 = vand.u32 2147483647, %v1443
        %v1956 = vand.u32 2147483647, %v1444
        %v1957 = vand.u32 2147483647, %v1445
        %v1958 = vand.u32 2147483647, %v1446
        %v1959 = vand.u32 2147483647, %v1447
        %v1960 = vand.u32 2147483647, %v1448
        %v1961 = vand.u32 2147483647, %v1449
        %v1962 = vand.u32 2147483647, %v1450
        %v1963 = vand.u32 2147483647, %v1451
        %v1964 = vand.u32 2147483647, %v1452
        %v1965 = vand.u32 2147483647, %v1453
        %v1966 = vand.u32 2147483647, %v1454
        %v1967 = vand.u32 2147483647, %v1455
        %v1968 = vand.u32 2147483647, %v1456
        %v1969 = vand.u32 2147483647, %v1457
        %v1970 = vand.u32 2147483647, %v1458
        %v1971 = vand.u32 2147483647, %v1459
        %v1972 = vand.u32 2147483647, %v1460
        %v1973 = vand.u32 2147483647, %v1461
        %v1974 = vand.u32 2147483647, %v1462
        %v1975 = vand.u32 2147483647, %v1463
        %v1976 = vand.u32 2147483647, %v1464
        %v1977 = vand.u32 2147483647, %v1465
        %v1978 = vand.u32 2147483647, %v1466
        %v1979 = vand.u32 2147483647, %v1467
        %v1980 = vand.u32 2147483647, %v1468
        %v1981 = vand.u32 2147483647, %v1469
        %v1982 = vand.u32 2147483647, %v1470
        %v1983 = vand.u32 2147483647, %v1471
        %v1984 = vand.u32 2147483647, %v1472
        %v1985 = vand.u32 2147483647, %v1473
        %v1986 = vand.u32 2147483647, %v1474
        %v1987 = vand.u32 2147483647, %v1475
        %v1988 = vand.u32 2147483647, %v1476
        %v1989 = vand.u32 2147483647, %v1477
        %v1990 = vand.u32 2147483647, %v1478
        %v1991 = vand.u32 2147483647, %v1479
        %v1992 = vand.u32 2147483647, %v1480
        %v1993 = vand.u32 2147483647, %v1481
        %v1994 = vand.u32 2147483647, %v1482
        %v1995 = vand.u32 2147483647, %v1483
        %v1996 = vand.u32 2147483647, %v1484
        %v1997 = vand.u32 2147483647, %v1485
        %v1998 = vand.u32 2147483647, %v1486
        %v1999 = vand.u32 2147483647, %v1487
        %v2000 = vand.u32 2147483647, %v1488
        %v2001 = vand.u32 2147483647, %v1489
        %v2002 = vand.u32 2147483647, %v1490
        %v2003 = vand.u32 2147483647, %v1491
        %v2004 = vand.u32 2147483647, %v1492
        %v2005 = vand.u32 2147483647, %v1493
        %v2006 = vand.u32 2147483647, %v1494
        %v2007 = vand.u32 2147483647, %v1495
        %v2008 = vand.u32 2147483647, %v1496
        %v2009 = vand.u32 2147483647, %v1497
        %v2010 = vand.u32 2147483647, %v1498
        %v2011 = vand.u32 2147483647, %v1499
        %v2012 = vand.u32 2147483647, %v1500
        %v2013 = vand.u32 2147483647, %v1501
        %v2014 = vand.u32 2147483647, %v1502
        %v2015 = vand.u32 2147483647, %v1503
        %v2016 = vand.u32 2147483647, %v1504
        %v2017 = vand.u32 2147483647, %v1505
        %v2018 = vand.u32 2147483647, %v1506
        %v2019 = vand.u32 2147483647, %v1507
        %v2020 = vand.u32 2147483647, %v1508
        %v2021 = vand.u32 2147483647, %v1509
        %v2022 = vand.u32 2147483647, %v1510
        %v2023 = vand.u32 2147483647, %v1511
        %v2024 = vand.u32 2147483647, %v1512
        %v2025 = vand.u32 2147483647, %v1513
        %v2026 = vand.u32 2147483647, %v1514
        %v2027 = vand.u32 2147483647, %v1515
        %v2028 = vand.u32 2147483647, %v1516
        %v2029 = vand.u32 2147483647, %v1517
        %v2030 = vand.u32 2147483647, %v1518
        %v2031 = vand.u32 2147483647, %v1519
        %v2032 = vand.u32 2147483647, %v1520
        %v2033 = vand.u32 2147483647, %v1521
        %v2034 = vand.u32 2147483647, %v1522
        %v2035 = vand.u32 2147483647, %v1523
        %v2036 = vand.u32 2147483647, %v1524
        %v2037 = vand.u32 2147483647, %v1525
        %v2038 = vand.u32 2147483647, %v1526
        %v2039 = vand.u32 2147483647, %v1527
        %v2040 = vand.u32 2147483647, %v1528
        %v2041 = vand.u32 2147483647, %v1529
        %v2042 = vand.u32 2147483647, %v1530
        %v2043 = vand.u32 2147483647, %v1531
        %v2044 = vand.u32 2147483647, %v1532
        %v2045 = vand.u32 2147483647, %v1533
        %v2046 = vand.u32 2147483647, %v1534
        %v2047 = vand.u32 2147483647, %v1535
        %v2048 = vand.u32 2147483647, %v1536
        %v2049 = vand.u32 2147483647, %v1537
        %v2050 = vand.u32 2147483647, %v1538
        %v2051 = vand.u32 2147483647, %v1539
        %v2052 = vand.u32 2147483647, %v1540
        %v2053 = vand.u32 2147483647, %v1541
        %v2054 = vand.u32 2147483647, %v1542
        %v2055 = vand.u32 2147483647, %v1543
        %v2056 = vand.u32 2147483647, %v1544
        %v2057 = vand.u32 2147483647, %v1545
        %v2058 = vand.u32 2147483647, %v1546
        %v2059 = vand.u32 2147483647, %v1547
        %v2060 = vand.u32 2147483647, %v1548
        %v2061 = vand.u32 2147483647, %v1549
        %v2062 = vand.u32 2147483647, %v1550
        %v2063 = vand.u32 2147483647, %v1551
        %v2064 = vand.u32 2147483647, %v1552
        %v2065 = vand.u32 2147483647, %v1553
        %v2066 = vand.u32 2147483647, %v1554
        %v2067 = vand.u32 2147483647, %v1555
        %v2068 = vand.u32 2147483647, %v1556
        %v2069 = vand.u32 2147483647, %v1557
        %v2070 = vand.u32 2147483647, %v1558
        %v2071 = vand.u32 2147483647, %v1559
        %v2072 = vand.u32 2147483647, %v1560
        %v2073 = vand.u32 2147483647, %v1561
        %v2074 = vand.u32 2147483647, %v1562
        %v2075 = vand.u32 2147483647, %v1563
        %v2076 = vand.u32 2147483647, %v1564
        %v2077 = vand.u32 2147483647, %v1565
        %v2078 = vand.u32 2147483647, %v1566
        %v2079 = vand.u32 2147483647, %v1567
        %v2080 = vand.u32 2147483647, %v1568
        %v2081 = vand.u32 2147483647, %v1569
        %v2082 = vand.u32 2147483647, %v1570
        %v2083 = vand.u32 2147483647, %v1571
        %v2084 = vand.u32 2147483647, %v1572
        %v2085 = vand.u32 2147483647, %v1573
        %v2086 = vand.u32 2147483647, %v1574
        %v2087 = vand.u32 2147483647, %v1575
        %v2088 = vand.u32 2147483647, %v1576
        %v2089 = vand.u32 2147483647, %v1577
        %v2090 = vand.u32 2147483647, %v1578
        %v2091 = vand.u32 2147483647, %v1579
        %v2092 = vand.u32 2147483647, %v1580
        %v2093 = vand.u32 2147483647, %v1581
        %v2094 = vand.u32 2147483647, %v1582
        %v2095 = vand.u32 2147483647, %v1583
        %v2096 = vand.u32 2147483647, %v1584
        %v2097 = vand.u32 2147483647, %v1585
        %v2098 = vand.u32 2147483647, %v1586
        %v2099 = vand.u32 2147483647, %v1587
        %v2100 = vand.u32 2147483647, %v1588
        %v2101 = vand.u32 2147483647, %v1589
        %v2102 = vand.u32 2147483647, %v1590
        %v2103 = vand.u32 2147483647, %v1591
        %v2104 = vand.u32 2147483647, %v1592
        %v2105 = vand.u32 2147483647, %v1593
        %v2106 = vand.u32 2147483647, %v1594
        %v2107 = vand.u32 2147483647, %v1595
        %v2108 = vand.u32 2147483647, %v1596
        %v2109 = vand.u32 2147483647, %v1597
        %v2110 = vand.u32 2147483647, %v1598
        %v2111 = vand.u32 2147483647, %v1599
        %v2112 = vand.u32 2147483647, %v1600
        %v2113 = vand.u32 2147483647, %v1601
        %v2114 = vand.u32 2147483647, %v1602
        %v2115 = vand.u32 2147483647, %v1603
        %v2116 = vand.u32 2147483647, %v1604
        %v2117 = vand.u32 2147483647, %v1605
        %v2118 = vand.u32 2147483647, %v1606
        %v2119 = vand.u32 2147483647, %v1607
        %v2120 = vand.u32 2147483647, %v1608
        %v2121 = vand.u32 2147483647, %v1609
        %v2122 = vand.u32 2147483647, %v1610
        %v2123 = vand.u32 2147483647, %v1611
        %v2124 = vand.u32 2147483647, %v1612
        %v2125 = vand.u32 2147483647, %v1613
        %v2126 = vand.u32 2147483647, %v1614
        %v2127 = vand.u32 2147483647, %v1615
        %v2128 = vand.u32 2147483647, %v1616
        %v2129 = vand.u32 2147483647, %v1617
        %v2130 = vand.u32 2147483647, %v1618
        %v2131 = vand.u32 2147483647, %v1619
        %v2132 = vand.u32 2147483647, %v1620
        %v2133 = vand.u32 2147483647, %v1621
        %v2134 = vand.u32 2147483647, %v1622
        %v2135 = vand.u32 2147483647, %v1623
        %v2136 = vand.u32 2147483647, %v1624
        %v2137 = vand.u32 2147483647, %v1625
        %v2138 = vand.u32 2147483647, %v1626
        %v2139 = vand.u32 2147483647, %v1627
        %v2140 = vand.u32 2147483647, %v1628
        %v2141 = vand.u32 2147483647, %v1629
        %v2142 = vand.u32 2147483647, %v1630
        %v2143 = vand.u32 2147483647, %v1631
        %v2144 = vand.u32 2147483647, %v1632
        %v2145 = vand.u32 2147483647, %v1633
        %v2146 = vand.u32 2147483647, %v1634
        %v2147 = vand.u32 2147483647, %v1635
        %v2148 = vand.u32 2147483647, %v1636
        %v2149 = vand.u32 2147483647, %v1637
        %v2150 = vand.u32 2147483647, %v1638
        %v2151 = vand.u32 2147483647, %v1639
        %v2152 = vand.u32 2147483647, %v1640
        %v2153 = vand.u32 2147483647, %v1641
        %v2154 = vand.u32 2147483647, %v1642
        %v2155 = vand.u32 2147483647, %v1643
        %v2156 = vand.u32 2147483647, %v1644
        %v2157 = vand.u32 2147483647, %v1645
        %v2158 = vand.u32 2147483647, %v1646
        %v2159 = vand.u32 2147483647, %v1647
        %v2160 = vand.u32 2147483647, %v1648
        %v2161 = vand.u32 2147483647, %v1649
        %v2162 = vand.u32 2147483647, %v1650
        %v2163 = vand.u32 2147483647, %v1651
        %v2164 = vand.u32 2147483647, %v1652
        %v2165 = vand.u32 2147483647, %v1653
        %v2166 = vand.u32 2147483647, %v1654
        %v2167 = vand.u32 2147483647, %v1655
        %v2168 = vand.u32 2147483647, %v1656
        %v2169 = vand.u32 2147483647, %v1657
        %v2170 = vand.u32 2147483647, %v1658
        %v2171 = vand.u32 2147483647, %v1659
        %v2172 = vand.u32 2147483647, %v1660
        %v2173 = vand.u32 2147483647, %v1661
        %v2174 = vand.u32 2147483647, %v1662
        %v2175 = vand.u32 2147483647, %v1663
        %v2176 = vand.u32 2147483647, %v1664
        %v2177 = vand.u32 2147483647, %v1665
        %v2178 = vand.u32 2147483647, %v1666
        %v2179 = vand.u32 2147483647, %v1667
        %v2180 = vand.u32 2147483647, %v1668
        %v2181 = vand.u32 2147483647, %v1669
        %v2182 = vand.u32 2147483647, %v1670
        %v2183 = vand.u32 2147483647, %v1671
        %v2184 = vand.u32 2147483647, %v1672
        %v2185 = vand.u32 2147483647, %v1673
        %v2186 = vand.u32 2147483647, %v1674
        %v2187 = vand.u32 2147483647, %v1675
        %v2188 = vand.u32 2147483647, %v1676
        %v2189 = vand.u32 2147483647, %v1677
        %v2190 = vand.u32 2147483647, %v1678
        %v2191 = vand.u32 2147483647, %v1679
        %v2192 = vand.u32 2147483647, %v1680
        %v2193 = vand.u32 2147483647, %v1681
        %v2194 = vand.u32 2147483647, %v1682
        %v2195 = vand.u32 2147483647, %v1683
        %v2196 = vand.u32 2147483647, %v1684
        %v2197 = vand.u32 2147483647, %v1685
        %v2198 = vand.u32 2147483647, %v1686
        %v2199 = vand.u32 2147483647, %v1687
        %v2200 = vand.u32 2147483647, %v1688
        %v2201 = vand.u32 2147483647, %v1689
        %v2202 = vand.u32 2147483647, %v1690
        %v2203 = vand.u32 2147483647, %v1691
        %v2204 = vand.u32 2147483647, %v1692
        %v2205 = vand.u32 2147483647, %v1693
        %v2206 = vand.u32 2147483647, %v1694
        %v2207 = vand.u32 2147483647, %v1695
        %v2208 = vand.u32 2147483647, %v1696
        %v2209 = vand.u32 2147483647, %v1697
        %v2210 = vand.u32 2147483647, %v1698
        %v2211 = vand.u32 2147483647, %v1699
        %v2212 = vand.u32 2147483647, %v1700
        %v2213 = vand.u32 2147483647, %v1701
        %v2214 = vand.u32 2147483647, %v1702
        %v2215 = vand.u32 2147483647, %v1703
        %v2216 = vand.u32 2147483647, %v1704
        %v2217 = vand.u32 2147483647, %v1705
        %v2218 = vand.u32 2147483647, %v1706
        %v2219 = vand.u32 2147483647, %v1707
        %v2220 = vand.u32 2147483647, %v1708
        %v2221 = vand.u32 2147483647, %v1709
        %v2222 = vand.u32 2147483647, %v1710
        %v2223 = vand.u32 2147483647, %v1711
        %v2224 = vand.u32 2147483647, %v1712
        %v2225 = vand.u32 2147483647, %v1713
        %v2226 = vand.u32 2147483647, %v1714
        %v2227 = vand.u32 2147483647, %v1715
        %v2228 = vand.u32 2147483647, %v1716
        %v2229 = vand.u32 2147483647, %v1717
        %v2230 = vand.u32 2147483647, %v1718
        %v2231 = vand.u32 2147483647, %v1719
        %v2232 = vand.u32 2147483647, %v1720
        %v2233 = vand.u32 2147483647, %v1721
        %v2234 = vand.u32 2147483647, %v1722
        %v2235 = vand.u32 2147483647, %v1723
        %v2236 = vand.u32 2147483647, %v1724
        %v2237 = vand.u32 2147483647, %v1725
        %v2238 = vand.u32 2147483647, %v1726
        %v2239 = vand.u32 2147483647, %v1727
        %v2240 = vand.u32 2147483647, %v1728
        %v2241 = vand.u32 2147483647, %v1729
        %v2242 = vand.u32 2147483647, %v1730
        %v2243 = vand.u32 2147483647, %v1731
        %v2244 = vand.u32 2147483647, %v1732
        %v2245 = vand.u32 2147483647, %v1733
        %v2246 = vand.u32 2147483647, %v1734
        %v2247 = vand.u32 2147483647, %v1735
        %v2248 = vand.u32 2147483647, %v1736
        %v2249 = vand.u32 2147483647, %v1737
        %v2250 = vand.u32 2147483647, %v1738
        %v2251 = vand.u32 2147483647, %v1739
        %v2252 = vand.u32 2147483647, %v1740
        %v2253 = vand.u32 2147483647, %v1741
        %v2254 = vand.u32 2147483647, %v1742
        %v2255 = vand.u32 2147483647, %v1743
        %v2256 = vand.u32 2147483647, %v1744
        %v2257 = vand.u32 2147483647, %v1745
        %v2258 = vand.u32 2147483647, %v1746
        %v2259 = vand.u32 2147483647, %v1747
        %v2260 = vand.u32 2147483647, %v1748
        %v2261 = vand.u32 2147483647, %v1749
        %v2262 = vand.u32 2147483647, %v1750
        %v2263 = vand.u32 2147483647, %v1751
        %v2264 = vand.u32 2147483647, %v1752
        %v2265 = vand.u32 2147483647, %v1753
        %v2266 = vand.u32 2147483647, %v1754
        %v2267 = vand.u32 2147483647, %v1755
        %v2268 = vand.u32 2147483647, %v1756
        %v2269 = vand.u32 2147483647, %v1757
        %v2270 = vand.u32 2147483647, %v1758
        %v2271 = vand.u32 2147483647, %v1759
        %v2272 = vand.u32 2147483647, %v1760
        %v2273 = vand.u32 2147483647, %v1761
        %v2274 = vand.u32 2147483647, %v1762
        %v2275 = vand.u32 2147483647, %v1763
        %v2276 = vand.u32 2147483647, %v1764
        %v2277 = vand.u32 2147483647, %v1765
        %v2278 = vand.u32 2147483647, %v1766
        %v2279 = vand.u32 2147483647, %v1767
        %v2280 = vand.u32 2147483647, %v1768
        %v2281 = vand.u32 2147483647, %v1769
        %v2282 = vand.u32 2147483647, %v1770
        %v2283 = vand.u32 2147483647, %v1771
        %v2284 = vand.u32 2147483647, %v1772
        %v2285 = vand.u32 2147483647, %v1773
        %v2286 = vand.u32 2147483647, %v1774
        %v2287 = vand.u32 2147483647, %v1775
        %v2288 = vand.u32 2147483647, %v1776
        %v2289 = vand.u32 2147483647, %v1777
        %v2290 = vand.u32 2147483647, %v1778
        %v2291 = vand.u32 2147483647, %v1779
        %v2292 = vand.u32 2147483647, %v1780
        %v2293 = vand.u32 2147483647, %v1781
        %v2294 = vand.u32 2147483647, %v1782
        %v2295 = vand.u32 2147483647, %v1783
        %v2296 = vand.u32 2147483647, %v1784
        %v2297 = vand.u32 2147483647, %v1785
        %v2298 = vand.u32 2147483647, %v1786
        %v2299 = vand.u32 2147483647, %v1787
        %v2300 = vand.u32 2147483647, %v1788
        %v2301 = vand.u32 2147483647, %v1789
        %v2302 = vand.u32 2147483647, %v1790
        %v2303 = vand.u32 2147483647, %v1791
        %v2304 = vand.u32 2147483647, %v1792
        %v2305 = vand.u32 2147483647, %v1793
        %v2306 = vand.u32 2147483647, %v1794
        %v2307 = vand.u32 2147483647, %v1795
        %v2308 = vand.u32 2147483647, %v1796
        %v2309 = vand.u32 2147483647, %v1797
        %v2310 = vand.u32 2147483647, %v1798
        %v2311 = vand.u32 2147483647, %v1799
        %v2312 = vand.u32 2147483647, %v1800
        %v2313 = vand.u32 2147483647, %v1801
        %v2314 = vand.u32 2147483647, %v1802
        %v2315 = vand.u32 2147483647, %v1803
        %v2316 = vand.u32 2147483647, %v1804
        %v2317 = vld [vmem:[%s261] sm:$0xff]
        %v2318 = vld [vmem:[%s261 + $0x8] sm:$0xff]
        %v2319 = vld [vmem:[%s261 + $0x10] sm:$0xff]
        %v2320 = vld [vmem:[%s261 + $0x18] sm:$0xff]
        %v2321 = vld [vmem:[%s261 + $0x20] sm:$0xff]
        %v2322 = vld [vmem:[%s261 + $0x28] sm:$0xff]
        %v2323 = vld [vmem:[%s261 + $0x30] sm:$0xff]
        %v2324 = vld [vmem:[%s261 + $0x38] sm:$0xff]
        %v2325 = vld [vmem:[%s261 + $0x40] sm:$0xff]
        %v2326 = vld [vmem:[%s261 + $0x48] sm:$0xff]
        %v2327 = vld [vmem:[%s261 + $0x50] sm:$0xff]
        %v2328 = vld [vmem:[%s261 + $0x58] sm:$0xff]
        %v2329 = vld [vmem:[%s261 + $0x60] sm:$0xff]
        %v2330 = vld [vmem:[%s261 + $0x68] sm:$0xff]
        %v2331 = vld [vmem:[%s261 + $0x70] sm:$0xff]
        %v2332 = vld [vmem:[%s261 + $0x78] sm:$0xff]
        %v2333 = vld [vmem:[%s261 + $0x80] sm:$0xff]
        %v2334 = vld [vmem:[%s261 + $0x88] sm:$0xff]
        %v2335 = vld [vmem:[%s261 + $0x90] sm:$0xff]
        %v2336 = vld [vmem:[%s261 + $0x98] sm:$0xff]
        %v2337 = vld [vmem:[%s261 + $0xa0] sm:$0xff]
        %v2338 = vld [vmem:[%s261 + $0xa8] sm:$0xff]
        %v2339 = vld [vmem:[%s261 + $0xb0] sm:$0xff]
        %v2340 = vld [vmem:[%s261 + $0xb8] sm:$0xff]
        %v2341 = vld [vmem:[%s261 + $0xc0] sm:$0xff]
        %v2342 = vld [vmem:[%s261 + $0xc8] sm:$0xff]
        %v2343 = vld [vmem:[%s261 + $0xd0] sm:$0xff]
        %v2344 = vld [vmem:[%s261 + $0xd8] sm:$0xff]
        %v2345 = vld [vmem:[%s261 + $0xe0] sm:$0xff]
        %v2346 = vld [vmem:[%s261 + $0xe8] sm:$0xff]
        %v2347 = vld [vmem:[%s261 + $0xf0] sm:$0xff]
        %v2348 = vld [vmem:[%s261 + $0xf8] sm:$0xff]
        %v2349 = vld [vmem:[%s261 + $0x100] sm:$0xff]
        %v2350 = vld [vmem:[%s261 + $0x108] sm:$0xff]
        %v2351 = vld [vmem:[%s261 + $0x110] sm:$0xff]
        %v2352 = vld [vmem:[%s261 + $0x118] sm:$0xff]
        %v2353 = vld [vmem:[%s261 + $0x120] sm:$0xff]
        %v2354 = vld [vmem:[%s261 + $0x128] sm:$0xff]
        %v2355 = vld [vmem:[%s261 + $0x130] sm:$0xff]
        %v2356 = vld [vmem:[%s261 + $0x138] sm:$0xff]
        %v2357 = vld [vmem:[%s261 + $0x140] sm:$0xff]
        %v2358 = vld [vmem:[%s261 + $0x148] sm:$0xff]
        %v2359 = vld [vmem:[%s261 + $0x150] sm:$0xff]
        %v2360 = vld [vmem:[%s261 + $0x158] sm:$0xff]
        %v2361 = vld [vmem:[%s261 + $0x160] sm:$0xff]
        %v2362 = vld [vmem:[%s261 + $0x168] sm:$0xff]
        %v2363 = vld [vmem:[%s261 + $0x170] sm:$0xff]
        %v2364 = vld [vmem:[%s261 + $0x178] sm:$0xff]
        %v2365 = vld [vmem:[%s261 + $0x180] sm:$0xff]
        %v2366 = vld [vmem:[%s261 + $0x188] sm:$0xff]
        %v2367 = vld [vmem:[%s261 + $0x190] sm:$0xff]
        %v2368 = vld [vmem:[%s261 + $0x198] sm:$0xff]
        %v2369 = vld [vmem:[%s261 + $0x1a0] sm:$0xff]
        %v2370 = vld [vmem:[%s261 + $0x1a8] sm:$0xff]
        %v2371 = vld [vmem:[%s261 + $0x1b0] sm:$0xff]
        %v2372 = vld [vmem:[%s261 + $0x1b8] sm:$0xff]
        %v2373 = vld [vmem:[%s261 + $0x1c0] sm:$0xff]
        %v2374 = vld [vmem:[%s261 + $0x1c8] sm:$0xff]
        %v2375 = vld [vmem:[%s261 + $0x1d0] sm:$0xff]
        %v2376 = vld [vmem:[%s261 + $0x1d8] sm:$0xff]
        %v2377 = vld [vmem:[%s261 + $0x1e0] sm:$0xff]
        %v2378 = vld [vmem:[%s261 + $0x1e8] sm:$0xff]
        %v2379 = vld [vmem:[%s261 + $0x1f0] sm:$0xff]
        %v2380 = vld [vmem:[%s261 + $0x1f8] sm:$0xff]
        %v2381 = vld [vmem:[%s261 + $0x200] sm:$0xff]
        %v2382 = vld [vmem:[%s261 + $0x208] sm:$0xff]
        %v2383 = vld [vmem:[%s261 + $0x210] sm:$0xff]
        %v2384 = vld [vmem:[%s261 + $0x218] sm:$0xff]
        %v2385 = vld [vmem:[%s261 + $0x220] sm:$0xff]
        %v2386 = vld [vmem:[%s261 + $0x228] sm:$0xff]
        %v2387 = vld [vmem:[%s261 + $0x230] sm:$0xff]
        %v2388 = vld [vmem:[%s261 + $0x238] sm:$0xff]
        %v2389 = vld [vmem:[%s261 + $0x240] sm:$0xff]
        %v2390 = vld [vmem:[%s261 + $0x248] sm:$0xff]
        %v2391 = vld [vmem:[%s261 + $0x250] sm:$0xff]
        %v2392 = vld [vmem:[%s261 + $0x258] sm:$0xff]
        %v2393 = vld [vmem:[%s261 + $0x260] sm:$0xff]
        %v2394 = vld [vmem:[%s261 + $0x268] sm:$0xff]
        %v2395 = vld [vmem:[%s261 + $0x270] sm:$0xff]
        %v2396 = vld [vmem:[%s261 + $0x278] sm:$0xff]
        %v2397 = vld [vmem:[%s261 + $0x280] sm:$0xff]
        %v2398 = vld [vmem:[%s261 + $0x288] sm:$0xff]
        %v2399 = vld [vmem:[%s261 + $0x290] sm:$0xff]
        %v2400 = vld [vmem:[%s261 + $0x298] sm:$0xff]
        %v2401 = vld [vmem:[%s261 + $0x2a0] sm:$0xff]
        %v2402 = vld [vmem:[%s261 + $0x2a8] sm:$0xff]
        %v2403 = vld [vmem:[%s261 + $0x2b0] sm:$0xff]
        %v2404 = vld [vmem:[%s261 + $0x2b8] sm:$0xff]
        %v2405 = vld [vmem:[%s261 + $0x2c0] sm:$0xff]
        %v2406 = vld [vmem:[%s261 + $0x2c8] sm:$0xff]
        %v2407 = vld [vmem:[%s261 + $0x2d0] sm:$0xff]
        %v2408 = vld [vmem:[%s261 + $0x2d8] sm:$0xff]
        %v2409 = vld [vmem:[%s261 + $0x2e0] sm:$0xff]
        %v2410 = vld [vmem:[%s261 + $0x2e8] sm:$0xff]
        %v2411 = vld [vmem:[%s261 + $0x2f0] sm:$0xff]
        %v2412 = vld [vmem:[%s261 + $0x2f8] sm:$0xff]
        %v2413 = vld [vmem:[%s261 + $0x300] sm:$0xff]
        %v2414 = vld [vmem:[%s261 + $0x308] sm:$0xff]
        %v2415 = vld [vmem:[%s261 + $0x310] sm:$0xff]
        %v2416 = vld [vmem:[%s261 + $0x318] sm:$0xff]
        %v2417 = vld [vmem:[%s261 + $0x320] sm:$0xff]
        %v2418 = vld [vmem:[%s261 + $0x328] sm:$0xff]
        %v2419 = vld [vmem:[%s261 + $0x330] sm:$0xff]
        %v2420 = vld [vmem:[%s261 + $0x338] sm:$0xff]
        %v2421 = vld [vmem:[%s261 + $0x340] sm:$0xff]
        %v2422 = vld [vmem:[%s261 + $0x348] sm:$0xff]
        %v2423 = vld [vmem:[%s261 + $0x350] sm:$0xff]
        %v2424 = vld [vmem:[%s261 + $0x358] sm:$0xff]
        %v2425 = vld [vmem:[%s261 + $0x360] sm:$0xff]
        %v2426 = vld [vmem:[%s261 + $0x368] sm:$0xff]
        %v2427 = vld [vmem:[%s261 + $0x370] sm:$0xff]
        %v2428 = vld [vmem:[%s261 + $0x378] sm:$0xff]
        %v2429 = vld [vmem:[%s261 + $0x380] sm:$0xff]
        %v2430 = vld [vmem:[%s261 + $0x388] sm:$0xff]
        %v2431 = vld [vmem:[%s261 + $0x390] sm:$0xff]
        %v2432 = vld [vmem:[%s261 + $0x398] sm:$0xff]
        %v2433 = vld [vmem:[%s261 + $0x3a0] sm:$0xff]
        %v2434 = vld [vmem:[%s261 + $0x3a8] sm:$0xff]
        %v2435 = vld [vmem:[%s261 + $0x3b0] sm:$0xff]
        %v2436 = vld [vmem:[%s261 + $0x3b8] sm:$0xff]
        %v2437 = vld [vmem:[%s261 + $0x3c0] sm:$0xff]
        %v2438 = vld [vmem:[%s261 + $0x3c8] sm:$0xff]
        %v2439 = vld [vmem:[%s261 + $0x3d0] sm:$0xff]
        %v2440 = vld [vmem:[%s261 + $0x3d8] sm:$0xff]
        %v2441 = vld [vmem:[%s261 + $0x3e0] sm:$0xff]
        %v2442 = vld [vmem:[%s261 + $0x3e8] sm:$0xff]
        %v2443 = vld [vmem:[%s261 + $0x3f0] sm:$0xff]
        %v2444 = vld [vmem:[%s261 + $0x3f8] sm:$0xff]
        %v2445 = vld [vmem:[%s261 + $0x400] sm:$0xff]
        %v2446 = vld [vmem:[%s261 + $0x408] sm:$0xff]
        %v2447 = vld [vmem:[%s261 + $0x410] sm:$0xff]
        %v2448 = vld [vmem:[%s261 + $0x418] sm:$0xff]
        %v2449 = vld [vmem:[%s261 + $0x420] sm:$0xff]
        %v2450 = vld [vmem:[%s261 + $0x428] sm:$0xff]
        %v2451 = vld [vmem:[%s261 + $0x430] sm:$0xff]
        %v2452 = vld [vmem:[%s261 + $0x438] sm:$0xff]
        %v2453 = vld [vmem:[%s261 + $0x440] sm:$0xff]
        %v2454 = vld [vmem:[%s261 + $0x448] sm:$0xff]
        %v2455 = vld [vmem:[%s261 + $0x450] sm:$0xff]
        %v2456 = vld [vmem:[%s261 + $0x458] sm:$0xff]
        %v2457 = vld [vmem:[%s261 + $0x460] sm:$0xff]
        %v2458 = vld [vmem:[%s261 + $0x468] sm:$0xff]
        %v2459 = vld [vmem:[%s261 + $0x470] sm:$0xff]
        %v2460 = vld [vmem:[%s261 + $0x478] sm:$0xff]
        %v2461 = vld [vmem:[%s261 + $0x480] sm:$0xff]
        %v2462 = vld [vmem:[%s261 + $0x488] sm:$0xff]
        %v2463 = vld [vmem:[%s261 + $0x490] sm:$0xff]
        %v2464 = vld [vmem:[%s261 + $0x498] sm:$0xff]
        %v2465 = vld [vmem:[%s261 + $0x4a0] sm:$0xff]
        %v2466 = vld [vmem:[%s261 + $0x4a8] sm:$0xff]
        %v2467 = vld [vmem:[%s261 + $0x4b0] sm:$0xff]
        %v2468 = vld [vmem:[%s261 + $0x4b8] sm:$0xff]
        %v2469 = vld [vmem:[%s261 + $0x4c0] sm:$0xff]
        %v2470 = vld [vmem:[%s261 + $0x4c8] sm:$0xff]
        %v2471 = vld [vmem:[%s261 + $0x4d0] sm:$0xff]
        %v2472 = vld [vmem:[%s261 + $0x4d8] sm:$0xff]
        %v2473 = vld [vmem:[%s261 + $0x4e0] sm:$0xff]
        %v2474 = vld [vmem:[%s261 + $0x4e8] sm:$0xff]
        %v2475 = vld [vmem:[%s261 + $0x4f0] sm:$0xff]
        %v2476 = vld [vmem:[%s261 + $0x4f8] sm:$0xff]
        %v2477 = vld [vmem:[%s261 + $0x500] sm:$0xff]
        %v2478 = vld [vmem:[%s261 + $0x508] sm:$0xff]
        %v2479 = vld [vmem:[%s261 + $0x510] sm:$0xff]
        %v2480 = vld [vmem:[%s261 + $0x518] sm:$0xff]
        %v2481 = vld [vmem:[%s261 + $0x520] sm:$0xff]
        %v2482 = vld [vmem:[%s261 + $0x528] sm:$0xff]
        %v2483 = vld [vmem:[%s261 + $0x530] sm:$0xff]
        %v2484 = vld [vmem:[%s261 + $0x538] sm:$0xff]
        %v2485 = vld [vmem:[%s261 + $0x540] sm:$0xff]
        %v2486 = vld [vmem:[%s261 + $0x548] sm:$0xff]
        %v2487 = vld [vmem:[%s261 + $0x550] sm:$0xff]
        %v2488 = vld [vmem:[%s261 + $0x558] sm:$0xff]
        %v2489 = vld [vmem:[%s261 + $0x560] sm:$0xff]
        %v2490 = vld [vmem:[%s261 + $0x568] sm:$0xff]
        %v2491 = vld [vmem:[%s261 + $0x570] sm:$0xff]
        %v2492 = vld [vmem:[%s261 + $0x578] sm:$0xff]
        %v2493 = vld [vmem:[%s261 + $0x580] sm:$0xff]
        %v2494 = vld [vmem:[%s261 + $0x588] sm:$0xff]
        %v2495 = vld [vmem:[%s261 + $0x590] sm:$0xff]
        %v2496 = vld [vmem:[%s261 + $0x598] sm:$0xff]
        %v2497 = vld [vmem:[%s261 + $0x5a0] sm:$0xff]
        %v2498 = vld [vmem:[%s261 + $0x5a8] sm:$0xff]
        %v2499 = vld [vmem:[%s261 + $0x5b0] sm:$0xff]
        %v2500 = vld [vmem:[%s261 + $0x5b8] sm:$0xff]
        %v2501 = vld [vmem:[%s261 + $0x5c0] sm:$0xff]
        %v2502 = vld [vmem:[%s261 + $0x5c8] sm:$0xff]
        %v2503 = vld [vmem:[%s261 + $0x5d0] sm:$0xff]
        %v2504 = vld [vmem:[%s261 + $0x5d8] sm:$0xff]
        %v2505 = vld [vmem:[%s261 + $0x5e0] sm:$0xff]
        %v2506 = vld [vmem:[%s261 + $0x5e8] sm:$0xff]
        %v2507 = vld [vmem:[%s261 + $0x5f0] sm:$0xff]
        %v2508 = vld [vmem:[%s261 + $0x5f8] sm:$0xff]
        %v2509 = vld [vmem:[%s261 + $0x600] sm:$0xff]
        %v2510 = vld [vmem:[%s261 + $0x608] sm:$0xff]
        %v2511 = vld [vmem:[%s261 + $0x610] sm:$0xff]
        %v2512 = vld [vmem:[%s261 + $0x618] sm:$0xff]
        %v2513 = vld [vmem:[%s261 + $0x620] sm:$0xff]
        %v2514 = vld [vmem:[%s261 + $0x628] sm:$0xff]
        %v2515 = vld [vmem:[%s261 + $0x630] sm:$0xff]
        %v2516 = vld [vmem:[%s261 + $0x638] sm:$0xff]
        %v2517 = vld [vmem:[%s261 + $0x640] sm:$0xff]
        %v2518 = vld [vmem:[%s261 + $0x648] sm:$0xff]
        %v2519 = vld [vmem:[%s261 + $0x650] sm:$0xff]
        %v2520 = vld [vmem:[%s261 + $0x658] sm:$0xff]
        %v2521 = vld [vmem:[%s261 + $0x660] sm:$0xff]
        %v2522 = vld [vmem:[%s261 + $0x668] sm:$0xff]
        %v2523 = vld [vmem:[%s261 + $0x670] sm:$0xff]
        %v2524 = vld [vmem:[%s261 + $0x678] sm:$0xff]
        %v2525 = vld [vmem:[%s261 + $0x680] sm:$0xff]
        %v2526 = vld [vmem:[%s261 + $0x688] sm:$0xff]
        %v2527 = vld [vmem:[%s261 + $0x690] sm:$0xff]
        %v2528 = vld [vmem:[%s261 + $0x698] sm:$0xff]
        %v2529 = vld [vmem:[%s261 + $0x6a0] sm:$0xff]
        %v2530 = vld [vmem:[%s261 + $0x6a8] sm:$0xff]
        %v2531 = vld [vmem:[%s261 + $0x6b0] sm:$0xff]
        %v2532 = vld [vmem:[%s261 + $0x6b8] sm:$0xff]
        %v2533 = vld [vmem:[%s261 + $0x6c0] sm:$0xff]
        %v2534 = vld [vmem:[%s261 + $0x6c8] sm:$0xff]
        %v2535 = vld [vmem:[%s261 + $0x6d0] sm:$0xff]
        %v2536 = vld [vmem:[%s261 + $0x6d8] sm:$0xff]
        %v2537 = vld [vmem:[%s261 + $0x6e0] sm:$0xff]
        %v2538 = vld [vmem:[%s261 + $0x6e8] sm:$0xff]
        %v2539 = vld [vmem:[%s261 + $0x6f0] sm:$0xff]
        %v2540 = vld [vmem:[%s261 + $0x6f8] sm:$0xff]
        %v2541 = vld [vmem:[%s261 + $0x700] sm:$0xff]
        %v2542 = vld [vmem:[%s261 + $0x708] sm:$0xff]
        %v2543 = vld [vmem:[%s261 + $0x710] sm:$0xff]
        %v2544 = vld [vmem:[%s261 + $0x718] sm:$0xff]
        %v2545 = vld [vmem:[%s261 + $0x720] sm:$0xff]
        %v2546 = vld [vmem:[%s261 + $0x728] sm:$0xff]
        %v2547 = vld [vmem:[%s261 + $0x730] sm:$0xff]
        %v2548 = vld [vmem:[%s261 + $0x738] sm:$0xff]
        %v2549 = vld [vmem:[%s261 + $0x740] sm:$0xff]
        %v2550 = vld [vmem:[%s261 + $0x748] sm:$0xff]
        %v2551 = vld [vmem:[%s261 + $0x750] sm:$0xff]
        %v2552 = vld [vmem:[%s261 + $0x758] sm:$0xff]
        %v2553 = vld [vmem:[%s261 + $0x760] sm:$0xff]
        %v2554 = vld [vmem:[%s261 + $0x768] sm:$0xff]
        %v2555 = vld [vmem:[%s261 + $0x770] sm:$0xff]
        %v2556 = vld [vmem:[%s261 + $0x778] sm:$0xff]
        %v2557 = vld [vmem:[%s261 + $0x780] sm:$0xff]
        %v2558 = vld [vmem:[%s261 + $0x788] sm:$0xff]
        %v2559 = vld [vmem:[%s261 + $0x790] sm:$0xff]
        %v2560 = vld [vmem:[%s261 + $0x798] sm:$0xff]
        %v2561 = vld [vmem:[%s261 + $0x7a0] sm:$0xff]
        %v2562 = vld [vmem:[%s261 + $0x7a8] sm:$0xff]
        %v2563 = vld [vmem:[%s261 + $0x7b0] sm:$0xff]
        %v2564 = vld [vmem:[%s261 + $0x7b8] sm:$0xff]
        %v2565 = vld [vmem:[%s261 + $0x7c0] sm:$0xff]
        %v2566 = vld [vmem:[%s261 + $0x7c8] sm:$0xff]
        %v2567 = vld [vmem:[%s261 + $0x7d0] sm:$0xff]
        %v2568 = vld [vmem:[%s261 + $0x7d8] sm:$0xff]
        %v2569 = vld [vmem:[%s261 + $0x7e0] sm:$0xff]
        %v2570 = vld [vmem:[%s261 + $0x7e8] sm:$0xff]
        %v2571 = vld [vmem:[%s261 + $0x7f0] sm:$0xff]
        %v2572 = vld [vmem:[%s261 + $0x7f8] sm:$0xff]
        %v2573 = vld [vmem:[%s261 + $0x800] sm:$0xff]
        %v2574 = vld [vmem:[%s261 + $0x808] sm:$0xff]
        %v2575 = vld [vmem:[%s261 + $0x810] sm:$0xff]
        %v2576 = vld [vmem:[%s261 + $0x818] sm:$0xff]
        %v2577 = vld [vmem:[%s261 + $0x820] sm:$0xff]
        %v2578 = vld [vmem:[%s261 + $0x828] sm:$0xff]
        %v2579 = vld [vmem:[%s261 + $0x830] sm:$0xff]
        %v2580 = vld [vmem:[%s261 + $0x838] sm:$0xff]
        %v2581 = vld [vmem:[%s261 + $0x840] sm:$0xff]
        %v2582 = vld [vmem:[%s261 + $0x848] sm:$0xff]
        %v2583 = vld [vmem:[%s261 + $0x850] sm:$0xff]
        %v2584 = vld [vmem:[%s261 + $0x858] sm:$0xff]
        %v2585 = vld [vmem:[%s261 + $0x860] sm:$0xff]
        %v2586 = vld [vmem:[%s261 + $0x868] sm:$0xff]
        %v2587 = vld [vmem:[%s261 + $0x870] sm:$0xff]
        %v2588 = vld [vmem:[%s261 + $0x878] sm:$0xff]
        %v2589 = vld [vmem:[%s261 + $0x880] sm:$0xff]
        %v2590 = vld [vmem:[%s261 + $0x888] sm:$0xff]
        %v2591 = vld [vmem:[%s261 + $0x890] sm:$0xff]
        %v2592 = vld [vmem:[%s261 + $0x898] sm:$0xff]
        %v2593 = vld [vmem:[%s261 + $0x8a0] sm:$0xff]
        %v2594 = vld [vmem:[%s261 + $0x8a8] sm:$0xff]
        %v2595 = vld [vmem:[%s261 + $0x8b0] sm:$0xff]
        %v2596 = vld [vmem:[%s261 + $0x8b8] sm:$0xff]
        %v2597 = vld [vmem:[%s261 + $0x8c0] sm:$0xff]
        %v2598 = vld [vmem:[%s261 + $0x8c8] sm:$0xff]
        %v2599 = vld [vmem:[%s261 + $0x8d0] sm:$0xff]
        %v2600 = vld [vmem:[%s261 + $0x8d8] sm:$0xff]
        %v2601 = vld [vmem:[%s261 + $0x8e0] sm:$0xff]
        %v2602 = vld [vmem:[%s261 + $0x8e8] sm:$0xff]
        %v2603 = vld [vmem:[%s261 + $0x8f0] sm:$0xff]
        %v2604 = vld [vmem:[%s261 + $0x8f8] sm:$0xff]
        %v2605 = vld [vmem:[%s261 + $0x900] sm:$0xff]
        %v2606 = vld [vmem:[%s261 + $0x908] sm:$0xff]
        %v2607 = vld [vmem:[%s261 + $0x910] sm:$0xff]
        %v2608 = vld [vmem:[%s261 + $0x918] sm:$0xff]
        %v2609 = vld [vmem:[%s261 + $0x920] sm:$0xff]
        %v2610 = vld [vmem:[%s261 + $0x928] sm:$0xff]
        %v2611 = vld [vmem:[%s261 + $0x930] sm:$0xff]
        %v2612 = vld [vmem:[%s261 + $0x938] sm:$0xff]
        %v2613 = vld [vmem:[%s261 + $0x940] sm:$0xff]
        %v2614 = vld [vmem:[%s261 + $0x948] sm:$0xff]
        %v2615 = vld [vmem:[%s261 + $0x950] sm:$0xff]
        %v2616 = vld [vmem:[%s261 + $0x958] sm:$0xff]
        %v2617 = vld [vmem:[%s261 + $0x960] sm:$0xff]
        %v2618 = vld [vmem:[%s261 + $0x968] sm:$0xff]
        %v2619 = vld [vmem:[%s261 + $0x970] sm:$0xff]
        %v2620 = vld [vmem:[%s261 + $0x978] sm:$0xff]
        %v2621 = vld [vmem:[%s261 + $0x980] sm:$0xff]
        %v2622 = vld [vmem:[%s261 + $0x988] sm:$0xff]
        %v2623 = vld [vmem:[%s261 + $0x990] sm:$0xff]
        %v2624 = vld [vmem:[%s261 + $0x998] sm:$0xff]
        %v2625 = vld [vmem:[%s261 + $0x9a0] sm:$0xff]
        %v2626 = vld [vmem:[%s261 + $0x9a8] sm:$0xff]
        %v2627 = vld [vmem:[%s261 + $0x9b0] sm:$0xff]
        %v2628 = vld [vmem:[%s261 + $0x9b8] sm:$0xff]
        %v2629 = vld [vmem:[%s261 + $0x9c0] sm:$0xff]
        %v2630 = vld [vmem:[%s261 + $0x9c8] sm:$0xff]
        %v2631 = vld [vmem:[%s261 + $0x9d0] sm:$0xff]
        %v2632 = vld [vmem:[%s261 + $0x9d8] sm:$0xff]
        %v2633 = vld [vmem:[%s261 + $0x9e0] sm:$0xff]
        %v2634 = vld [vmem:[%s261 + $0x9e8] sm:$0xff]
        %v2635 = vld [vmem:[%s261 + $0x9f0] sm:$0xff]
        %v2636 = vld [vmem:[%s261 + $0x9f8] sm:$0xff]
        %v2637 = vld [vmem:[%s261 + $0xa00] sm:$0xff]
        %v2638 = vld [vmem:[%s261 + $0xa08] sm:$0xff]
        %v2639 = vld [vmem:[%s261 + $0xa10] sm:$0xff]
        %v2640 = vld [vmem:[%s261 + $0xa18] sm:$0xff]
        %v2641 = vld [vmem:[%s261 + $0xa20] sm:$0xff]
        %v2642 = vld [vmem:[%s261 + $0xa28] sm:$0xff]
        %v2643 = vld [vmem:[%s261 + $0xa30] sm:$0xff]
        %v2644 = vld [vmem:[%s261 + $0xa38] sm:$0xff]
        %v2645 = vld [vmem:[%s261 + $0xa40] sm:$0xff]
        %v2646 = vld [vmem:[%s261 + $0xa48] sm:$0xff]
        %v2647 = vld [vmem:[%s261 + $0xa50] sm:$0xff]
        %v2648 = vld [vmem:[%s261 + $0xa58] sm:$0xff]
        %v2649 = vld [vmem:[%s261 + $0xa60] sm:$0xff]
        %v2650 = vld [vmem:[%s261 + $0xa68] sm:$0xff]
        %v2651 = vld [vmem:[%s261 + $0xa70] sm:$0xff]
        %v2652 = vld [vmem:[%s261 + $0xa78] sm:$0xff]
        %v2653 = vld [vmem:[%s261 + $0xa80] sm:$0xff]
        %v2654 = vld [vmem:[%s261 + $0xa88] sm:$0xff]
        %v2655 = vld [vmem:[%s261 + $0xa90] sm:$0xff]
        %v2656 = vld [vmem:[%s261 + $0xa98] sm:$0xff]
        %v2657 = vld [vmem:[%s261 + $0xaa0] sm:$0xff]
        %v2658 = vld [vmem:[%s261 + $0xaa8] sm:$0xff]
        %v2659 = vld [vmem:[%s261 + $0xab0] sm:$0xff]
        %v2660 = vld [vmem:[%s261 + $0xab8] sm:$0xff]
        %v2661 = vld [vmem:[%s261 + $0xac0] sm:$0xff]
        %v2662 = vld [vmem:[%s261 + $0xac8] sm:$0xff]
        %v2663 = vld [vmem:[%s261 + $0xad0] sm:$0xff]
        %v2664 = vld [vmem:[%s261 + $0xad8] sm:$0xff]
        %v2665 = vld [vmem:[%s261 + $0xae0] sm:$0xff]
        %v2666 = vld [vmem:[%s261 + $0xae8] sm:$0xff]
        %v2667 = vld [vmem:[%s261 + $0xaf0] sm:$0xff]
        %v2668 = vld [vmem:[%s261 + $0xaf8] sm:$0xff]
        %v2669 = vld [vmem:[%s261 + $0xb00] sm:$0xff]
        %v2670 = vld [vmem:[%s261 + $0xb08] sm:$0xff]
        %v2671 = vld [vmem:[%s261 + $0xb10] sm:$0xff]
        %v2672 = vld [vmem:[%s261 + $0xb18] sm:$0xff]
        %v2673 = vld [vmem:[%s261 + $0xb20] sm:$0xff]
        %v2674 = vld [vmem:[%s261 + $0xb28] sm:$0xff]
        %v2675 = vld [vmem:[%s261 + $0xb30] sm:$0xff]
        %v2676 = vld [vmem:[%s261 + $0xb38] sm:$0xff]
        %v2677 = vld [vmem:[%s261 + $0xb40] sm:$0xff]
        %v2678 = vld [vmem:[%s261 + $0xb48] sm:$0xff]
        %v2679 = vld [vmem:[%s261 + $0xb50] sm:$0xff]
        %v2680 = vld [vmem:[%s261 + $0xb58] sm:$0xff]
        %v2681 = vld [vmem:[%s261 + $0xb60] sm:$0xff]
        %v2682 = vld [vmem:[%s261 + $0xb68] sm:$0xff]
        %v2683 = vld [vmem:[%s261 + $0xb70] sm:$0xff]
        %v2684 = vld [vmem:[%s261 + $0xb78] sm:$0xff]
        %v2685 = vld [vmem:[%s261 + $0xb80] sm:$0xff]
        %v2686 = vld [vmem:[%s261 + $0xb88] sm:$0xff]
        %v2687 = vld [vmem:[%s261 + $0xb90] sm:$0xff]
        %v2688 = vld [vmem:[%s261 + $0xb98] sm:$0xff]
        %v2689 = vld [vmem:[%s261 + $0xba0] sm:$0xff]
        %v2690 = vld [vmem:[%s261 + $0xba8] sm:$0xff]
        %v2691 = vld [vmem:[%s261 + $0xbb0] sm:$0xff]
        %v2692 = vld [vmem:[%s261 + $0xbb8] sm:$0xff]
        %v2693 = vld [vmem:[%s261 + $0xbc0] sm:$0xff]
        %v2694 = vld [vmem:[%s261 + $0xbc8] sm:$0xff]
        %v2695 = vld [vmem:[%s261 + $0xbd0] sm:$0xff]
        %v2696 = vld [vmem:[%s261 + $0xbd8] sm:$0xff]
        %v2697 = vld [vmem:[%s261 + $0xbe0] sm:$0xff]
        %v2698 = vld [vmem:[%s261 + $0xbe8] sm:$0xff]
        %v2699 = vld [vmem:[%s261 + $0xbf0] sm:$0xff]
        %v2700 = vld [vmem:[%s261 + $0xbf8] sm:$0xff]
        %v2701 = vld [vmem:[%s261 + $0xc00] sm:$0xff]
        %v2702 = vld [vmem:[%s261 + $0xc08] sm:$0xff]
        %v2703 = vld [vmem:[%s261 + $0xc10] sm:$0xff]
        %v2704 = vld [vmem:[%s261 + $0xc18] sm:$0xff]
        %v2705 = vld [vmem:[%s261 + $0xc20] sm:$0xff]
        %v2706 = vld [vmem:[%s261 + $0xc28] sm:$0xff]
        %v2707 = vld [vmem:[%s261 + $0xc30] sm:$0xff]
        %v2708 = vld [vmem:[%s261 + $0xc38] sm:$0xff]
        %v2709 = vld [vmem:[%s261 + $0xc40] sm:$0xff]
        %v2710 = vld [vmem:[%s261 + $0xc48] sm:$0xff]
        %v2711 = vld [vmem:[%s261 + $0xc50] sm:$0xff]
        %v2712 = vld [vmem:[%s261 + $0xc58] sm:$0xff]
        %v2713 = vld [vmem:[%s261 + $0xc60] sm:$0xff]
        %v2714 = vld [vmem:[%s261 + $0xc68] sm:$0xff]
        %v2715 = vld [vmem:[%s261 + $0xc70] sm:$0xff]
        %v2716 = vld [vmem:[%s261 + $0xc78] sm:$0xff]
        %v2717 = vld [vmem:[%s261 + $0xc80] sm:$0xff]
        %v2718 = vld [vmem:[%s261 + $0xc88] sm:$0xff]
        %v2719 = vld [vmem:[%s261 + $0xc90] sm:$0xff]
        %v2720 = vld [vmem:[%s261 + $0xc98] sm:$0xff]
        %v2721 = vld [vmem:[%s261 + $0xca0] sm:$0xff]
        %v2722 = vld [vmem:[%s261 + $0xca8] sm:$0xff]
        %v2723 = vld [vmem:[%s261 + $0xcb0] sm:$0xff]
        %v2724 = vld [vmem:[%s261 + $0xcb8] sm:$0xff]
        %v2725 = vld [vmem:[%s261 + $0xcc0] sm:$0xff]
        %v2726 = vld [vmem:[%s261 + $0xcc8] sm:$0xff]
        %v2727 = vld [vmem:[%s261 + $0xcd0] sm:$0xff]
        %v2728 = vld [vmem:[%s261 + $0xcd8] sm:$0xff]
        %v2729 = vld [vmem:[%s261 + $0xce0] sm:$0xff]
        %v2730 = vld [vmem:[%s261 + $0xce8] sm:$0xff]
        %v2731 = vld [vmem:[%s261 + $0xcf0] sm:$0xff]
        %v2732 = vld [vmem:[%s261 + $0xcf8] sm:$0xff]
        %v2733 = vld [vmem:[%s261 + $0xd00] sm:$0xff]
        %v2734 = vld [vmem:[%s261 + $0xd08] sm:$0xff]
        %v2735 = vld [vmem:[%s261 + $0xd10] sm:$0xff]
        %v2736 = vld [vmem:[%s261 + $0xd18] sm:$0xff]
        %v2737 = vld [vmem:[%s261 + $0xd20] sm:$0xff]
        %v2738 = vld [vmem:[%s261 + $0xd28] sm:$0xff]
        %v2739 = vld [vmem:[%s261 + $0xd30] sm:$0xff]
        %v2740 = vld [vmem:[%s261 + $0xd38] sm:$0xff]
        %v2741 = vld [vmem:[%s261 + $0xd40] sm:$0xff]
        %v2742 = vld [vmem:[%s261 + $0xd48] sm:$0xff]
        %v2743 = vld [vmem:[%s261 + $0xd50] sm:$0xff]
        %v2744 = vld [vmem:[%s261 + $0xd58] sm:$0xff]
        %v2745 = vld [vmem:[%s261 + $0xd60] sm:$0xff]
        %v2746 = vld [vmem:[%s261 + $0xd68] sm:$0xff]
        %v2747 = vld [vmem:[%s261 + $0xd70] sm:$0xff]
        %v2748 = vld [vmem:[%s261 + $0xd78] sm:$0xff]
        %v2749 = vld [vmem:[%s261 + $0xd80] sm:$0xff]
        %v2750 = vld [vmem:[%s261 + $0xd88] sm:$0xff]
        %v2751 = vld [vmem:[%s261 + $0xd90] sm:$0xff]
        %v2752 = vld [vmem:[%s261 + $0xd98] sm:$0xff]
        %v2753 = vld [vmem:[%s261 + $0xda0] sm:$0xff]
        %v2754 = vld [vmem:[%s261 + $0xda8] sm:$0xff]
        %v2755 = vld [vmem:[%s261 + $0xdb0] sm:$0xff]
        %v2756 = vld [vmem:[%s261 + $0xdb8] sm:$0xff]
        %v2757 = vld [vmem:[%s261 + $0xdc0] sm:$0xff]
        %v2758 = vld [vmem:[%s261 + $0xdc8] sm:$0xff]
        %v2759 = vld [vmem:[%s261 + $0xdd0] sm:$0xff]
        %v2760 = vld [vmem:[%s261 + $0xdd8] sm:$0xff]
        %v2761 = vld [vmem:[%s261 + $0xde0] sm:$0xff]
        %v2762 = vld [vmem:[%s261 + $0xde8] sm:$0xff]
        %v2763 = vld [vmem:[%s261 + $0xdf0] sm:$0xff]
        %v2764 = vld [vmem:[%s261 + $0xdf8] sm:$0xff]
        %v2765 = vld [vmem:[%s261 + $0xe00] sm:$0xff]
        %v2766 = vld [vmem:[%s261 + $0xe08] sm:$0xff]
        %v2767 = vld [vmem:[%s261 + $0xe10] sm:$0xff]
        %v2768 = vld [vmem:[%s261 + $0xe18] sm:$0xff]
        %v2769 = vld [vmem:[%s261 + $0xe20] sm:$0xff]
        %v2770 = vld [vmem:[%s261 + $0xe28] sm:$0xff]
        %v2771 = vld [vmem:[%s261 + $0xe30] sm:$0xff]
        %v2772 = vld [vmem:[%s261 + $0xe38] sm:$0xff]
        %v2773 = vld [vmem:[%s261 + $0xe40] sm:$0xff]
        %v2774 = vld [vmem:[%s261 + $0xe48] sm:$0xff]
        %v2775 = vld [vmem:[%s261 + $0xe50] sm:$0xff]
        %v2776 = vld [vmem:[%s261 + $0xe58] sm:$0xff]
        %v2777 = vld [vmem:[%s261 + $0xe60] sm:$0xff]
        %v2778 = vld [vmem:[%s261 + $0xe68] sm:$0xff]
        %v2779 = vld [vmem:[%s261 + $0xe70] sm:$0xff]
        %v2780 = vld [vmem:[%s261 + $0xe78] sm:$0xff]
        %v2781 = vld [vmem:[%s261 + $0xe80] sm:$0xff]
        %v2782 = vld [vmem:[%s261 + $0xe88] sm:$0xff]
        %v2783 = vld [vmem:[%s261 + $0xe90] sm:$0xff]
        %v2784 = vld [vmem:[%s261 + $0xe98] sm:$0xff]
        %v2785 = vld [vmem:[%s261 + $0xea0] sm:$0xff]
        %v2786 = vld [vmem:[%s261 + $0xea8] sm:$0xff]
        %v2787 = vld [vmem:[%s261 + $0xeb0] sm:$0xff]
        %v2788 = vld [vmem:[%s261 + $0xeb8] sm:$0xff]
        %v2789 = vld [vmem:[%s261 + $0xec0] sm:$0xff]
        %v2790 = vld [vmem:[%s261 + $0xec8] sm:$0xff]
        %v2791 = vld [vmem:[%s261 + $0xed0] sm:$0xff]
        %v2792 = vld [vmem:[%s261 + $0xed8] sm:$0xff]
        %v2793 = vld [vmem:[%s261 + $0xee0] sm:$0xff]
        %v2794 = vld [vmem:[%s261 + $0xee8] sm:$0xff]
        %v2795 = vld [vmem:[%s261 + $0xef0] sm:$0xff]
        %v2796 = vld [vmem:[%s261 + $0xef8] sm:$0xff]
        %v2797 = vld [vmem:[%s261 + $0xf00] sm:$0xff]
        %v2798 = vld [vmem:[%s261 + $0xf08] sm:$0xff]
        %v2799 = vld [vmem:[%s261 + $0xf10] sm:$0xff]
        %v2800 = vld [vmem:[%s261 + $0xf18] sm:$0xff]
        %v2801 = vld [vmem:[%s261 + $0xf20] sm:$0xff]
        %v2802 = vld [vmem:[%s261 + $0xf28] sm:$0xff]
        %v2803 = vld [vmem:[%s261 + $0xf30] sm:$0xff]
        %v2804 = vld [vmem:[%s261 + $0xf38] sm:$0xff]
        %v2805 = vld [vmem:[%s261 + $0xf40] sm:$0xff]
        %v2806 = vld [vmem:[%s261 + $0xf48] sm:$0xff]
        %v2807 = vld [vmem:[%s261 + $0xf50] sm:$0xff]
        %v2808 = vld [vmem:[%s261 + $0xf58] sm:$0xff]
        %v2809 = vld [vmem:[%s261 + $0xf60] sm:$0xff]
        %v2810 = vld [vmem:[%s261 + $0xf68] sm:$0xff]
        %v2811 = vld [vmem:[%s261 + $0xf70] sm:$0xff]
        %v2812 = vld [vmem:[%s261 + $0xf78] sm:$0xff]
        %v2813 = vld [vmem:[%s261 + $0xf80] sm:$0xff]
        %v2814 = vld [vmem:[%s261 + $0xf88] sm:$0xff]
        %v2815 = vld [vmem:[%s261 + $0xf90] sm:$0xff]
        %v2816 = vld [vmem:[%s261 + $0xf98] sm:$0xff]
        %v2817 = vld [vmem:[%s261 + $0xfa0] sm:$0xff]
        %v2818 = vld [vmem:[%s261 + $0xfa8] sm:$0xff]
        %v2819 = vld [vmem:[%s261 + $0xfb0] sm:$0xff]
        %v2820 = vld [vmem:[%s261 + $0xfb8] sm:$0xff]
        %v2821 = vld [vmem:[%s261 + $0xfc0] sm:$0xff]
        %v2822 = vld [vmem:[%s261 + $0xfc8] sm:$0xff]
        %v2823 = vld [vmem:[%s261 + $0xfd0] sm:$0xff]
        %v2824 = vld [vmem:[%s261 + $0xfd8] sm:$0xff]
        %v2825 = vld [vmem:[%s261 + $0xfe0] sm:$0xff]
        %v2826 = vld [vmem:[%s261 + $0xfe8] sm:$0xff]
        %v2827 = vld [vmem:[%s261 + $0xff0] sm:$0xff]
        %v2828 = vld [vmem:[%s261 + $0xff8] sm:$0xff]
        %2830 = vset.pattern.permute.xlu0 0
        %2831 = vperm.xlu0 %2830, %v2317
        %v2832 = vpop.permute.xlu0 %2831
        %2835 = vset.pattern.permute.xlu0 0
        %2836 = vperm.xlu0 %2835, %v2318
        %v2837 = vpop.permute.xlu0 %2836
        %2840 = vset.pattern.permute.xlu0 0
        %2841 = vperm.xlu0 %2840, %v2319
        %v2842 = vpop.permute.xlu0 %2841
        %2845 = vset.pattern.permute.xlu0 0
        %2846 = vperm.xlu0 %2845, %v2320
        %v2847 = vpop.permute.xlu0 %2846
        %2850 = vset.pattern.permute.xlu0 0
        %2851 = vperm.xlu0 %2850, %v2321
        %v2852 = vpop.permute.xlu0 %2851
        %2855 = vset.pattern.permute.xlu0 0
        %2856 = vperm.xlu0 %2855, %v2322
        %v2857 = vpop.permute.xlu0 %2856
        %2860 = vset.pattern.permute.xlu0 0
        %2861 = vperm.xlu0 %2860, %v2323
        %v2862 = vpop.permute.xlu0 %2861
        %2865 = vset.pattern.permute.xlu0 0
        %2866 = vperm.xlu0 %2865, %v2324
        %v2867 = vpop.permute.xlu0 %2866
        %2870 = vset.pattern.permute.xlu0 0
        %2871 = vperm.xlu0 %2870, %v2325
        %v2872 = vpop.permute.xlu0 %2871
        %2875 = vset.pattern.permute.xlu0 0
        %2876 = vperm.xlu0 %2875, %v2326
        %v2877 = vpop.permute.xlu0 %2876
        %2880 = vset.pattern.permute.xlu0 0
        %2881 = vperm.xlu0 %2880, %v2327
        %v2882 = vpop.permute.xlu0 %2881
        %2885 = vset.pattern.permute.xlu0 0
        %2886 = vperm.xlu0 %2885, %v2328
        %v2887 = vpop.permute.xlu0 %2886
        %2890 = vset.pattern.permute.xlu0 0
        %2891 = vperm.xlu0 %2890, %v2329
        %v2892 = vpop.permute.xlu0 %2891
        %2895 = vset.pattern.permute.xlu0 0
        %2896 = vperm.xlu0 %2895, %v2330
        %v2897 = vpop.permute.xlu0 %2896
        %2900 = vset.pattern.permute.xlu0 0
        %2901 = vperm.xlu0 %2900, %v2331
        %v2902 = vpop.permute.xlu0 %2901
        %2905 = vset.pattern.permute.xlu0 0
        %2906 = vperm.xlu0 %2905, %v2332
        %v2907 = vpop.permute.xlu0 %2906
        %2910 = vset.pattern.permute.xlu0 0
        %2911 = vperm.xlu0 %2910, %v2333
        %v2912 = vpop.permute.xlu0 %2911
        %2915 = vset.pattern.permute.xlu0 0
        %2916 = vperm.xlu0 %2915, %v2334
        %v2917 = vpop.permute.xlu0 %2916
        %2920 = vset.pattern.permute.xlu0 0
        %2921 = vperm.xlu0 %2920, %v2335
        %v2922 = vpop.permute.xlu0 %2921
        %2925 = vset.pattern.permute.xlu0 0
        %2926 = vperm.xlu0 %2925, %v2336
        %v2927 = vpop.permute.xlu0 %2926
        %2930 = vset.pattern.permute.xlu0 0
        %2931 = vperm.xlu0 %2930, %v2337
        %v2932 = vpop.permute.xlu0 %2931
        %2935 = vset.pattern.permute.xlu0 0
        %2936 = vperm.xlu0 %2935, %v2338
        %v2937 = vpop.permute.xlu0 %2936
        %2940 = vset.pattern.permute.xlu0 0
        %2941 = vperm.xlu0 %2940, %v2339
        %v2942 = vpop.permute.xlu0 %2941
        %2945 = vset.pattern.permute.xlu0 0
        %2946 = vperm.xlu0 %2945, %v2340
        %v2947 = vpop.permute.xlu0 %2946
        %2950 = vset.pattern.permute.xlu0 0
        %2951 = vperm.xlu0 %2950, %v2341
        %v2952 = vpop.permute.xlu0 %2951
        %2955 = vset.pattern.permute.xlu0 0
        %2956 = vperm.xlu0 %2955, %v2342
        %v2957 = vpop.permute.xlu0 %2956
        %2960 = vset.pattern.permute.xlu0 0
        %2961 = vperm.xlu0 %2960, %v2343
        %v2962 = vpop.permute.xlu0 %2961
        %2965 = vset.pattern.permute.xlu0 0
        %2966 = vperm.xlu0 %2965, %v2344
        %v2967 = vpop.permute.xlu0 %2966
        %2970 = vset.pattern.permute.xlu0 0
        %2971 = vperm.xlu0 %2970, %v2345
        %v2972 = vpop.permute.xlu0 %2971
        %2975 = vset.pattern.permute.xlu0 0
        %2976 = vperm.xlu0 %2975, %v2346
        %v2977 = vpop.permute.xlu0 %2976
        %2980 = vset.pattern.permute.xlu0 0
        %2981 = vperm.xlu0 %2980, %v2347
        %v2982 = vpop.permute.xlu0 %2981
        %2985 = vset.pattern.permute.xlu0 0
        %2986 = vperm.xlu0 %2985, %v2348
        %v2987 = vpop.permute.xlu0 %2986
        %2990 = vset.pattern.permute.xlu0 0
        %2991 = vperm.xlu0 %2990, %v2349
        %v2992 = vpop.permute.xlu0 %2991
        %2995 = vset.pattern.permute.xlu0 0
        %2996 = vperm.xlu0 %2995, %v2350
        %v2997 = vpop.permute.xlu0 %2996
        %3000 = vset.pattern.permute.xlu0 0
        %3001 = vperm.xlu0 %3000, %v2351
        %v3002 = vpop.permute.xlu0 %3001
        %3005 = vset.pattern.permute.xlu0 0
        %3006 = vperm.xlu0 %3005, %v2352
        %v3007 = vpop.permute.xlu0 %3006
        %3010 = vset.pattern.permute.xlu0 0
        %3011 = vperm.xlu0 %3010, %v2353
        %v3012 = vpop.permute.xlu0 %3011
        %3015 = vset.pattern.permute.xlu0 0
        %3016 = vperm.xlu0 %3015, %v2354
        %v3017 = vpop.permute.xlu0 %3016
        %3020 = vset.pattern.permute.xlu0 0
        %3021 = vperm.xlu0 %3020, %v2355
        %v3022 = vpop.permute.xlu0 %3021
        %3025 = vset.pattern.permute.xlu0 0
        %3026 = vperm.xlu0 %3025, %v2356
        %v3027 = vpop.permute.xlu0 %3026
        %3030 = vset.pattern.permute.xlu0 0
        %3031 = vperm.xlu0 %3030, %v2357
        %v3032 = vpop.permute.xlu0 %3031
        %3035 = vset.pattern.permute.xlu0 0
        %3036 = vperm.xlu0 %3035, %v2358
        %v3037 = vpop.permute.xlu0 %3036
        %3040 = vset.pattern.permute.xlu0 0
        %3041 = vperm.xlu0 %3040, %v2359
        %v3042 = vpop.permute.xlu0 %3041
        %3045 = vset.pattern.permute.xlu0 0
        %3046 = vperm.xlu0 %3045, %v2360
        %v3047 = vpop.permute.xlu0 %3046
        %3050 = vset.pattern.permute.xlu0 0
        %3051 = vperm.xlu0 %3050, %v2361
        %v3052 = vpop.permute.xlu0 %3051
        %3055 = vset.pattern.permute.xlu0 0
        %3056 = vperm.xlu0 %3055, %v2362
        %v3057 = vpop.permute.xlu0 %3056
        %3060 = vset.pattern.permute.xlu0 0
        %3061 = vperm.xlu0 %3060, %v2363
        %v3062 = vpop.permute.xlu0 %3061
        %3065 = vset.pattern.permute.xlu0 0
        %3066 = vperm.xlu0 %3065, %v2364
        %v3067 = vpop.permute.xlu0 %3066
        %3070 = vset.pattern.permute.xlu0 0
        %3071 = vperm.xlu0 %3070, %v2365
        %v3072 = vpop.permute.xlu0 %3071
        %3075 = vset.pattern.permute.xlu0 0
        %3076 = vperm.xlu0 %3075, %v2366
        %v3077 = vpop.permute.xlu0 %3076
        %3080 = vset.pattern.permute.xlu0 0
        %3081 = vperm.xlu0 %3080, %v2367
        %v3082 = vpop.permute.xlu0 %3081
        %3085 = vset.pattern.permute.xlu0 0
        %3086 = vperm.xlu0 %3085, %v2368
        %v3087 = vpop.permute.xlu0 %3086
        %3090 = vset.pattern.permute.xlu0 0
        %3091 = vperm.xlu0 %3090, %v2369
        %v3092 = vpop.permute.xlu0 %3091
        %3095 = vset.pattern.permute.xlu0 0
        %3096 = vperm.xlu0 %3095, %v2370
        %v3097 = vpop.permute.xlu0 %3096
        %3100 = vset.pattern.permute.xlu0 0
        %3101 = vperm.xlu0 %3100, %v2371
        %v3102 = vpop.permute.xlu0 %3101
        %3105 = vset.pattern.permute.xlu0 0
        %3106 = vperm.xlu0 %3105, %v2372
        %v3107 = vpop.permute.xlu0 %3106
        %3110 = vset.pattern.permute.xlu0 0
        %3111 = vperm.xlu0 %3110, %v2373
        %v3112 = vpop.permute.xlu0 %3111
        %3115 = vset.pattern.permute.xlu0 0
        %3116 = vperm.xlu0 %3115, %v2374
        %v3117 = vpop.permute.xlu0 %3116
        %3120 = vset.pattern.permute.xlu0 0
        %3121 = vperm.xlu0 %3120, %v2375
        %v3122 = vpop.permute.xlu0 %3121
        %3125 = vset.pattern.permute.xlu0 0
        %3126 = vperm.xlu0 %3125, %v2376
        %v3127 = vpop.permute.xlu0 %3126
        %3130 = vset.pattern.permute.xlu0 0
        %3131 = vperm.xlu0 %3130, %v2377
        %v3132 = vpop.permute.xlu0 %3131
        %3135 = vset.pattern.permute.xlu0 0
        %3136 = vperm.xlu0 %3135, %v2378
        %v3137 = vpop.permute.xlu0 %3136
        %3140 = vset.pattern.permute.xlu0 0
        %3141 = vperm.xlu0 %3140, %v2379
        %v3142 = vpop.permute.xlu0 %3141
        %3145 = vset.pattern.permute.xlu0 0
        %3146 = vperm.xlu0 %3145, %v2380
        %v3147 = vpop.permute.xlu0 %3146
        %3150 = vset.pattern.permute.xlu0 0
        %3151 = vperm.xlu0 %3150, %v2381
        %v3152 = vpop.permute.xlu0 %3151
        %3155 = vset.pattern.permute.xlu0 0
        %3156 = vperm.xlu0 %3155, %v2382
        %v3157 = vpop.permute.xlu0 %3156
        %3160 = vset.pattern.permute.xlu0 0
        %3161 = vperm.xlu0 %3160, %v2383
        %v3162 = vpop.permute.xlu0 %3161
        %3165 = vset.pattern.permute.xlu0 0
        %3166 = vperm.xlu0 %3165, %v2384
        %v3167 = vpop.permute.xlu0 %3166
        %3170 = vset.pattern.permute.xlu0 0
        %3171 = vperm.xlu0 %3170, %v2385
        %v3172 = vpop.permute.xlu0 %3171
        %3175 = vset.pattern.permute.xlu0 0
        %3176 = vperm.xlu0 %3175, %v2386
        %v3177 = vpop.permute.xlu0 %3176
        %3180 = vset.pattern.permute.xlu0 0
        %3181 = vperm.xlu0 %3180, %v2387
        %v3182 = vpop.permute.xlu0 %3181
        %3185 = vset.pattern.permute.xlu0 0
        %3186 = vperm.xlu0 %3185, %v2388
        %v3187 = vpop.permute.xlu0 %3186
        %3190 = vset.pattern.permute.xlu0 0
        %3191 = vperm.xlu0 %3190, %v2389
        %v3192 = vpop.permute.xlu0 %3191
        %3195 = vset.pattern.permute.xlu0 0
        %3196 = vperm.xlu0 %3195, %v2390
        %v3197 = vpop.permute.xlu0 %3196
        %3200 = vset.pattern.permute.xlu0 0
        %3201 = vperm.xlu0 %3200, %v2391
        %v3202 = vpop.permute.xlu0 %3201
        %3205 = vset.pattern.permute.xlu0 0
        %3206 = vperm.xlu0 %3205, %v2392
        %v3207 = vpop.permute.xlu0 %3206
        %3210 = vset.pattern.permute.xlu0 0
        %3211 = vperm.xlu0 %3210, %v2393
        %v3212 = vpop.permute.xlu0 %3211
        %3215 = vset.pattern.permute.xlu0 0
        %3216 = vperm.xlu0 %3215, %v2394
        %v3217 = vpop.permute.xlu0 %3216
        %3220 = vset.pattern.permute.xlu0 0
        %3221 = vperm.xlu0 %3220, %v2395
        %v3222 = vpop.permute.xlu0 %3221
        %3225 = vset.pattern.permute.xlu0 0
        %3226 = vperm.xlu0 %3225, %v2396
        %v3227 = vpop.permute.xlu0 %3226
        %3230 = vset.pattern.permute.xlu0 0
        %3231 = vperm.xlu0 %3230, %v2397
        %v3232 = vpop.permute.xlu0 %3231
        %3235 = vset.pattern.permute.xlu0 0
        %3236 = vperm.xlu0 %3235, %v2398
        %v3237 = vpop.permute.xlu0 %3236
        %3240 = vset.pattern.permute.xlu0 0
        %3241 = vperm.xlu0 %3240, %v2399
        %v3242 = vpop.permute.xlu0 %3241
        %3245 = vset.pattern.permute.xlu0 0
        %3246 = vperm.xlu0 %3245, %v2400
        %v3247 = vpop.permute.xlu0 %3246
        %3250 = vset.pattern.permute.xlu0 0
        %3251 = vperm.xlu0 %3250, %v2401
        %v3252 = vpop.permute.xlu0 %3251
        %3255 = vset.pattern.permute.xlu0 0
        %3256 = vperm.xlu0 %3255, %v2402
        %v3257 = vpop.permute.xlu0 %3256
        %3260 = vset.pattern.permute.xlu0 0
        %3261 = vperm.xlu0 %3260, %v2403
        %v3262 = vpop.permute.xlu0 %3261
        %3265 = vset.pattern.permute.xlu0 0
        %3266 = vperm.xlu0 %3265, %v2404
        %v3267 = vpop.permute.xlu0 %3266
        %3270 = vset.pattern.permute.xlu0 0
        %3271 = vperm.xlu0 %3270, %v2405
        %v3272 = vpop.permute.xlu0 %3271
        %3275 = vset.pattern.permute.xlu0 0
        %3276 = vperm.xlu0 %3275, %v2406
        %v3277 = vpop.permute.xlu0 %3276
        %3280 = vset.pattern.permute.xlu0 0
        %3281 = vperm.xlu0 %3280, %v2407
        %v3282 = vpop.permute.xlu0 %3281
        %3285 = vset.pattern.permute.xlu0 0
        %3286 = vperm.xlu0 %3285, %v2408
        %v3287 = vpop.permute.xlu0 %3286
        %3290 = vset.pattern.permute.xlu0 0
        %3291 = vperm.xlu0 %3290, %v2409
        %v3292 = vpop.permute.xlu0 %3291
        %3295 = vset.pattern.permute.xlu0 0
        %3296 = vperm.xlu0 %3295, %v2410
        %v3297 = vpop.permute.xlu0 %3296
        %3300 = vset.pattern.permute.xlu0 0
        %3301 = vperm.xlu0 %3300, %v2411
        %v3302 = vpop.permute.xlu0 %3301
        %3305 = vset.pattern.permute.xlu0 0
        %3306 = vperm.xlu0 %3305, %v2412
        %v3307 = vpop.permute.xlu0 %3306
        %3310 = vset.pattern.permute.xlu0 0
        %3311 = vperm.xlu0 %3310, %v2413
        %v3312 = vpop.permute.xlu0 %3311
        %3315 = vset.pattern.permute.xlu0 0
        %3316 = vperm.xlu0 %3315, %v2414
        %v3317 = vpop.permute.xlu0 %3316
        %3320 = vset.pattern.permute.xlu0 0
        %3321 = vperm.xlu0 %3320, %v2415
        %v3322 = vpop.permute.xlu0 %3321
        %3325 = vset.pattern.permute.xlu0 0
        %3326 = vperm.xlu0 %3325, %v2416
        %v3327 = vpop.permute.xlu0 %3326
        %3330 = vset.pattern.permute.xlu0 0
        %3331 = vperm.xlu0 %3330, %v2417
        %v3332 = vpop.permute.xlu0 %3331
        %3335 = vset.pattern.permute.xlu0 0
        %3336 = vperm.xlu0 %3335, %v2418
        %v3337 = vpop.permute.xlu0 %3336
        %3340 = vset.pattern.permute.xlu0 0
        %3341 = vperm.xlu0 %3340, %v2419
        %v3342 = vpop.permute.xlu0 %3341
        %3345 = vset.pattern.permute.xlu0 0
        %3346 = vperm.xlu0 %3345, %v2420
        %v3347 = vpop.permute.xlu0 %3346
        %3350 = vset.pattern.permute.xlu0 0
        %3351 = vperm.xlu0 %3350, %v2421
        %v3352 = vpop.permute.xlu0 %3351
        %3355 = vset.pattern.permute.xlu0 0
        %3356 = vperm.xlu0 %3355, %v2422
        %v3357 = vpop.permute.xlu0 %3356
        %3360 = vset.pattern.permute.xlu0 0
        %3361 = vperm.xlu0 %3360, %v2423
        %v3362 = vpop.permute.xlu0 %3361
        %3365 = vset.pattern.permute.xlu0 0
        %3366 = vperm.xlu0 %3365, %v2424
        %v3367 = vpop.permute.xlu0 %3366
        %3370 = vset.pattern.permute.xlu0 0
        %3371 = vperm.xlu0 %3370, %v2425
        %v3372 = vpop.permute.xlu0 %3371
        %3375 = vset.pattern.permute.xlu0 0
        %3376 = vperm.xlu0 %3375, %v2426
        %v3377 = vpop.permute.xlu0 %3376
        %3380 = vset.pattern.permute.xlu0 0
        %3381 = vperm.xlu0 %3380, %v2427
        %v3382 = vpop.permute.xlu0 %3381
        %3385 = vset.pattern.permute.xlu0 0
        %3386 = vperm.xlu0 %3385, %v2428
        %v3387 = vpop.permute.xlu0 %3386
        %3390 = vset.pattern.permute.xlu0 0
        %3391 = vperm.xlu0 %3390, %v2429
        %v3392 = vpop.permute.xlu0 %3391
        %3395 = vset.pattern.permute.xlu0 0
        %3396 = vperm.xlu0 %3395, %v2430
        %v3397 = vpop.permute.xlu0 %3396
        %3400 = vset.pattern.permute.xlu0 0
        %3401 = vperm.xlu0 %3400, %v2431
        %v3402 = vpop.permute.xlu0 %3401
        %3405 = vset.pattern.permute.xlu0 0
        %3406 = vperm.xlu0 %3405, %v2432
        %v3407 = vpop.permute.xlu0 %3406
        %3410 = vset.pattern.permute.xlu0 0
        %3411 = vperm.xlu0 %3410, %v2433
        %v3412 = vpop.permute.xlu0 %3411
        %3415 = vset.pattern.permute.xlu0 0
        %3416 = vperm.xlu0 %3415, %v2434
        %v3417 = vpop.permute.xlu0 %3416
        %3420 = vset.pattern.permute.xlu0 0
        %3421 = vperm.xlu0 %3420, %v2435
        %v3422 = vpop.permute.xlu0 %3421
        %3425 = vset.pattern.permute.xlu0 0
        %3426 = vperm.xlu0 %3425, %v2436
        %v3427 = vpop.permute.xlu0 %3426
        %3430 = vset.pattern.permute.xlu0 0
        %3431 = vperm.xlu0 %3430, %v2437
        %v3432 = vpop.permute.xlu0 %3431
        %3435 = vset.pattern.permute.xlu0 0
        %3436 = vperm.xlu0 %3435, %v2438
        %v3437 = vpop.permute.xlu0 %3436
        %3440 = vset.pattern.permute.xlu0 0
        %3441 = vperm.xlu0 %3440, %v2439
        %v3442 = vpop.permute.xlu0 %3441
        %3445 = vset.pattern.permute.xlu0 0
        %3446 = vperm.xlu0 %3445, %v2440
        %v3447 = vpop.permute.xlu0 %3446
        %3450 = vset.pattern.permute.xlu0 0
        %3451 = vperm.xlu0 %3450, %v2441
        %v3452 = vpop.permute.xlu0 %3451
        %3455 = vset.pattern.permute.xlu0 0
        %3456 = vperm.xlu0 %3455, %v2442
        %v3457 = vpop.permute.xlu0 %3456
        %3460 = vset.pattern.permute.xlu0 0
        %3461 = vperm.xlu0 %3460, %v2443
        %v3462 = vpop.permute.xlu0 %3461
        %3465 = vset.pattern.permute.xlu0 0
        %3466 = vperm.xlu0 %3465, %v2444
        %v3467 = vpop.permute.xlu0 %3466
        %3470 = vset.pattern.permute.xlu0 0
        %3471 = vperm.xlu0 %3470, %v2445
        %v3472 = vpop.permute.xlu0 %3471
        %3475 = vset.pattern.permute.xlu0 0
        %3476 = vperm.xlu0 %3475, %v2446
        %v3477 = vpop.permute.xlu0 %3476
        %3480 = vset.pattern.permute.xlu0 0
        %3481 = vperm.xlu0 %3480, %v2447
        %v3482 = vpop.permute.xlu0 %3481
        %3485 = vset.pattern.permute.xlu0 0
        %3486 = vperm.xlu0 %3485, %v2448
        %v3487 = vpop.permute.xlu0 %3486
        %3490 = vset.pattern.permute.xlu0 0
        %3491 = vperm.xlu0 %3490, %v2449
        %v3492 = vpop.permute.xlu0 %3491
        %3495 = vset.pattern.permute.xlu0 0
        %3496 = vperm.xlu0 %3495, %v2450
        %v3497 = vpop.permute.xlu0 %3496
        %3500 = vset.pattern.permute.xlu0 0
        %3501 = vperm.xlu0 %3500, %v2451
        %v3502 = vpop.permute.xlu0 %3501
        %3505 = vset.pattern.permute.xlu0 0
        %3506 = vperm.xlu0 %3505, %v2452
        %v3507 = vpop.permute.xlu0 %3506
        %3510 = vset.pattern.permute.xlu0 0
        %3511 = vperm.xlu0 %3510, %v2453
        %v3512 = vpop.permute.xlu0 %3511
        %3515 = vset.pattern.permute.xlu0 0
        %3516 = vperm.xlu0 %3515, %v2454
        %v3517 = vpop.permute.xlu0 %3516
        %3520 = vset.pattern.permute.xlu0 0
        %3521 = vperm.xlu0 %3520, %v2455
        %v3522 = vpop.permute.xlu0 %3521
        %3525 = vset.pattern.permute.xlu0 0
        %3526 = vperm.xlu0 %3525, %v2456
        %v3527 = vpop.permute.xlu0 %3526
        %3530 = vset.pattern.permute.xlu0 0
        %3531 = vperm.xlu0 %3530, %v2457
        %v3532 = vpop.permute.xlu0 %3531
        %3535 = vset.pattern.permute.xlu0 0
        %3536 = vperm.xlu0 %3535, %v2458
        %v3537 = vpop.permute.xlu0 %3536
        %3540 = vset.pattern.permute.xlu0 0
        %3541 = vperm.xlu0 %3540, %v2459
        %v3542 = vpop.permute.xlu0 %3541
        %3545 = vset.pattern.permute.xlu0 0
        %3546 = vperm.xlu0 %3545, %v2460
        %v3547 = vpop.permute.xlu0 %3546
        %3550 = vset.pattern.permute.xlu0 0
        %3551 = vperm.xlu0 %3550, %v2461
        %v3552 = vpop.permute.xlu0 %3551
        %3555 = vset.pattern.permute.xlu0 0
        %3556 = vperm.xlu0 %3555, %v2462
        %v3557 = vpop.permute.xlu0 %3556
        %3560 = vset.pattern.permute.xlu0 0
        %3561 = vperm.xlu0 %3560, %v2463
        %v3562 = vpop.permute.xlu0 %3561
        %3565 = vset.pattern.permute.xlu0 0
        %3566 = vperm.xlu0 %3565, %v2464
        %v3567 = vpop.permute.xlu0 %3566
        %3570 = vset.pattern.permute.xlu0 0
        %3571 = vperm.xlu0 %3570, %v2465
        %v3572 = vpop.permute.xlu0 %3571
        %3575 = vset.pattern.permute.xlu0 0
        %3576 = vperm.xlu0 %3575, %v2466
        %v3577 = vpop.permute.xlu0 %3576
        %3580 = vset.pattern.permute.xlu0 0
        %3581 = vperm.xlu0 %3580, %v2467
        %v3582 = vpop.permute.xlu0 %3581
        %3585 = vset.pattern.permute.xlu0 0
        %3586 = vperm.xlu0 %3585, %v2468
        %v3587 = vpop.permute.xlu0 %3586
        %3590 = vset.pattern.permute.xlu0 0
        %3591 = vperm.xlu0 %3590, %v2469
        %v3592 = vpop.permute.xlu0 %3591
        %3595 = vset.pattern.permute.xlu0 0
        %3596 = vperm.xlu0 %3595, %v2470
        %v3597 = vpop.permute.xlu0 %3596
        %3600 = vset.pattern.permute.xlu0 0
        %3601 = vperm.xlu0 %3600, %v2471
        %v3602 = vpop.permute.xlu0 %3601
        %3605 = vset.pattern.permute.xlu0 0
        %3606 = vperm.xlu0 %3605, %v2472
        %v3607 = vpop.permute.xlu0 %3606
        %3610 = vset.pattern.permute.xlu0 0
        %3611 = vperm.xlu0 %3610, %v2473
        %v3612 = vpop.permute.xlu0 %3611
        %3615 = vset.pattern.permute.xlu0 0
        %3616 = vperm.xlu0 %3615, %v2474
        %v3617 = vpop.permute.xlu0 %3616
        %3620 = vset.pattern.permute.xlu0 0
        %3621 = vperm.xlu0 %3620, %v2475
        %v3622 = vpop.permute.xlu0 %3621
        %3625 = vset.pattern.permute.xlu0 0
        %3626 = vperm.xlu0 %3625, %v2476
        %v3627 = vpop.permute.xlu0 %3626
        %3630 = vset.pattern.permute.xlu0 0
        %3631 = vperm.xlu0 %3630, %v2477
        %v3632 = vpop.permute.xlu0 %3631
        %3635 = vset.pattern.permute.xlu0 0
        %3636 = vperm.xlu0 %3635, %v2478
        %v3637 = vpop.permute.xlu0 %3636
        %3640 = vset.pattern.permute.xlu0 0
        %3641 = vperm.xlu0 %3640, %v2479
        %v3642 = vpop.permute.xlu0 %3641
        %3645 = vset.pattern.permute.xlu0 0
        %3646 = vperm.xlu0 %3645, %v2480
        %v3647 = vpop.permute.xlu0 %3646
        %3650 = vset.pattern.permute.xlu0 0
        %3651 = vperm.xlu0 %3650, %v2481
        %v3652 = vpop.permute.xlu0 %3651
        %3655 = vset.pattern.permute.xlu0 0
        %3656 = vperm.xlu0 %3655, %v2482
        %v3657 = vpop.permute.xlu0 %3656
        %3660 = vset.pattern.permute.xlu0 0
        %3661 = vperm.xlu0 %3660, %v2483
        %v3662 = vpop.permute.xlu0 %3661
        %3665 = vset.pattern.permute.xlu0 0
        %3666 = vperm.xlu0 %3665, %v2484
        %v3667 = vpop.permute.xlu0 %3666
        %3670 = vset.pattern.permute.xlu0 0
        %3671 = vperm.xlu0 %3670, %v2485
        %v3672 = vpop.permute.xlu0 %3671
        %3675 = vset.pattern.permute.xlu0 0
        %3676 = vperm.xlu0 %3675, %v2486
        %v3677 = vpop.permute.xlu0 %3676
        %3680 = vset.pattern.permute.xlu0 0
        %3681 = vperm.xlu0 %3680, %v2487
        %v3682 = vpop.permute.xlu0 %3681
        %3685 = vset.pattern.permute.xlu0 0
        %3686 = vperm.xlu0 %3685, %v2488
        %v3687 = vpop.permute.xlu0 %3686
        %3690 = vset.pattern.permute.xlu0 0
        %3691 = vperm.xlu0 %3690, %v2489
        %v3692 = vpop.permute.xlu0 %3691
        %3695 = vset.pattern.permute.xlu0 0
        %3696 = vperm.xlu0 %3695, %v2490
        %v3697 = vpop.permute.xlu0 %3696
        %3700 = vset.pattern.permute.xlu0 0
        %3701 = vperm.xlu0 %3700, %v2491
        %v3702 = vpop.permute.xlu0 %3701
        %3705 = vset.pattern.permute.xlu0 0
        %3706 = vperm.xlu0 %3705, %v2492
        %v3707 = vpop.permute.xlu0 %3706
        %3710 = vset.pattern.permute.xlu0 0
        %3711 = vperm.xlu0 %3710, %v2493
        %v3712 = vpop.permute.xlu0 %3711
        %3715 = vset.pattern.permute.xlu0 0
        %3716 = vperm.xlu0 %3715, %v2494
        %v3717 = vpop.permute.xlu0 %3716
        %3720 = vset.pattern.permute.xlu0 0
        %3721 = vperm.xlu0 %3720, %v2495
        %v3722 = vpop.permute.xlu0 %3721
        %3725 = vset.pattern.permute.xlu0 0
        %3726 = vperm.xlu0 %3725, %v2496
        %v3727 = vpop.permute.xlu0 %3726
        %3730 = vset.pattern.permute.xlu0 0
        %3731 = vperm.xlu0 %3730, %v2497
        %v3732 = vpop.permute.xlu0 %3731
        %3735 = vset.pattern.permute.xlu0 0
        %3736 = vperm.xlu0 %3735, %v2498
        %v3737 = vpop.permute.xlu0 %3736
        %3740 = vset.pattern.permute.xlu0 0
        %3741 = vperm.xlu0 %3740, %v2499
        %v3742 = vpop.permute.xlu0 %3741
        %3745 = vset.pattern.permute.xlu0 0
        %3746 = vperm.xlu0 %3745, %v2500
        %v3747 = vpop.permute.xlu0 %3746
        %3750 = vset.pattern.permute.xlu0 0
        %3751 = vperm.xlu0 %3750, %v2501
        %v3752 = vpop.permute.xlu0 %3751
        %3755 = vset.pattern.permute.xlu0 0
        %3756 = vperm.xlu0 %3755, %v2502
        %v3757 = vpop.permute.xlu0 %3756
        %3760 = vset.pattern.permute.xlu0 0
        %3761 = vperm.xlu0 %3760, %v2503
        %v3762 = vpop.permute.xlu0 %3761
        %3765 = vset.pattern.permute.xlu0 0
        %3766 = vperm.xlu0 %3765, %v2504
        %v3767 = vpop.permute.xlu0 %3766
        %3770 = vset.pattern.permute.xlu0 0
        %3771 = vperm.xlu0 %3770, %v2505
        %v3772 = vpop.permute.xlu0 %3771
        %3775 = vset.pattern.permute.xlu0 0
        %3776 = vperm.xlu0 %3775, %v2506
        %v3777 = vpop.permute.xlu0 %3776
        %3780 = vset.pattern.permute.xlu0 0
        %3781 = vperm.xlu0 %3780, %v2507
        %v3782 = vpop.permute.xlu0 %3781
        %3785 = vset.pattern.permute.xlu0 0
        %3786 = vperm.xlu0 %3785, %v2508
        %v3787 = vpop.permute.xlu0 %3786
        %3790 = vset.pattern.permute.xlu0 0
        %3791 = vperm.xlu0 %3790, %v2509
        %v3792 = vpop.permute.xlu0 %3791
        %3795 = vset.pattern.permute.xlu0 0
        %3796 = vperm.xlu0 %3795, %v2510
        %v3797 = vpop.permute.xlu0 %3796
        %3800 = vset.pattern.permute.xlu0 0
        %3801 = vperm.xlu0 %3800, %v2511
        %v3802 = vpop.permute.xlu0 %3801
        %3805 = vset.pattern.permute.xlu0 0
        %3806 = vperm.xlu0 %3805, %v2512
        %v3807 = vpop.permute.xlu0 %3806
        %3810 = vset.pattern.permute.xlu0 0
        %3811 = vperm.xlu0 %3810, %v2513
        %v3812 = vpop.permute.xlu0 %3811
        %3815 = vset.pattern.permute.xlu0 0
        %3816 = vperm.xlu0 %3815, %v2514
        %v3817 = vpop.permute.xlu0 %3816
        %3820 = vset.pattern.permute.xlu0 0
        %3821 = vperm.xlu0 %3820, %v2515
        %v3822 = vpop.permute.xlu0 %3821
        %3825 = vset.pattern.permute.xlu0 0
        %3826 = vperm.xlu0 %3825, %v2516
        %v3827 = vpop.permute.xlu0 %3826
        %3830 = vset.pattern.permute.xlu0 0
        %3831 = vperm.xlu0 %3830, %v2517
        %v3832 = vpop.permute.xlu0 %3831
        %3835 = vset.pattern.permute.xlu0 0
        %3836 = vperm.xlu0 %3835, %v2518
        %v3837 = vpop.permute.xlu0 %3836
        %3840 = vset.pattern.permute.xlu0 0
        %3841 = vperm.xlu0 %3840, %v2519
        %v3842 = vpop.permute.xlu0 %3841
        %3845 = vset.pattern.permute.xlu0 0
        %3846 = vperm.xlu0 %3845, %v2520
        %v3847 = vpop.permute.xlu0 %3846
        %3850 = vset.pattern.permute.xlu0 0
        %3851 = vperm.xlu0 %3850, %v2521
        %v3852 = vpop.permute.xlu0 %3851
        %3855 = vset.pattern.permute.xlu0 0
        %3856 = vperm.xlu0 %3855, %v2522
        %v3857 = vpop.permute.xlu0 %3856
        %3860 = vset.pattern.permute.xlu0 0
        %3861 = vperm.xlu0 %3860, %v2523
        %v3862 = vpop.permute.xlu0 %3861
        %3865 = vset.pattern.permute.xlu0 0
        %3866 = vperm.xlu0 %3865, %v2524
        %v3867 = vpop.permute.xlu0 %3866
        %3870 = vset.pattern.permute.xlu0 0
        %3871 = vperm.xlu0 %3870, %v2525
        %v3872 = vpop.permute.xlu0 %3871
        %3875 = vset.pattern.permute.xlu0 0
        %3876 = vperm.xlu0 %3875, %v2526
        %v3877 = vpop.permute.xlu0 %3876
        %3880 = vset.pattern.permute.xlu0 0
        %3881 = vperm.xlu0 %3880, %v2527
        %v3882 = vpop.permute.xlu0 %3881
        %3885 = vset.pattern.permute.xlu0 0
        %3886 = vperm.xlu0 %3885, %v2528
        %v3887 = vpop.permute.xlu0 %3886
        %3890 = vset.pattern.permute.xlu0 0
        %3891 = vperm.xlu0 %3890, %v2529
        %v3892 = vpop.permute.xlu0 %3891
        %3895 = vset.pattern.permute.xlu0 0
        %3896 = vperm.xlu0 %3895, %v2530
        %v3897 = vpop.permute.xlu0 %3896
        %3900 = vset.pattern.permute.xlu0 0
        %3901 = vperm.xlu0 %3900, %v2531
        %v3902 = vpop.permute.xlu0 %3901
        %3905 = vset.pattern.permute.xlu0 0
        %3906 = vperm.xlu0 %3905, %v2532
        %v3907 = vpop.permute.xlu0 %3906
        %3910 = vset.pattern.permute.xlu0 0
        %3911 = vperm.xlu0 %3910, %v2533
        %v3912 = vpop.permute.xlu0 %3911
        %3915 = vset.pattern.permute.xlu0 0
        %3916 = vperm.xlu0 %3915, %v2534
        %v3917 = vpop.permute.xlu0 %3916
        %3920 = vset.pattern.permute.xlu0 0
        %3921 = vperm.xlu0 %3920, %v2535
        %v3922 = vpop.permute.xlu0 %3921
        %3925 = vset.pattern.permute.xlu0 0
        %3926 = vperm.xlu0 %3925, %v2536
        %v3927 = vpop.permute.xlu0 %3926
        %3930 = vset.pattern.permute.xlu0 0
        %3931 = vperm.xlu0 %3930, %v2537
        %v3932 = vpop.permute.xlu0 %3931
        %3935 = vset.pattern.permute.xlu0 0
        %3936 = vperm.xlu0 %3935, %v2538
        %v3937 = vpop.permute.xlu0 %3936
        %3940 = vset.pattern.permute.xlu0 0
        %3941 = vperm.xlu0 %3940, %v2539
        %v3942 = vpop.permute.xlu0 %3941
        %3945 = vset.pattern.permute.xlu0 0
        %3946 = vperm.xlu0 %3945, %v2540
        %v3947 = vpop.permute.xlu0 %3946
        %3950 = vset.pattern.permute.xlu0 0
        %3951 = vperm.xlu0 %3950, %v2541
        %v3952 = vpop.permute.xlu0 %3951
        %3955 = vset.pattern.permute.xlu0 0
        %3956 = vperm.xlu0 %3955, %v2542
        %v3957 = vpop.permute.xlu0 %3956
        %3960 = vset.pattern.permute.xlu0 0
        %3961 = vperm.xlu0 %3960, %v2543
        %v3962 = vpop.permute.xlu0 %3961
        %3965 = vset.pattern.permute.xlu0 0
        %3966 = vperm.xlu0 %3965, %v2544
        %v3967 = vpop.permute.xlu0 %3966
        %3970 = vset.pattern.permute.xlu0 0
        %3971 = vperm.xlu0 %3970, %v2545
        %v3972 = vpop.permute.xlu0 %3971
        %3975 = vset.pattern.permute.xlu0 0
        %3976 = vperm.xlu0 %3975, %v2546
        %v3977 = vpop.permute.xlu0 %3976
        %3980 = vset.pattern.permute.xlu0 0
        %3981 = vperm.xlu0 %3980, %v2547
        %v3982 = vpop.permute.xlu0 %3981
        %3985 = vset.pattern.permute.xlu0 0
        %3986 = vperm.xlu0 %3985, %v2548
        %v3987 = vpop.permute.xlu0 %3986
        %3990 = vset.pattern.permute.xlu0 0
        %3991 = vperm.xlu0 %3990, %v2549
        %v3992 = vpop.permute.xlu0 %3991
        %3995 = vset.pattern.permute.xlu0 0
        %3996 = vperm.xlu0 %3995, %v2550
        %v3997 = vpop.permute.xlu0 %3996
        %4000 = vset.pattern.permute.xlu0 0
        %4001 = vperm.xlu0 %4000, %v2551
        %v4002 = vpop.permute.xlu0 %4001
        %4005 = vset.pattern.permute.xlu0 0
        %4006 = vperm.xlu0 %4005, %v2552
        %v4007 = vpop.permute.xlu0 %4006
        %4010 = vset.pattern.permute.xlu0 0
        %4011 = vperm.xlu0 %4010, %v2553
        %v4012 = vpop.permute.xlu0 %4011
        %4015 = vset.pattern.permute.xlu0 0
        %4016 = vperm.xlu0 %4015, %v2554
        %v4017 = vpop.permute.xlu0 %4016
        %4020 = vset.pattern.permute.xlu0 0
        %4021 = vperm.xlu0 %4020, %v2555
        %v4022 = vpop.permute.xlu0 %4021
        %4025 = vset.pattern.permute.xlu0 0
        %4026 = vperm.xlu0 %4025, %v2556
        %v4027 = vpop.permute.xlu0 %4026
        %4030 = vset.pattern.permute.xlu0 0
        %4031 = vperm.xlu0 %4030, %v2557
        %v4032 = vpop.permute.xlu0 %4031
        %4035 = vset.pattern.permute.xlu0 0
        %4036 = vperm.xlu0 %4035, %v2558
        %v4037 = vpop.permute.xlu0 %4036
        %4040 = vset.pattern.permute.xlu0 0
        %4041 = vperm.xlu0 %4040, %v2559
        %v4042 = vpop.permute.xlu0 %4041
        %4045 = vset.pattern.permute.xlu0 0
        %4046 = vperm.xlu0 %4045, %v2560
        %v4047 = vpop.permute.xlu0 %4046
        %4050 = vset.pattern.permute.xlu0 0
        %4051 = vperm.xlu0 %4050, %v2561
        %v4052 = vpop.permute.xlu0 %4051
        %4055 = vset.pattern.permute.xlu0 0
        %4056 = vperm.xlu0 %4055, %v2562
        %v4057 = vpop.permute.xlu0 %4056
        %4060 = vset.pattern.permute.xlu0 0
        %4061 = vperm.xlu0 %4060, %v2563
        %v4062 = vpop.permute.xlu0 %4061
        %4065 = vset.pattern.permute.xlu0 0
        %4066 = vperm.xlu0 %4065, %v2564
        %v4067 = vpop.permute.xlu0 %4066
        %4070 = vset.pattern.permute.xlu0 0
        %4071 = vperm.xlu0 %4070, %v2565
        %v4072 = vpop.permute.xlu0 %4071
        %4075 = vset.pattern.permute.xlu0 0
        %4076 = vperm.xlu0 %4075, %v2566
        %v4077 = vpop.permute.xlu0 %4076
        %4080 = vset.pattern.permute.xlu0 0
        %4081 = vperm.xlu0 %4080, %v2567
        %v4082 = vpop.permute.xlu0 %4081
        %4085 = vset.pattern.permute.xlu0 0
        %4086 = vperm.xlu0 %4085, %v2568
        %v4087 = vpop.permute.xlu0 %4086
        %4090 = vset.pattern.permute.xlu0 0
        %4091 = vperm.xlu0 %4090, %v2569
        %v4092 = vpop.permute.xlu0 %4091
        %4095 = vset.pattern.permute.xlu0 0
        %4096 = vperm.xlu0 %4095, %v2570
        %v4097 = vpop.permute.xlu0 %4096
        %4100 = vset.pattern.permute.xlu0 0
        %4101 = vperm.xlu0 %4100, %v2571
        %v4102 = vpop.permute.xlu0 %4101
        %4105 = vset.pattern.permute.xlu0 0
        %4106 = vperm.xlu0 %4105, %v2572
        %v4107 = vpop.permute.xlu0 %4106
        %4110 = vset.pattern.permute.xlu0 0
        %4111 = vperm.xlu0 %4110, %v2573
        %v4112 = vpop.permute.xlu0 %4111
        %4115 = vset.pattern.permute.xlu0 0
        %4116 = vperm.xlu0 %4115, %v2574
        %v4117 = vpop.permute.xlu0 %4116
        %4120 = vset.pattern.permute.xlu0 0
        %4121 = vperm.xlu0 %4120, %v2575
        %v4122 = vpop.permute.xlu0 %4121
        %4125 = vset.pattern.permute.xlu0 0
        %4126 = vperm.xlu0 %4125, %v2576
        %v4127 = vpop.permute.xlu0 %4126
        %4130 = vset.pattern.permute.xlu0 0
        %4131 = vperm.xlu0 %4130, %v2577
        %v4132 = vpop.permute.xlu0 %4131
        %4135 = vset.pattern.permute.xlu0 0
        %4136 = vperm.xlu0 %4135, %v2578
        %v4137 = vpop.permute.xlu0 %4136
        %4140 = vset.pattern.permute.xlu0 0
        %4141 = vperm.xlu0 %4140, %v2579
        %v4142 = vpop.permute.xlu0 %4141
        %4145 = vset.pattern.permute.xlu0 0
        %4146 = vperm.xlu0 %4145, %v2580
        %v4147 = vpop.permute.xlu0 %4146
        %4150 = vset.pattern.permute.xlu0 0
        %4151 = vperm.xlu0 %4150, %v2581
        %v4152 = vpop.permute.xlu0 %4151
        %4155 = vset.pattern.permute.xlu0 0
        %4156 = vperm.xlu0 %4155, %v2582
        %v4157 = vpop.permute.xlu0 %4156
        %4160 = vset.pattern.permute.xlu0 0
        %4161 = vperm.xlu0 %4160, %v2583
        %v4162 = vpop.permute.xlu0 %4161
        %4165 = vset.pattern.permute.xlu0 0
        %4166 = vperm.xlu0 %4165, %v2584
        %v4167 = vpop.permute.xlu0 %4166
        %4170 = vset.pattern.permute.xlu0 0
        %4171 = vperm.xlu0 %4170, %v2585
        %v4172 = vpop.permute.xlu0 %4171
        %4175 = vset.pattern.permute.xlu0 0
        %4176 = vperm.xlu0 %4175, %v2586
        %v4177 = vpop.permute.xlu0 %4176
        %4180 = vset.pattern.permute.xlu0 0
        %4181 = vperm.xlu0 %4180, %v2587
        %v4182 = vpop.permute.xlu0 %4181
        %4185 = vset.pattern.permute.xlu0 0
        %4186 = vperm.xlu0 %4185, %v2588
        %v4187 = vpop.permute.xlu0 %4186
        %4190 = vset.pattern.permute.xlu0 0
        %4191 = vperm.xlu0 %4190, %v2589
        %v4192 = vpop.permute.xlu0 %4191
        %4195 = vset.pattern.permute.xlu0 0
        %4196 = vperm.xlu0 %4195, %v2590
        %v4197 = vpop.permute.xlu0 %4196
        %4200 = vset.pattern.permute.xlu0 0
        %4201 = vperm.xlu0 %4200, %v2591
        %v4202 = vpop.permute.xlu0 %4201
        %4205 = vset.pattern.permute.xlu0 0
        %4206 = vperm.xlu0 %4205, %v2592
        %v4207 = vpop.permute.xlu0 %4206
        %4210 = vset.pattern.permute.xlu0 0
        %4211 = vperm.xlu0 %4210, %v2593
        %v4212 = vpop.permute.xlu0 %4211
        %4215 = vset.pattern.permute.xlu0 0
        %4216 = vperm.xlu0 %4215, %v2594
        %v4217 = vpop.permute.xlu0 %4216
        %4220 = vset.pattern.permute.xlu0 0
        %4221 = vperm.xlu0 %4220, %v2595
        %v4222 = vpop.permute.xlu0 %4221
        %4225 = vset.pattern.permute.xlu0 0
        %4226 = vperm.xlu0 %4225, %v2596
        %v4227 = vpop.permute.xlu0 %4226
        %4230 = vset.pattern.permute.xlu0 0
        %4231 = vperm.xlu0 %4230, %v2597
        %v4232 = vpop.permute.xlu0 %4231
        %4235 = vset.pattern.permute.xlu0 0
        %4236 = vperm.xlu0 %4235, %v2598
        %v4237 = vpop.permute.xlu0 %4236
        %4240 = vset.pattern.permute.xlu0 0
        %4241 = vperm.xlu0 %4240, %v2599
        %v4242 = vpop.permute.xlu0 %4241
        %4245 = vset.pattern.permute.xlu0 0
        %4246 = vperm.xlu0 %4245, %v2600
        %v4247 = vpop.permute.xlu0 %4246
        %4250 = vset.pattern.permute.xlu0 0
        %4251 = vperm.xlu0 %4250, %v2601
        %v4252 = vpop.permute.xlu0 %4251
        %4255 = vset.pattern.permute.xlu0 0
        %4256 = vperm.xlu0 %4255, %v2602
        %v4257 = vpop.permute.xlu0 %4256
        %4260 = vset.pattern.permute.xlu0 0
        %4261 = vperm.xlu0 %4260, %v2603
        %v4262 = vpop.permute.xlu0 %4261
        %4265 = vset.pattern.permute.xlu0 0
        %4266 = vperm.xlu0 %4265, %v2604
        %v4267 = vpop.permute.xlu0 %4266
        %4270 = vset.pattern.permute.xlu0 0
        %4271 = vperm.xlu0 %4270, %v2605
        %v4272 = vpop.permute.xlu0 %4271
        %4275 = vset.pattern.permute.xlu0 0
        %4276 = vperm.xlu0 %4275, %v2606
        %v4277 = vpop.permute.xlu0 %4276
        %4280 = vset.pattern.permute.xlu0 0
        %4281 = vperm.xlu0 %4280, %v2607
        %v4282 = vpop.permute.xlu0 %4281
        %4285 = vset.pattern.permute.xlu0 0
        %4286 = vperm.xlu0 %4285, %v2608
        %v4287 = vpop.permute.xlu0 %4286
        %4290 = vset.pattern.permute.xlu0 0
        %4291 = vperm.xlu0 %4290, %v2609
        %v4292 = vpop.permute.xlu0 %4291
        %4295 = vset.pattern.permute.xlu0 0
        %4296 = vperm.xlu0 %4295, %v2610
        %v4297 = vpop.permute.xlu0 %4296
        %4300 = vset.pattern.permute.xlu0 0
        %4301 = vperm.xlu0 %4300, %v2611
        %v4302 = vpop.permute.xlu0 %4301
        %4305 = vset.pattern.permute.xlu0 0
        %4306 = vperm.xlu0 %4305, %v2612
        %v4307 = vpop.permute.xlu0 %4306
        %4310 = vset.pattern.permute.xlu0 0
        %4311 = vperm.xlu0 %4310, %v2613
        %v4312 = vpop.permute.xlu0 %4311
        %4315 = vset.pattern.permute.xlu0 0
        %4316 = vperm.xlu0 %4315, %v2614
        %v4317 = vpop.permute.xlu0 %4316
        %4320 = vset.pattern.permute.xlu0 0
        %4321 = vperm.xlu0 %4320, %v2615
        %v4322 = vpop.permute.xlu0 %4321
        %4325 = vset.pattern.permute.xlu0 0
        %4326 = vperm.xlu0 %4325, %v2616
        %v4327 = vpop.permute.xlu0 %4326
        %4330 = vset.pattern.permute.xlu0 0
        %4331 = vperm.xlu0 %4330, %v2617
        %v4332 = vpop.permute.xlu0 %4331
        %4335 = vset.pattern.permute.xlu0 0
        %4336 = vperm.xlu0 %4335, %v2618
        %v4337 = vpop.permute.xlu0 %4336
        %4340 = vset.pattern.permute.xlu0 0
        %4341 = vperm.xlu0 %4340, %v2619
        %v4342 = vpop.permute.xlu0 %4341
        %4345 = vset.pattern.permute.xlu0 0
        %4346 = vperm.xlu0 %4345, %v2620
        %v4347 = vpop.permute.xlu0 %4346
        %4350 = vset.pattern.permute.xlu0 0
        %4351 = vperm.xlu0 %4350, %v2621
        %v4352 = vpop.permute.xlu0 %4351
        %4355 = vset.pattern.permute.xlu0 0
        %4356 = vperm.xlu0 %4355, %v2622
        %v4357 = vpop.permute.xlu0 %4356
        %4360 = vset.pattern.permute.xlu0 0
        %4361 = vperm.xlu0 %4360, %v2623
        %v4362 = vpop.permute.xlu0 %4361
        %4365 = vset.pattern.permute.xlu0 0
        %4366 = vperm.xlu0 %4365, %v2624
        %v4367 = vpop.permute.xlu0 %4366
        %4370 = vset.pattern.permute.xlu0 0
        %4371 = vperm.xlu0 %4370, %v2625
        %v4372 = vpop.permute.xlu0 %4371
        %4375 = vset.pattern.permute.xlu0 0
        %4376 = vperm.xlu0 %4375, %v2626
        %v4377 = vpop.permute.xlu0 %4376
        %4380 = vset.pattern.permute.xlu0 0
        %4381 = vperm.xlu0 %4380, %v2627
        %v4382 = vpop.permute.xlu0 %4381
        %4385 = vset.pattern.permute.xlu0 0
        %4386 = vperm.xlu0 %4385, %v2628
        %v4387 = vpop.permute.xlu0 %4386
        %4390 = vset.pattern.permute.xlu0 0
        %4391 = vperm.xlu0 %4390, %v2629
        %v4392 = vpop.permute.xlu0 %4391
        %4395 = vset.pattern.permute.xlu0 0
        %4396 = vperm.xlu0 %4395, %v2630
        %v4397 = vpop.permute.xlu0 %4396
        %4400 = vset.pattern.permute.xlu0 0
        %4401 = vperm.xlu0 %4400, %v2631
        %v4402 = vpop.permute.xlu0 %4401
        %4405 = vset.pattern.permute.xlu0 0
        %4406 = vperm.xlu0 %4405, %v2632
        %v4407 = vpop.permute.xlu0 %4406
        %4410 = vset.pattern.permute.xlu0 0
        %4411 = vperm.xlu0 %4410, %v2633
        %v4412 = vpop.permute.xlu0 %4411
        %4415 = vset.pattern.permute.xlu0 0
        %4416 = vperm.xlu0 %4415, %v2634
        %v4417 = vpop.permute.xlu0 %4416
        %4420 = vset.pattern.permute.xlu0 0
        %4421 = vperm.xlu0 %4420, %v2635
        %v4422 = vpop.permute.xlu0 %4421
        %4425 = vset.pattern.permute.xlu0 0
        %4426 = vperm.xlu0 %4425, %v2636
        %v4427 = vpop.permute.xlu0 %4426
        %4430 = vset.pattern.permute.xlu0 0
        %4431 = vperm.xlu0 %4430, %v2637
        %v4432 = vpop.permute.xlu0 %4431
        %4435 = vset.pattern.permute.xlu0 0
        %4436 = vperm.xlu0 %4435, %v2638
        %v4437 = vpop.permute.xlu0 %4436
        %4440 = vset.pattern.permute.xlu0 0
        %4441 = vperm.xlu0 %4440, %v2639
        %v4442 = vpop.permute.xlu0 %4441
        %4445 = vset.pattern.permute.xlu0 0
        %4446 = vperm.xlu0 %4445, %v2640
        %v4447 = vpop.permute.xlu0 %4446
        %4450 = vset.pattern.permute.xlu0 0
        %4451 = vperm.xlu0 %4450, %v2641
        %v4452 = vpop.permute.xlu0 %4451
        %4455 = vset.pattern.permute.xlu0 0
        %4456 = vperm.xlu0 %4455, %v2642
        %v4457 = vpop.permute.xlu0 %4456
        %4460 = vset.pattern.permute.xlu0 0
        %4461 = vperm.xlu0 %4460, %v2643
        %v4462 = vpop.permute.xlu0 %4461
        %4465 = vset.pattern.permute.xlu0 0
        %4466 = vperm.xlu0 %4465, %v2644
        %v4467 = vpop.permute.xlu0 %4466
        %4470 = vset.pattern.permute.xlu0 0
        %4471 = vperm.xlu0 %4470, %v2645
        %v4472 = vpop.permute.xlu0 %4471
        %4475 = vset.pattern.permute.xlu0 0
        %4476 = vperm.xlu0 %4475, %v2646
        %v4477 = vpop.permute.xlu0 %4476
        %4480 = vset.pattern.permute.xlu0 0
        %4481 = vperm.xlu0 %4480, %v2647
        %v4482 = vpop.permute.xlu0 %4481
        %4485 = vset.pattern.permute.xlu0 0
        %4486 = vperm.xlu0 %4485, %v2648
        %v4487 = vpop.permute.xlu0 %4486
        %4490 = vset.pattern.permute.xlu0 0
        %4491 = vperm.xlu0 %4490, %v2649
        %v4492 = vpop.permute.xlu0 %4491
        %4495 = vset.pattern.permute.xlu0 0
        %4496 = vperm.xlu0 %4495, %v2650
        %v4497 = vpop.permute.xlu0 %4496
        %4500 = vset.pattern.permute.xlu0 0
        %4501 = vperm.xlu0 %4500, %v2651
        %v4502 = vpop.permute.xlu0 %4501
        %4505 = vset.pattern.permute.xlu0 0
        %4506 = vperm.xlu0 %4505, %v2652
        %v4507 = vpop.permute.xlu0 %4506
        %4510 = vset.pattern.permute.xlu0 0
        %4511 = vperm.xlu0 %4510, %v2653
        %v4512 = vpop.permute.xlu0 %4511
        %4515 = vset.pattern.permute.xlu0 0
        %4516 = vperm.xlu0 %4515, %v2654
        %v4517 = vpop.permute.xlu0 %4516
        %4520 = vset.pattern.permute.xlu0 0
        %4521 = vperm.xlu0 %4520, %v2655
        %v4522 = vpop.permute.xlu0 %4521
        %4525 = vset.pattern.permute.xlu0 0
        %4526 = vperm.xlu0 %4525, %v2656
        %v4527 = vpop.permute.xlu0 %4526
        %4530 = vset.pattern.permute.xlu0 0
        %4531 = vperm.xlu0 %4530, %v2657
        %v4532 = vpop.permute.xlu0 %4531
        %4535 = vset.pattern.permute.xlu0 0
        %4536 = vperm.xlu0 %4535, %v2658
        %v4537 = vpop.permute.xlu0 %4536
        %4540 = vset.pattern.permute.xlu0 0
        %4541 = vperm.xlu0 %4540, %v2659
        %v4542 = vpop.permute.xlu0 %4541
        %4545 = vset.pattern.permute.xlu0 0
        %4546 = vperm.xlu0 %4545, %v2660
        %v4547 = vpop.permute.xlu0 %4546
        %4550 = vset.pattern.permute.xlu0 0
        %4551 = vperm.xlu0 %4550, %v2661
        %v4552 = vpop.permute.xlu0 %4551
        %4555 = vset.pattern.permute.xlu0 0
        %4556 = vperm.xlu0 %4555, %v2662
        %v4557 = vpop.permute.xlu0 %4556
        %4560 = vset.pattern.permute.xlu0 0
        %4561 = vperm.xlu0 %4560, %v2663
        %v4562 = vpop.permute.xlu0 %4561
        %4565 = vset.pattern.permute.xlu0 0
        %4566 = vperm.xlu0 %4565, %v2664
        %v4567 = vpop.permute.xlu0 %4566
        %4570 = vset.pattern.permute.xlu0 0
        %4571 = vperm.xlu0 %4570, %v2665
        %v4572 = vpop.permute.xlu0 %4571
        %4575 = vset.pattern.permute.xlu0 0
        %4576 = vperm.xlu0 %4575, %v2666
        %v4577 = vpop.permute.xlu0 %4576
        %4580 = vset.pattern.permute.xlu0 0
        %4581 = vperm.xlu0 %4580, %v2667
        %v4582 = vpop.permute.xlu0 %4581
        %4585 = vset.pattern.permute.xlu0 0
        %4586 = vperm.xlu0 %4585, %v2668
        %v4587 = vpop.permute.xlu0 %4586
        %4590 = vset.pattern.permute.xlu0 0
        %4591 = vperm.xlu0 %4590, %v2669
        %v4592 = vpop.permute.xlu0 %4591
        %4595 = vset.pattern.permute.xlu0 0
        %4596 = vperm.xlu0 %4595, %v2670
        %v4597 = vpop.permute.xlu0 %4596
        %4600 = vset.pattern.permute.xlu0 0
        %4601 = vperm.xlu0 %4600, %v2671
        %v4602 = vpop.permute.xlu0 %4601
        %4605 = vset.pattern.permute.xlu0 0
        %4606 = vperm.xlu0 %4605, %v2672
        %v4607 = vpop.permute.xlu0 %4606
        %4610 = vset.pattern.permute.xlu0 0
        %4611 = vperm.xlu0 %4610, %v2673
        %v4612 = vpop.permute.xlu0 %4611
        %4615 = vset.pattern.permute.xlu0 0
        %4616 = vperm.xlu0 %4615, %v2674
        %v4617 = vpop.permute.xlu0 %4616
        %4620 = vset.pattern.permute.xlu0 0
        %4621 = vperm.xlu0 %4620, %v2675
        %v4622 = vpop.permute.xlu0 %4621
        %4625 = vset.pattern.permute.xlu0 0
        %4626 = vperm.xlu0 %4625, %v2676
        %v4627 = vpop.permute.xlu0 %4626
        %4630 = vset.pattern.permute.xlu0 0
        %4631 = vperm.xlu0 %4630, %v2677
        %v4632 = vpop.permute.xlu0 %4631
        %4635 = vset.pattern.permute.xlu0 0
        %4636 = vperm.xlu0 %4635, %v2678
        %v4637 = vpop.permute.xlu0 %4636
        %4640 = vset.pattern.permute.xlu0 0
        %4641 = vperm.xlu0 %4640, %v2679
        %v4642 = vpop.permute.xlu0 %4641
        %4645 = vset.pattern.permute.xlu0 0
        %4646 = vperm.xlu0 %4645, %v2680
        %v4647 = vpop.permute.xlu0 %4646
        %4650 = vset.pattern.permute.xlu0 0
        %4651 = vperm.xlu0 %4650, %v2681
        %v4652 = vpop.permute.xlu0 %4651
        %4655 = vset.pattern.permute.xlu0 0
        %4656 = vperm.xlu0 %4655, %v2682
        %v4657 = vpop.permute.xlu0 %4656
        %4660 = vset.pattern.permute.xlu0 0
        %4661 = vperm.xlu0 %4660, %v2683
        %v4662 = vpop.permute.xlu0 %4661
        %4665 = vset.pattern.permute.xlu0 0
        %4666 = vperm.xlu0 %4665, %v2684
        %v4667 = vpop.permute.xlu0 %4666
        %4670 = vset.pattern.permute.xlu0 0
        %4671 = vperm.xlu0 %4670, %v2685
        %v4672 = vpop.permute.xlu0 %4671
        %4675 = vset.pattern.permute.xlu0 0
        %4676 = vperm.xlu0 %4675, %v2686
        %v4677 = vpop.permute.xlu0 %4676
        %4680 = vset.pattern.permute.xlu0 0
        %4681 = vperm.xlu0 %4680, %v2687
        %v4682 = vpop.permute.xlu0 %4681
        %4685 = vset.pattern.permute.xlu0 0
        %4686 = vperm.xlu0 %4685, %v2688
        %v4687 = vpop.permute.xlu0 %4686
        %4690 = vset.pattern.permute.xlu0 0
        %4691 = vperm.xlu0 %4690, %v2689
        %v4692 = vpop.permute.xlu0 %4691
        %4695 = vset.pattern.permute.xlu0 0
        %4696 = vperm.xlu0 %4695, %v2690
        %v4697 = vpop.permute.xlu0 %4696
        %4700 = vset.pattern.permute.xlu0 0
        %4701 = vperm.xlu0 %4700, %v2691
        %v4702 = vpop.permute.xlu0 %4701
        %4705 = vset.pattern.permute.xlu0 0
        %4706 = vperm.xlu0 %4705, %v2692
        %v4707 = vpop.permute.xlu0 %4706
        %4710 = vset.pattern.permute.xlu0 0
        %4711 = vperm.xlu0 %4710, %v2693
        %v4712 = vpop.permute.xlu0 %4711
        %4715 = vset.pattern.permute.xlu0 0
        %4716 = vperm.xlu0 %4715, %v2694
        %v4717 = vpop.permute.xlu0 %4716
        %4720 = vset.pattern.permute.xlu0 0
        %4721 = vperm.xlu0 %4720, %v2695
        %v4722 = vpop.permute.xlu0 %4721
        %4725 = vset.pattern.permute.xlu0 0
        %4726 = vperm.xlu0 %4725, %v2696
        %v4727 = vpop.permute.xlu0 %4726
        %4730 = vset.pattern.permute.xlu0 0
        %4731 = vperm.xlu0 %4730, %v2697
        %v4732 = vpop.permute.xlu0 %4731
        %4735 = vset.pattern.permute.xlu0 0
        %4736 = vperm.xlu0 %4735, %v2698
        %v4737 = vpop.permute.xlu0 %4736
        %4740 = vset.pattern.permute.xlu0 0
        %4741 = vperm.xlu0 %4740, %v2699
        %v4742 = vpop.permute.xlu0 %4741
        %4745 = vset.pattern.permute.xlu0 0
        %4746 = vperm.xlu0 %4745, %v2700
        %v4747 = vpop.permute.xlu0 %4746
        %4750 = vset.pattern.permute.xlu0 0
        %4751 = vperm.xlu0 %4750, %v2701
        %v4752 = vpop.permute.xlu0 %4751
        %4755 = vset.pattern.permute.xlu0 0
        %4756 = vperm.xlu0 %4755, %v2702
        %v4757 = vpop.permute.xlu0 %4756
        %4760 = vset.pattern.permute.xlu0 0
        %4761 = vperm.xlu0 %4760, %v2703
        %v4762 = vpop.permute.xlu0 %4761
        %4765 = vset.pattern.permute.xlu0 0
        %4766 = vperm.xlu0 %4765, %v2704
        %v4767 = vpop.permute.xlu0 %4766
        %4770 = vset.pattern.permute.xlu0 0
        %4771 = vperm.xlu0 %4770, %v2705
        %v4772 = vpop.permute.xlu0 %4771
        %4775 = vset.pattern.permute.xlu0 0
        %4776 = vperm.xlu0 %4775, %v2706
        %v4777 = vpop.permute.xlu0 %4776
        %4780 = vset.pattern.permute.xlu0 0
        %4781 = vperm.xlu0 %4780, %v2707
        %v4782 = vpop.permute.xlu0 %4781
        %4785 = vset.pattern.permute.xlu0 0
        %4786 = vperm.xlu0 %4785, %v2708
        %v4787 = vpop.permute.xlu0 %4786
        %4790 = vset.pattern.permute.xlu0 0
        %4791 = vperm.xlu0 %4790, %v2709
        %v4792 = vpop.permute.xlu0 %4791
        %4795 = vset.pattern.permute.xlu0 0
        %4796 = vperm.xlu0 %4795, %v2710
        %v4797 = vpop.permute.xlu0 %4796
        %4800 = vset.pattern.permute.xlu0 0
        %4801 = vperm.xlu0 %4800, %v2711
        %v4802 = vpop.permute.xlu0 %4801
        %4805 = vset.pattern.permute.xlu0 0
        %4806 = vperm.xlu0 %4805, %v2712
        %v4807 = vpop.permute.xlu0 %4806
        %4810 = vset.pattern.permute.xlu0 0
        %4811 = vperm.xlu0 %4810, %v2713
        %v4812 = vpop.permute.xlu0 %4811
        %4815 = vset.pattern.permute.xlu0 0
        %4816 = vperm.xlu0 %4815, %v2714
        %v4817 = vpop.permute.xlu0 %4816
        %4820 = vset.pattern.permute.xlu0 0
        %4821 = vperm.xlu0 %4820, %v2715
        %v4822 = vpop.permute.xlu0 %4821
        %4825 = vset.pattern.permute.xlu0 0
        %4826 = vperm.xlu0 %4825, %v2716
        %v4827 = vpop.permute.xlu0 %4826
        %4830 = vset.pattern.permute.xlu0 0
        %4831 = vperm.xlu0 %4830, %v2717
        %v4832 = vpop.permute.xlu0 %4831
        %4835 = vset.pattern.permute.xlu0 0
        %4836 = vperm.xlu0 %4835, %v2718
        %v4837 = vpop.permute.xlu0 %4836
        %4840 = vset.pattern.permute.xlu0 0
        %4841 = vperm.xlu0 %4840, %v2719
        %v4842 = vpop.permute.xlu0 %4841
        %4845 = vset.pattern.permute.xlu0 0
        %4846 = vperm.xlu0 %4845, %v2720
        %v4847 = vpop.permute.xlu0 %4846
        %4850 = vset.pattern.permute.xlu0 0
        %4851 = vperm.xlu0 %4850, %v2721
        %v4852 = vpop.permute.xlu0 %4851
        %4855 = vset.pattern.permute.xlu0 0
        %4856 = vperm.xlu0 %4855, %v2722
        %v4857 = vpop.permute.xlu0 %4856
        %4860 = vset.pattern.permute.xlu0 0
        %4861 = vperm.xlu0 %4860, %v2723
        %v4862 = vpop.permute.xlu0 %4861
        %4865 = vset.pattern.permute.xlu0 0
        %4866 = vperm.xlu0 %4865, %v2724
        %v4867 = vpop.permute.xlu0 %4866
        %4870 = vset.pattern.permute.xlu0 0
        %4871 = vperm.xlu0 %4870, %v2725
        %v4872 = vpop.permute.xlu0 %4871
        %4875 = vset.pattern.permute.xlu0 0
        %4876 = vperm.xlu0 %4875, %v2726
        %v4877 = vpop.permute.xlu0 %4876
        %4880 = vset.pattern.permute.xlu0 0
        %4881 = vperm.xlu0 %4880, %v2727
        %v4882 = vpop.permute.xlu0 %4881
        %4885 = vset.pattern.permute.xlu0 0
        %4886 = vperm.xlu0 %4885, %v2728
        %v4887 = vpop.permute.xlu0 %4886
        %4890 = vset.pattern.permute.xlu0 0
        %4891 = vperm.xlu0 %4890, %v2729
        %v4892 = vpop.permute.xlu0 %4891
        %4895 = vset.pattern.permute.xlu0 0
        %4896 = vperm.xlu0 %4895, %v2730
        %v4897 = vpop.permute.xlu0 %4896
        %4900 = vset.pattern.permute.xlu0 0
        %4901 = vperm.xlu0 %4900, %v2731
        %v4902 = vpop.permute.xlu0 %4901
        %4905 = vset.pattern.permute.xlu0 0
        %4906 = vperm.xlu0 %4905, %v2732
        %v4907 = vpop.permute.xlu0 %4906
        %4910 = vset.pattern.permute.xlu0 0
        %4911 = vperm.xlu0 %4910, %v2733
        %v4912 = vpop.permute.xlu0 %4911
        %4915 = vset.pattern.permute.xlu0 0
        %4916 = vperm.xlu0 %4915, %v2734
        %v4917 = vpop.permute.xlu0 %4916
        %4920 = vset.pattern.permute.xlu0 0
        %4921 = vperm.xlu0 %4920, %v2735
        %v4922 = vpop.permute.xlu0 %4921
        %4925 = vset.pattern.permute.xlu0 0
        %4926 = vperm.xlu0 %4925, %v2736
        %v4927 = vpop.permute.xlu0 %4926
        %4930 = vset.pattern.permute.xlu0 0
        %4931 = vperm.xlu0 %4930, %v2737
        %v4932 = vpop.permute.xlu0 %4931
        %4935 = vset.pattern.permute.xlu0 0
        %4936 = vperm.xlu0 %4935, %v2738
        %v4937 = vpop.permute.xlu0 %4936
        %4940 = vset.pattern.permute.xlu0 0
        %4941 = vperm.xlu0 %4940, %v2739
        %v4942 = vpop.permute.xlu0 %4941
        %4945 = vset.pattern.permute.xlu0 0
        %4946 = vperm.xlu0 %4945, %v2740
        %v4947 = vpop.permute.xlu0 %4946
        %4950 = vset.pattern.permute.xlu0 0
        %4951 = vperm.xlu0 %4950, %v2741
        %v4952 = vpop.permute.xlu0 %4951
        %4955 = vset.pattern.permute.xlu0 0
        %4956 = vperm.xlu0 %4955, %v2742
        %v4957 = vpop.permute.xlu0 %4956
        %4960 = vset.pattern.permute.xlu0 0
        %4961 = vperm.xlu0 %4960, %v2743
        %v4962 = vpop.permute.xlu0 %4961
        %4965 = vset.pattern.permute.xlu0 0
        %4966 = vperm.xlu0 %4965, %v2744
        %v4967 = vpop.permute.xlu0 %4966
        %4970 = vset.pattern.permute.xlu0 0
        %4971 = vperm.xlu0 %4970, %v2745
        %v4972 = vpop.permute.xlu0 %4971
        %4975 = vset.pattern.permute.xlu0 0
        %4976 = vperm.xlu0 %4975, %v2746
        %v4977 = vpop.permute.xlu0 %4976
        %4980 = vset.pattern.permute.xlu0 0
        %4981 = vperm.xlu0 %4980, %v2747
        %v4982 = vpop.permute.xlu0 %4981
        %4985 = vset.pattern.permute.xlu0 0
        %4986 = vperm.xlu0 %4985, %v2748
        %v4987 = vpop.permute.xlu0 %4986
        %4990 = vset.pattern.permute.xlu0 0
        %4991 = vperm.xlu0 %4990, %v2749
        %v4992 = vpop.permute.xlu0 %4991
        %4995 = vset.pattern.permute.xlu0 0
        %4996 = vperm.xlu0 %4995, %v2750
        %v4997 = vpop.permute.xlu0 %4996
        %5000 = vset.pattern.permute.xlu0 0
        %5001 = vperm.xlu0 %5000, %v2751
        %v5002 = vpop.permute.xlu0 %5001
        %5005 = vset.pattern.permute.xlu0 0
        %5006 = vperm.xlu0 %5005, %v2752
        %v5007 = vpop.permute.xlu0 %5006
        %5010 = vset.pattern.permute.xlu0 0
        %5011 = vperm.xlu0 %5010, %v2753
        %v5012 = vpop.permute.xlu0 %5011
        %5015 = vset.pattern.permute.xlu0 0
        %5016 = vperm.xlu0 %5015, %v2754
        %v5017 = vpop.permute.xlu0 %5016
        %5020 = vset.pattern.permute.xlu0 0
        %5021 = vperm.xlu0 %5020, %v2755
        %v5022 = vpop.permute.xlu0 %5021
        %5025 = vset.pattern.permute.xlu0 0
        %5026 = vperm.xlu0 %5025, %v2756
        %v5027 = vpop.permute.xlu0 %5026
        %5030 = vset.pattern.permute.xlu0 0
        %5031 = vperm.xlu0 %5030, %v2757
        %v5032 = vpop.permute.xlu0 %5031
        %5035 = vset.pattern.permute.xlu0 0
        %5036 = vperm.xlu0 %5035, %v2758
        %v5037 = vpop.permute.xlu0 %5036
        %5040 = vset.pattern.permute.xlu0 0
        %5041 = vperm.xlu0 %5040, %v2759
        %v5042 = vpop.permute.xlu0 %5041
        %5045 = vset.pattern.permute.xlu0 0
        %5046 = vperm.xlu0 %5045, %v2760
        %v5047 = vpop.permute.xlu0 %5046
        %5050 = vset.pattern.permute.xlu0 0
        %5051 = vperm.xlu0 %5050, %v2761
        %v5052 = vpop.permute.xlu0 %5051
        %5055 = vset.pattern.permute.xlu0 0
        %5056 = vperm.xlu0 %5055, %v2762
        %v5057 = vpop.permute.xlu0 %5056
        %5060 = vset.pattern.permute.xlu0 0
        %5061 = vperm.xlu0 %5060, %v2763
        %v5062 = vpop.permute.xlu0 %5061
        %5065 = vset.pattern.permute.xlu0 0
        %5066 = vperm.xlu0 %5065, %v2764
        %v5067 = vpop.permute.xlu0 %5066
        %5070 = vset.pattern.permute.xlu0 0
        %5071 = vperm.xlu0 %5070, %v2765
        %v5072 = vpop.permute.xlu0 %5071
        %5075 = vset.pattern.permute.xlu0 0
        %5076 = vperm.xlu0 %5075, %v2766
        %v5077 = vpop.permute.xlu0 %5076
        %5080 = vset.pattern.permute.xlu0 0
        %5081 = vperm.xlu0 %5080, %v2767
        %v5082 = vpop.permute.xlu0 %5081
        %5085 = vset.pattern.permute.xlu0 0
        %5086 = vperm.xlu0 %5085, %v2768
        %v5087 = vpop.permute.xlu0 %5086
        %5090 = vset.pattern.permute.xlu0 0
        %5091 = vperm.xlu0 %5090, %v2769
        %v5092 = vpop.permute.xlu0 %5091
        %5095 = vset.pattern.permute.xlu0 0
        %5096 = vperm.xlu0 %5095, %v2770
        %v5097 = vpop.permute.xlu0 %5096
        %5100 = vset.pattern.permute.xlu0 0
        %5101 = vperm.xlu0 %5100, %v2771
        %v5102 = vpop.permute.xlu0 %5101
        %5105 = vset.pattern.permute.xlu0 0
        %5106 = vperm.xlu0 %5105, %v2772
        %v5107 = vpop.permute.xlu0 %5106
        %5110 = vset.pattern.permute.xlu0 0
        %5111 = vperm.xlu0 %5110, %v2773
        %v5112 = vpop.permute.xlu0 %5111
        %5115 = vset.pattern.permute.xlu0 0
        %5116 = vperm.xlu0 %5115, %v2774
        %v5117 = vpop.permute.xlu0 %5116
        %5120 = vset.pattern.permute.xlu0 0
        %5121 = vperm.xlu0 %5120, %v2775
        %v5122 = vpop.permute.xlu0 %5121
        %5125 = vset.pattern.permute.xlu0 0
        %5126 = vperm.xlu0 %5125, %v2776
        %v5127 = vpop.permute.xlu0 %5126
        %5130 = vset.pattern.permute.xlu0 0
        %5131 = vperm.xlu0 %5130, %v2777
        %v5132 = vpop.permute.xlu0 %5131
        %5135 = vset.pattern.permute.xlu0 0
        %5136 = vperm.xlu0 %5135, %v2778
        %v5137 = vpop.permute.xlu0 %5136
        %5140 = vset.pattern.permute.xlu0 0
        %5141 = vperm.xlu0 %5140, %v2779
        %v5142 = vpop.permute.xlu0 %5141
        %5145 = vset.pattern.permute.xlu0 0
        %5146 = vperm.xlu0 %5145, %v2780
        %v5147 = vpop.permute.xlu0 %5146
        %5150 = vset.pattern.permute.xlu0 0
        %5151 = vperm.xlu0 %5150, %v2781
        %v5152 = vpop.permute.xlu0 %5151
        %5155 = vset.pattern.permute.xlu0 0
        %5156 = vperm.xlu0 %5155, %v2782
        %v5157 = vpop.permute.xlu0 %5156
        %5160 = vset.pattern.permute.xlu0 0
        %5161 = vperm.xlu0 %5160, %v2783
        %v5162 = vpop.permute.xlu0 %5161
        %5165 = vset.pattern.permute.xlu0 0
        %5166 = vperm.xlu0 %5165, %v2784
        %v5167 = vpop.permute.xlu0 %5166
        %5170 = vset.pattern.permute.xlu0 0
        %5171 = vperm.xlu0 %5170, %v2785
        %v5172 = vpop.permute.xlu0 %5171
        %5175 = vset.pattern.permute.xlu0 0
        %5176 = vperm.xlu0 %5175, %v2786
        %v5177 = vpop.permute.xlu0 %5176
        %5180 = vset.pattern.permute.xlu0 0
        %5181 = vperm.xlu0 %5180, %v2787
        %v5182 = vpop.permute.xlu0 %5181
        %5185 = vset.pattern.permute.xlu0 0
        %5186 = vperm.xlu0 %5185, %v2788
        %v5187 = vpop.permute.xlu0 %5186
        %5190 = vset.pattern.permute.xlu0 0
        %5191 = vperm.xlu0 %5190, %v2789
        %v5192 = vpop.permute.xlu0 %5191
        %5195 = vset.pattern.permute.xlu0 0
        %5196 = vperm.xlu0 %5195, %v2790
        %v5197 = vpop.permute.xlu0 %5196
        %5200 = vset.pattern.permute.xlu0 0
        %5201 = vperm.xlu0 %5200, %v2791
        %v5202 = vpop.permute.xlu0 %5201
        %5205 = vset.pattern.permute.xlu0 0
        %5206 = vperm.xlu0 %5205, %v2792
        %v5207 = vpop.permute.xlu0 %5206
        %5210 = vset.pattern.permute.xlu0 0
        %5211 = vperm.xlu0 %5210, %v2793
        %v5212 = vpop.permute.xlu0 %5211
        %5215 = vset.pattern.permute.xlu0 0
        %5216 = vperm.xlu0 %5215, %v2794
        %v5217 = vpop.permute.xlu0 %5216
        %5220 = vset.pattern.permute.xlu0 0
        %5221 = vperm.xlu0 %5220, %v2795
        %v5222 = vpop.permute.xlu0 %5221
        %5225 = vset.pattern.permute.xlu0 0
        %5226 = vperm.xlu0 %5225, %v2796
        %v5227 = vpop.permute.xlu0 %5226
        %5230 = vset.pattern.permute.xlu0 0
        %5231 = vperm.xlu0 %5230, %v2797
        %v5232 = vpop.permute.xlu0 %5231
        %5235 = vset.pattern.permute.xlu0 0
        %5236 = vperm.xlu0 %5235, %v2798
        %v5237 = vpop.permute.xlu0 %5236
        %5240 = vset.pattern.permute.xlu0 0
        %5241 = vperm.xlu0 %5240, %v2799
        %v5242 = vpop.permute.xlu0 %5241
        %5245 = vset.pattern.permute.xlu0 0
        %5246 = vperm.xlu0 %5245, %v2800
        %v5247 = vpop.permute.xlu0 %5246
        %5250 = vset.pattern.permute.xlu0 0
        %5251 = vperm.xlu0 %5250, %v2801
        %v5252 = vpop.permute.xlu0 %5251
        %5255 = vset.pattern.permute.xlu0 0
        %5256 = vperm.xlu0 %5255, %v2802
        %v5257 = vpop.permute.xlu0 %5256
        %5260 = vset.pattern.permute.xlu0 0
        %5261 = vperm.xlu0 %5260, %v2803
        %v5262 = vpop.permute.xlu0 %5261
        %5265 = vset.pattern.permute.xlu0 0
        %5266 = vperm.xlu0 %5265, %v2804
        %v5267 = vpop.permute.xlu0 %5266
        %5270 = vset.pattern.permute.xlu0 0
        %5271 = vperm.xlu0 %5270, %v2805
        %v5272 = vpop.permute.xlu0 %5271
        %5275 = vset.pattern.permute.xlu0 0
        %5276 = vperm.xlu0 %5275, %v2806
        %v5277 = vpop.permute.xlu0 %5276
        %5280 = vset.pattern.permute.xlu0 0
        %5281 = vperm.xlu0 %5280, %v2807
        %v5282 = vpop.permute.xlu0 %5281
        %5285 = vset.pattern.permute.xlu0 0
        %5286 = vperm.xlu0 %5285, %v2808
        %v5287 = vpop.permute.xlu0 %5286
        %5290 = vset.pattern.permute.xlu0 0
        %5291 = vperm.xlu0 %5290, %v2809
        %v5292 = vpop.permute.xlu0 %5291
        %5295 = vset.pattern.permute.xlu0 0
        %5296 = vperm.xlu0 %5295, %v2810
        %v5297 = vpop.permute.xlu0 %5296
        %5300 = vset.pattern.permute.xlu0 0
        %5301 = vperm.xlu0 %5300, %v2811
        %v5302 = vpop.permute.xlu0 %5301
        %5305 = vset.pattern.permute.xlu0 0
        %5306 = vperm.xlu0 %5305, %v2812
        %v5307 = vpop.permute.xlu0 %5306
        %5310 = vset.pattern.permute.xlu0 0
        %5311 = vperm.xlu0 %5310, %v2813
        %v5312 = vpop.permute.xlu0 %5311
        %5315 = vset.pattern.permute.xlu0 0
        %5316 = vperm.xlu0 %5315, %v2814
        %v5317 = vpop.permute.xlu0 %5316
        %5320 = vset.pattern.permute.xlu0 0
        %5321 = vperm.xlu0 %5320, %v2815
        %v5322 = vpop.permute.xlu0 %5321
        %5325 = vset.pattern.permute.xlu0 0
        %5326 = vperm.xlu0 %5325, %v2816
        %v5327 = vpop.permute.xlu0 %5326
        %5330 = vset.pattern.permute.xlu0 0
        %5331 = vperm.xlu0 %5330, %v2817
        %v5332 = vpop.permute.xlu0 %5331
        %5335 = vset.pattern.permute.xlu0 0
        %5336 = vperm.xlu0 %5335, %v2818
        %v5337 = vpop.permute.xlu0 %5336
        %5340 = vset.pattern.permute.xlu0 0
        %5341 = vperm.xlu0 %5340, %v2819
        %v5342 = vpop.permute.xlu0 %5341
        %5345 = vset.pattern.permute.xlu0 0
        %5346 = vperm.xlu0 %5345, %v2820
        %v5347 = vpop.permute.xlu0 %5346
        %5350 = vset.pattern.permute.xlu0 0
        %5351 = vperm.xlu0 %5350, %v2821
        %v5352 = vpop.permute.xlu0 %5351
        %5355 = vset.pattern.permute.xlu0 0
        %5356 = vperm.xlu0 %5355, %v2822
        %v5357 = vpop.permute.xlu0 %5356
        %5360 = vset.pattern.permute.xlu0 0
        %5361 = vperm.xlu0 %5360, %v2823
        %v5362 = vpop.permute.xlu0 %5361
        %5365 = vset.pattern.permute.xlu0 0
        %5366 = vperm.xlu0 %5365, %v2824
        %v5367 = vpop.permute.xlu0 %5366
        %5370 = vset.pattern.permute.xlu0 0
        %5371 = vperm.xlu0 %5370, %v2825
        %v5372 = vpop.permute.xlu0 %5371
        %5375 = vset.pattern.permute.xlu0 0
        %5376 = vperm.xlu0 %5375, %v2826
        %v5377 = vpop.permute.xlu0 %5376
        %5380 = vset.pattern.permute.xlu0 0
        %5381 = vperm.xlu0 %5380, %v2827
        %v5382 = vpop.permute.xlu0 %5381
        %5385 = vset.pattern.permute.xlu0 0
        %5386 = vperm.xlu0 %5385, %v2828
        %v5387 = vpop.permute.xlu0 %5386
        %v5389 = vmul.f32 %v1805, %v2832
        %v5390 = vmul.f32 %v1806, %v2837
        %v5391 = vmul.f32 %v1807, %v2842
        %v5392 = vmul.f32 %v1808, %v2847
        %v5393 = vmul.f32 %v1809, %v2852
        %v5394 = vmul.f32 %v1810, %v2857
        %v5395 = vmul.f32 %v1811, %v2862
        %v5396 = vmul.f32 %v1812, %v2867
        %v5397 = vmul.f32 %v1813, %v2872
        %v5398 = vmul.f32 %v1814, %v2877
        %v5399 = vmul.f32 %v1815, %v2882
        %v5400 = vmul.f32 %v1816, %v2887
        %v5401 = vmul.f32 %v1817, %v2892
        %v5402 = vmul.f32 %v1818, %v2897
        %v5403 = vmul.f32 %v1819, %v2902
        %v5404 = vmul.f32 %v1820, %v2907
        %v5405 = vmul.f32 %v1821, %v2912
        %v5406 = vmul.f32 %v1822, %v2917
        %v5407 = vmul.f32 %v1823, %v2922
        %v5408 = vmul.f32 %v1824, %v2927
        %v5409 = vmul.f32 %v1825, %v2932
        %v5410 = vmul.f32 %v1826, %v2937
        %v5411 = vmul.f32 %v1827, %v2942
        %v5412 = vmul.f32 %v1828, %v2947
        %v5413 = vmul.f32 %v1829, %v2952
        %v5414 = vmul.f32 %v1830, %v2957
        %v5415 = vmul.f32 %v1831, %v2962
        %v5416 = vmul.f32 %v1832, %v2967
        %v5417 = vmul.f32 %v1833, %v2972
        %v5418 = vmul.f32 %v1834, %v2977
        %v5419 = vmul.f32 %v1835, %v2982
        %v5420 = vmul.f32 %v1836, %v2987
        %v5421 = vmul.f32 %v1837, %v2992
        %v5422 = vmul.f32 %v1838, %v2997
        %v5423 = vmul.f32 %v1839, %v3002
        %v5424 = vmul.f32 %v1840, %v3007
        %v5425 = vmul.f32 %v1841, %v3012
        %v5426 = vmul.f32 %v1842, %v3017
        %v5427 = vmul.f32 %v1843, %v3022
        %v5428 = vmul.f32 %v1844, %v3027
        %v5429 = vmul.f32 %v1845, %v3032
        %v5430 = vmul.f32 %v1846, %v3037
        %v5431 = vmul.f32 %v1847, %v3042
        %v5432 = vmul.f32 %v1848, %v3047
        %v5433 = vmul.f32 %v1849, %v3052
        %v5434 = vmul.f32 %v1850, %v3057
        %v5435 = vmul.f32 %v1851, %v3062
        %v5436 = vmul.f32 %v1852, %v3067
        %v5437 = vmul.f32 %v1853, %v3072
        %v5438 = vmul.f32 %v1854, %v3077
        %v5439 = vmul.f32 %v1855, %v3082
        %v5440 = vmul.f32 %v1856, %v3087
        %v5441 = vmul.f32 %v1857, %v3092
        %v5442 = vmul.f32 %v1858, %v3097
        %v5443 = vmul.f32 %v1859, %v3102
        %v5444 = vmul.f32 %v1860, %v3107
        %v5445 = vmul.f32 %v1861, %v3112
        %v5446 = vmul.f32 %v1862, %v3117
        %v5447 = vmul.f32 %v1863, %v3122
        %v5448 = vmul.f32 %v1864, %v3127
        %v5449 = vmul.f32 %v1865, %v3132
        %v5450 = vmul.f32 %v1866, %v3137
        %v5451 = vmul.f32 %v1867, %v3142
        %v5452 = vmul.f32 %v1868, %v3147
        %v5453 = vmul.f32 %v1869, %v3152
        %v5454 = vmul.f32 %v1870, %v3157
        %v5455 = vmul.f32 %v1871, %v3162
        %v5456 = vmul.f32 %v1872, %v3167
        %v5457 = vmul.f32 %v1873, %v3172
        %v5458 = vmul.f32 %v1874, %v3177
        %v5459 = vmul.f32 %v1875, %v3182
        %v5460 = vmul.f32 %v1876, %v3187
        %v5461 = vmul.f32 %v1877, %v3192
        %v5462 = vmul.f32 %v1878, %v3197
        %v5463 = vmul.f32 %v1879, %v3202
        %v5464 = vmul.f32 %v1880, %v3207
        %v5465 = vmul.f32 %v1881, %v3212
        %v5466 = vmul.f32 %v1882, %v3217
        %v5467 = vmul.f32 %v1883, %v3222
        %v5468 = vmul.f32 %v1884, %v3227
        %v5469 = vmul.f32 %v1885, %v3232
        %v5470 = vmul.f32 %v1886, %v3237
        %v5471 = vmul.f32 %v1887, %v3242
        %v5472 = vmul.f32 %v1888, %v3247
        %v5473 = vmul.f32 %v1889, %v3252
        %v5474 = vmul.f32 %v1890, %v3257
        %v5475 = vmul.f32 %v1891, %v3262
        %v5476 = vmul.f32 %v1892, %v3267
        %v5477 = vmul.f32 %v1893, %v3272
        %v5478 = vmul.f32 %v1894, %v3277
        %v5479 = vmul.f32 %v1895, %v3282
        %v5480 = vmul.f32 %v1896, %v3287
        %v5481 = vmul.f32 %v1897, %v3292
        %v5482 = vmul.f32 %v1898, %v3297
        %v5483 = vmul.f32 %v1899, %v3302
        %v5484 = vmul.f32 %v1900, %v3307
        %v5485 = vmul.f32 %v1901, %v3312
        %v5486 = vmul.f32 %v1902, %v3317
        %v5487 = vmul.f32 %v1903, %v3322
        %v5488 = vmul.f32 %v1904, %v3327
        %v5489 = vmul.f32 %v1905, %v3332
        %v5490 = vmul.f32 %v1906, %v3337
        %v5491 = vmul.f32 %v1907, %v3342
        %v5492 = vmul.f32 %v1908, %v3347
        %v5493 = vmul.f32 %v1909, %v3352
        %v5494 = vmul.f32 %v1910, %v3357
        %v5495 = vmul.f32 %v1911, %v3362
        %v5496 = vmul.f32 %v1912, %v3367
        %v5497 = vmul.f32 %v1913, %v3372
        %v5498 = vmul.f32 %v1914, %v3377
        %v5499 = vmul.f32 %v1915, %v3382
        %v5500 = vmul.f32 %v1916, %v3387
        %v5501 = vmul.f32 %v1917, %v3392
        %v5502 = vmul.f32 %v1918, %v3397
        %v5503 = vmul.f32 %v1919, %v3402
        %v5504 = vmul.f32 %v1920, %v3407
        %v5505 = vmul.f32 %v1921, %v3412
        %v5506 = vmul.f32 %v1922, %v3417
        %v5507 = vmul.f32 %v1923, %v3422
        %v5508 = vmul.f32 %v1924, %v3427
        %v5509 = vmul.f32 %v1925, %v3432
        %v5510 = vmul.f32 %v1926, %v3437
        %v5511 = vmul.f32 %v1927, %v3442
        %v5512 = vmul.f32 %v1928, %v3447
        %v5513 = vmul.f32 %v1929, %v3452
        %v5514 = vmul.f32 %v1930, %v3457
        %v5515 = vmul.f32 %v1931, %v3462
        %v5516 = vmul.f32 %v1932, %v3467
        %v5517 = vmul.f32 %v1933, %v3472
        %v5518 = vmul.f32 %v1934, %v3477
        %v5519 = vmul.f32 %v1935, %v3482
        %v5520 = vmul.f32 %v1936, %v3487
        %v5521 = vmul.f32 %v1937, %v3492
        %v5522 = vmul.f32 %v1938, %v3497
        %v5523 = vmul.f32 %v1939, %v3502
        %v5524 = vmul.f32 %v1940, %v3507
        %v5525 = vmul.f32 %v1941, %v3512
        %v5526 = vmul.f32 %v1942, %v3517
        %v5527 = vmul.f32 %v1943, %v3522
        %v5528 = vmul.f32 %v1944, %v3527
        %v5529 = vmul.f32 %v1945, %v3532
        %v5530 = vmul.f32 %v1946, %v3537
        %v5531 = vmul.f32 %v1947, %v3542
        %v5532 = vmul.f32 %v1948, %v3547
        %v5533 = vmul.f32 %v1949, %v3552
        %v5534 = vmul.f32 %v1950, %v3557
        %v5535 = vmul.f32 %v1951, %v3562
        %v5536 = vmul.f32 %v1952, %v3567
        %v5537 = vmul.f32 %v1953, %v3572
        %v5538 = vmul.f32 %v1954, %v3577
        %v5539 = vmul.f32 %v1955, %v3582
        %v5540 = vmul.f32 %v1956, %v3587
        %v5541 = vmul.f32 %v1957, %v3592
        %v5542 = vmul.f32 %v1958, %v3597
        %v5543 = vmul.f32 %v1959, %v3602
        %v5544 = vmul.f32 %v1960, %v3607
        %v5545 = vmul.f32 %v1961, %v3612
        %v5546 = vmul.f32 %v1962, %v3617
        %v5547 = vmul.f32 %v1963, %v3622
        %v5548 = vmul.f32 %v1964, %v3627
        %v5549 = vmul.f32 %v1965, %v3632
        %v5550 = vmul.f32 %v1966, %v3637
        %v5551 = vmul.f32 %v1967, %v3642
        %v5552 = vmul.f32 %v1968, %v3647
        %v5553 = vmul.f32 %v1969, %v3652
        %v5554 = vmul.f32 %v1970, %v3657
        %v5555 = vmul.f32 %v1971, %v3662
        %v5556 = vmul.f32 %v1972, %v3667
        %v5557 = vmul.f32 %v1973, %v3672
        %v5558 = vmul.f32 %v1974, %v3677
        %v5559 = vmul.f32 %v1975, %v3682
        %v5560 = vmul.f32 %v1976, %v3687
        %v5561 = vmul.f32 %v1977, %v3692
        %v5562 = vmul.f32 %v1978, %v3697
        %v5563 = vmul.f32 %v1979, %v3702
        %v5564 = vmul.f32 %v1980, %v3707
        %v5565 = vmul.f32 %v1981, %v3712
        %v5566 = vmul.f32 %v1982, %v3717
        %v5567 = vmul.f32 %v1983, %v3722
        %v5568 = vmul.f32 %v1984, %v3727
        %v5569 = vmul.f32 %v1985, %v3732
        %v5570 = vmul.f32 %v1986, %v3737
        %v5571 = vmul.f32 %v1987, %v3742
        %v5572 = vmul.f32 %v1988, %v3747
        %v5573 = vmul.f32 %v1989, %v3752
        %v5574 = vmul.f32 %v1990, %v3757
        %v5575 = vmul.f32 %v1991, %v3762
        %v5576 = vmul.f32 %v1992, %v3767
        %v5577 = vmul.f32 %v1993, %v3772
        %v5578 = vmul.f32 %v1994, %v3777
        %v5579 = vmul.f32 %v1995, %v3782
        %v5580 = vmul.f32 %v1996, %v3787
        %v5581 = vmul.f32 %v1997, %v3792
        %v5582 = vmul.f32 %v1998, %v3797
        %v5583 = vmul.f32 %v1999, %v3802
        %v5584 = vmul.f32 %v2000, %v3807
        %v5585 = vmul.f32 %v2001, %v3812
        %v5586 = vmul.f32 %v2002, %v3817
        %v5587 = vmul.f32 %v2003, %v3822
        %v5588 = vmul.f32 %v2004, %v3827
        %v5589 = vmul.f32 %v2005, %v3832
        %v5590 = vmul.f32 %v2006, %v3837
        %v5591 = vmul.f32 %v2007, %v3842
        %v5592 = vmul.f32 %v2008, %v3847
        %v5593 = vmul.f32 %v2009, %v3852
        %v5594 = vmul.f32 %v2010, %v3857
        %v5595 = vmul.f32 %v2011, %v3862
        %v5596 = vmul.f32 %v2012, %v3867
        %v5597 = vmul.f32 %v2013, %v3872
        %v5598 = vmul.f32 %v2014, %v3877
        %v5599 = vmul.f32 %v2015, %v3882
        %v5600 = vmul.f32 %v2016, %v3887
        %v5601 = vmul.f32 %v2017, %v3892
        %v5602 = vmul.f32 %v2018, %v3897
        %v5603 = vmul.f32 %v2019, %v3902
        %v5604 = vmul.f32 %v2020, %v3907
        %v5605 = vmul.f32 %v2021, %v3912
        %v5606 = vmul.f32 %v2022, %v3917
        %v5607 = vmul.f32 %v2023, %v3922
        %v5608 = vmul.f32 %v2024, %v3927
        %v5609 = vmul.f32 %v2025, %v3932
        %v5610 = vmul.f32 %v2026, %v3937
        %v5611 = vmul.f32 %v2027, %v3942
        %v5612 = vmul.f32 %v2028, %v3947
        %v5613 = vmul.f32 %v2029, %v3952
        %v5614 = vmul.f32 %v2030, %v3957
        %v5615 = vmul.f32 %v2031, %v3962
        %v5616 = vmul.f32 %v2032, %v3967
        %v5617 = vmul.f32 %v2033, %v3972
        %v5618 = vmul.f32 %v2034, %v3977
        %v5619 = vmul.f32 %v2035, %v3982
        %v5620 = vmul.f32 %v2036, %v3987
        %v5621 = vmul.f32 %v2037, %v3992
        %v5622 = vmul.f32 %v2038, %v3997
        %v5623 = vmul.f32 %v2039, %v4002
        %v5624 = vmul.f32 %v2040, %v4007
        %v5625 = vmul.f32 %v2041, %v4012
        %v5626 = vmul.f32 %v2042, %v4017
        %v5627 = vmul.f32 %v2043, %v4022
        %v5628 = vmul.f32 %v2044, %v4027
        %v5629 = vmul.f32 %v2045, %v4032
        %v5630 = vmul.f32 %v2046, %v4037
        %v5631 = vmul.f32 %v2047, %v4042
        %v5632 = vmul.f32 %v2048, %v4047
        %v5633 = vmul.f32 %v2049, %v4052
        %v5634 = vmul.f32 %v2050, %v4057
        %v5635 = vmul.f32 %v2051, %v4062
        %v5636 = vmul.f32 %v2052, %v4067
        %v5637 = vmul.f32 %v2053, %v4072
        %v5638 = vmul.f32 %v2054, %v4077
        %v5639 = vmul.f32 %v2055, %v4082
        %v5640 = vmul.f32 %v2056, %v4087
        %v5641 = vmul.f32 %v2057, %v4092
        %v5642 = vmul.f32 %v2058, %v4097
        %v5643 = vmul.f32 %v2059, %v4102
        %v5644 = vmul.f32 %v2060, %v4107
        %v5645 = vmul.f32 %v2061, %v4112
        %v5646 = vmul.f32 %v2062, %v4117
        %v5647 = vmul.f32 %v2063, %v4122
        %v5648 = vmul.f32 %v2064, %v4127
        %v5649 = vmul.f32 %v2065, %v4132
        %v5650 = vmul.f32 %v2066, %v4137
        %v5651 = vmul.f32 %v2067, %v4142
        %v5652 = vmul.f32 %v2068, %v4147
        %v5653 = vmul.f32 %v2069, %v4152
        %v5654 = vmul.f32 %v2070, %v4157
        %v5655 = vmul.f32 %v2071, %v4162
        %v5656 = vmul.f32 %v2072, %v4167
        %v5657 = vmul.f32 %v2073, %v4172
        %v5658 = vmul.f32 %v2074, %v4177
        %v5659 = vmul.f32 %v2075, %v4182
        %v5660 = vmul.f32 %v2076, %v4187
        %v5661 = vmul.f32 %v2077, %v4192
        %v5662 = vmul.f32 %v2078, %v4197
        %v5663 = vmul.f32 %v2079, %v4202
        %v5664 = vmul.f32 %v2080, %v4207
        %v5665 = vmul.f32 %v2081, %v4212
        %v5666 = vmul.f32 %v2082, %v4217
        %v5667 = vmul.f32 %v2083, %v4222
        %v5668 = vmul.f32 %v2084, %v4227
        %v5669 = vmul.f32 %v2085, %v4232
        %v5670 = vmul.f32 %v2086, %v4237
        %v5671 = vmul.f32 %v2087, %v4242
        %v5672 = vmul.f32 %v2088, %v4247
        %v5673 = vmul.f32 %v2089, %v4252
        %v5674 = vmul.f32 %v2090, %v4257
        %v5675 = vmul.f32 %v2091, %v4262
        %v5676 = vmul.f32 %v2092, %v4267
        %v5677 = vmul.f32 %v2093, %v4272
        %v5678 = vmul.f32 %v2094, %v4277
        %v5679 = vmul.f32 %v2095, %v4282
        %v5680 = vmul.f32 %v2096, %v4287
        %v5681 = vmul.f32 %v2097, %v4292
        %v5682 = vmul.f32 %v2098, %v4297
        %v5683 = vmul.f32 %v2099, %v4302
        %v5684 = vmul.f32 %v2100, %v4307
        %v5685 = vmul.f32 %v2101, %v4312
        %v5686 = vmul.f32 %v2102, %v4317
        %v5687 = vmul.f32 %v2103, %v4322
        %v5688 = vmul.f32 %v2104, %v4327
        %v5689 = vmul.f32 %v2105, %v4332
        %v5690 = vmul.f32 %v2106, %v4337
        %v5691 = vmul.f32 %v2107, %v4342
        %v5692 = vmul.f32 %v2108, %v4347
        %v5693 = vmul.f32 %v2109, %v4352
        %v5694 = vmul.f32 %v2110, %v4357
        %v5695 = vmul.f32 %v2111, %v4362
        %v5696 = vmul.f32 %v2112, %v4367
        %v5697 = vmul.f32 %v2113, %v4372
        %v5698 = vmul.f32 %v2114, %v4377
        %v5699 = vmul.f32 %v2115, %v4382
        %v5700 = vmul.f32 %v2116, %v4387
        %v5701 = vmul.f32 %v2117, %v4392
        %v5702 = vmul.f32 %v2118, %v4397
        %v5703 = vmul.f32 %v2119, %v4402
        %v5704 = vmul.f32 %v2120, %v4407
        %v5705 = vmul.f32 %v2121, %v4412
        %v5706 = vmul.f32 %v2122, %v4417
        %v5707 = vmul.f32 %v2123, %v4422
        %v5708 = vmul.f32 %v2124, %v4427
        %v5709 = vmul.f32 %v2125, %v4432
        %v5710 = vmul.f32 %v2126, %v4437
        %v5711 = vmul.f32 %v2127, %v4442
        %v5712 = vmul.f32 %v2128, %v4447
        %v5713 = vmul.f32 %v2129, %v4452
        %v5714 = vmul.f32 %v2130, %v4457
        %v5715 = vmul.f32 %v2131, %v4462
        %v5716 = vmul.f32 %v2132, %v4467
        %v5717 = vmul.f32 %v2133, %v4472
        %v5718 = vmul.f32 %v2134, %v4477
        %v5719 = vmul.f32 %v2135, %v4482
        %v5720 = vmul.f32 %v2136, %v4487
        %v5721 = vmul.f32 %v2137, %v4492
        %v5722 = vmul.f32 %v2138, %v4497
        %v5723 = vmul.f32 %v2139, %v4502
        %v5724 = vmul.f32 %v2140, %v4507
        %v5725 = vmul.f32 %v2141, %v4512
        %v5726 = vmul.f32 %v2142, %v4517
        %v5727 = vmul.f32 %v2143, %v4522
        %v5728 = vmul.f32 %v2144, %v4527
        %v5729 = vmul.f32 %v2145, %v4532
        %v5730 = vmul.f32 %v2146, %v4537
        %v5731 = vmul.f32 %v2147, %v4542
        %v5732 = vmul.f32 %v2148, %v4547
        %v5733 = vmul.f32 %v2149, %v4552
        %v5734 = vmul.f32 %v2150, %v4557
        %v5735 = vmul.f32 %v2151, %v4562
        %v5736 = vmul.f32 %v2152, %v4567
        %v5737 = vmul.f32 %v2153, %v4572
        %v5738 = vmul.f32 %v2154, %v4577
        %v5739 = vmul.f32 %v2155, %v4582
        %v5740 = vmul.f32 %v2156, %v4587
        %v5741 = vmul.f32 %v2157, %v4592
        %v5742 = vmul.f32 %v2158, %v4597
        %v5743 = vmul.f32 %v2159, %v4602
        %v5744 = vmul.f32 %v2160, %v4607
        %v5745 = vmul.f32 %v2161, %v4612
        %v5746 = vmul.f32 %v2162, %v4617
        %v5747 = vmul.f32 %v2163, %v4622
        %v5748 = vmul.f32 %v2164, %v4627
        %v5749 = vmul.f32 %v2165, %v4632
        %v5750 = vmul.f32 %v2166, %v4637
        %v5751 = vmul.f32 %v2167, %v4642
        %v5752 = vmul.f32 %v2168, %v4647
        %v5753 = vmul.f32 %v2169, %v4652
        %v5754 = vmul.f32 %v2170, %v4657
        %v5755 = vmul.f32 %v2171, %v4662
        %v5756 = vmul.f32 %v2172, %v4667
        %v5757 = vmul.f32 %v2173, %v4672
        %v5758 = vmul.f32 %v2174, %v4677
        %v5759 = vmul.f32 %v2175, %v4682
        %v5760 = vmul.f32 %v2176, %v4687
        %v5761 = vmul.f32 %v2177, %v4692
        %v5762 = vmul.f32 %v2178, %v4697
        %v5763 = vmul.f32 %v2179, %v4702
        %v5764 = vmul.f32 %v2180, %v4707
        %v5765 = vmul.f32 %v2181, %v4712
        %v5766 = vmul.f32 %v2182, %v4717
        %v5767 = vmul.f32 %v2183, %v4722
        %v5768 = vmul.f32 %v2184, %v4727
        %v5769 = vmul.f32 %v2185, %v4732
        %v5770 = vmul.f32 %v2186, %v4737
        %v5771 = vmul.f32 %v2187, %v4742
        %v5772 = vmul.f32 %v2188, %v4747
        %v5773 = vmul.f32 %v2189, %v4752
        %v5774 = vmul.f32 %v2190, %v4757
        %v5775 = vmul.f32 %v2191, %v4762
        %v5776 = vmul.f32 %v2192, %v4767
        %v5777 = vmul.f32 %v2193, %v4772
        %v5778 = vmul.f32 %v2194, %v4777
        %v5779 = vmul.f32 %v2195, %v4782
        %v5780 = vmul.f32 %v2196, %v4787
        %v5781 = vmul.f32 %v2197, %v4792
        %v5782 = vmul.f32 %v2198, %v4797
        %v5783 = vmul.f32 %v2199, %v4802
        %v5784 = vmul.f32 %v2200, %v4807
        %v5785 = vmul.f32 %v2201, %v4812
        %v5786 = vmul.f32 %v2202, %v4817
        %v5787 = vmul.f32 %v2203, %v4822
        %v5788 = vmul.f32 %v2204, %v4827
        %v5789 = vmul.f32 %v2205, %v4832
        %v5790 = vmul.f32 %v2206, %v4837
        %v5791 = vmul.f32 %v2207, %v4842
        %v5792 = vmul.f32 %v2208, %v4847
        %v5793 = vmul.f32 %v2209, %v4852
        %v5794 = vmul.f32 %v2210, %v4857
        %v5795 = vmul.f32 %v2211, %v4862
        %v5796 = vmul.f32 %v2212, %v4867
        %v5797 = vmul.f32 %v2213, %v4872
        %v5798 = vmul.f32 %v2214, %v4877
        %v5799 = vmul.f32 %v2215, %v4882
        %v5800 = vmul.f32 %v2216, %v4887
        %v5801 = vmul.f32 %v2217, %v4892
        %v5802 = vmul.f32 %v2218, %v4897
        %v5803 = vmul.f32 %v2219, %v4902
        %v5804 = vmul.f32 %v2220, %v4907
        %v5805 = vmul.f32 %v2221, %v4912
        %v5806 = vmul.f32 %v2222, %v4917
        %v5807 = vmul.f32 %v2223, %v4922
        %v5808 = vmul.f32 %v2224, %v4927
        %v5809 = vmul.f32 %v2225, %v4932
        %v5810 = vmul.f32 %v2226, %v4937
        %v5811 = vmul.f32 %v2227, %v4942
        %v5812 = vmul.f32 %v2228, %v4947
        %v5813 = vmul.f32 %v2229, %v4952
        %v5814 = vmul.f32 %v2230, %v4957
        %v5815 = vmul.f32 %v2231, %v4962
        %v5816 = vmul.f32 %v2232, %v4967
        %v5817 = vmul.f32 %v2233, %v4972
        %v5818 = vmul.f32 %v2234, %v4977
        %v5819 = vmul.f32 %v2235, %v4982
        %v5820 = vmul.f32 %v2236, %v4987
        %v5821 = vmul.f32 %v2237, %v4992
        %v5822 = vmul.f32 %v2238, %v4997
        %v5823 = vmul.f32 %v2239, %v5002
        %v5824 = vmul.f32 %v2240, %v5007
        %v5825 = vmul.f32 %v2241, %v5012
        %v5826 = vmul.f32 %v2242, %v5017
        %v5827 = vmul.f32 %v2243, %v5022
        %v5828 = vmul.f32 %v2244, %v5027
        %v5829 = vmul.f32 %v2245, %v5032
        %v5830 = vmul.f32 %v2246, %v5037
        %v5831 = vmul.f32 %v2247, %v5042
        %v5832 = vmul.f32 %v2248, %v5047
        %v5833 = vmul.f32 %v2249, %v5052
        %v5834 = vmul.f32 %v2250, %v5057
        %v5835 = vmul.f32 %v2251, %v5062
        %v5836 = vmul.f32 %v2252, %v5067
        %v5837 = vmul.f32 %v2253, %v5072
        %v5838 = vmul.f32 %v2254, %v5077
        %v5839 = vmul.f32 %v2255, %v5082
        %v5840 = vmul.f32 %v2256, %v5087
        %v5841 = vmul.f32 %v2257, %v5092
        %v5842 = vmul.f32 %v2258, %v5097
        %v5843 = vmul.f32 %v2259, %v5102
        %v5844 = vmul.f32 %v2260, %v5107
        %v5845 = vmul.f32 %v2261, %v5112
        %v5846 = vmul.f32 %v2262, %v5117
        %v5847 = vmul.f32 %v2263, %v5122
        %v5848 = vmul.f32 %v2264, %v5127
        %v5849 = vmul.f32 %v2265, %v5132
        %v5850 = vmul.f32 %v2266, %v5137
        %v5851 = vmul.f32 %v2267, %v5142
        %v5852 = vmul.f32 %v2268, %v5147
        %v5853 = vmul.f32 %v2269, %v5152
        %v5854 = vmul.f32 %v2270, %v5157
        %v5855 = vmul.f32 %v2271, %v5162
        %v5856 = vmul.f32 %v2272, %v5167
        %v5857 = vmul.f32 %v2273, %v5172
        %v5858 = vmul.f32 %v2274, %v5177
        %v5859 = vmul.f32 %v2275, %v5182
        %v5860 = vmul.f32 %v2276, %v5187
        %v5861 = vmul.f32 %v2277, %v5192
        %v5862 = vmul.f32 %v2278, %v5197
        %v5863 = vmul.f32 %v2279, %v5202
        %v5864 = vmul.f32 %v2280, %v5207
        %v5865 = vmul.f32 %v2281, %v5212
        %v5866 = vmul.f32 %v2282, %v5217
        %v5867 = vmul.f32 %v2283, %v5222
        %v5868 = vmul.f32 %v2284, %v5227
        %v5869 = vmul.f32 %v2285, %v5232
        %v5870 = vmul.f32 %v2286, %v5237
        %v5871 = vmul.f32 %v2287, %v5242
        %v5872 = vmul.f32 %v2288, %v5247
        %v5873 = vmul.f32 %v2289, %v5252
        %v5874 = vmul.f32 %v2290, %v5257
        %v5875 = vmul.f32 %v2291, %v5262
        %v5876 = vmul.f32 %v2292, %v5267
        %v5877 = vmul.f32 %v2293, %v5272
        %v5878 = vmul.f32 %v2294, %v5277
        %v5879 = vmul.f32 %v2295, %v5282
        %v5880 = vmul.f32 %v2296, %v5287
        %v5881 = vmul.f32 %v2297, %v5292
        %v5882 = vmul.f32 %v2298, %v5297
        %v5883 = vmul.f32 %v2299, %v5302
        %v5884 = vmul.f32 %v2300, %v5307
        %v5885 = vmul.f32 %v2301, %v5312
        %v5886 = vmul.f32 %v2302, %v5317
        %v5887 = vmul.f32 %v2303, %v5322
        %v5888 = vmul.f32 %v2304, %v5327
        %v5889 = vmul.f32 %v2305, %v5332
        %v5890 = vmul.f32 %v2306, %v5337
        %v5891 = vmul.f32 %v2307, %v5342
        %v5892 = vmul.f32 %v2308, %v5347
        %v5893 = vmul.f32 %v2309, %v5352
        %v5894 = vmul.f32 %v2310, %v5357
        %v5895 = vmul.f32 %v2311, %v5362
        %v5896 = vmul.f32 %v2312, %v5367
        %v5897 = vmul.f32 %v2313, %v5372
        %v5898 = vmul.f32 %v2314, %v5377
        %v5899 = vmul.f32 %v2315, %v5382
        %v5900 = vmul.f32 %v2316, %v5387
        %v5901 = vld [vmem:[%s245] sm:$0xff]
        %v5902 = vadd.f32 %v5389, %v5390
        %v5903 = vadd.f32 %v5902, %v5391
        %v5904 = vadd.f32 %v5903, %v5392
        %v5905 = vadd.f32 %v5904, %v5393
        %v5906 = vadd.f32 %v5905, %v5394
        %v5907 = vadd.f32 %v5906, %v5395
        %v5908 = vadd.f32 %v5907, %v5396
        %v5909 = vadd.f32 %v5908, %v5397
        %v5910 = vadd.f32 %v5909, %v5398
        %v5911 = vadd.f32 %v5910, %v5399
        %v5912 = vadd.f32 %v5911, %v5400
        %v5913 = vadd.f32 %v5912, %v5401
        %v5914 = vadd.f32 %v5913, %v5402
        %v5915 = vadd.f32 %v5914, %v5403
        %v5916 = vadd.f32 %v5915, %v5404
        %v5917 = vadd.f32 %v5916, %v5405
        %v5918 = vadd.f32 %v5917, %v5406
        %v5919 = vadd.f32 %v5918, %v5407
        %v5920 = vadd.f32 %v5919, %v5408
        %v5921 = vadd.f32 %v5920, %v5409
        %v5922 = vadd.f32 %v5921, %v5410
        %v5923 = vadd.f32 %v5922, %v5411
        %v5924 = vadd.f32 %v5923, %v5412
        %v5925 = vadd.f32 %v5924, %v5413
        %v5926 = vadd.f32 %v5925, %v5414
        %v5927 = vadd.f32 %v5926, %v5415
        %v5928 = vadd.f32 %v5927, %v5416
        %v5929 = vadd.f32 %v5928, %v5417
        %v5930 = vadd.f32 %v5929, %v5418
        %v5931 = vadd.f32 %v5930, %v5419
        %v5932 = vadd.f32 %v5931, %v5420
        %v5933 = vadd.f32 %v5932, %v5421
        %v5934 = vadd.f32 %v5933, %v5422
        %v5935 = vadd.f32 %v5934, %v5423
        %v5936 = vadd.f32 %v5935, %v5424
        %v5937 = vadd.f32 %v5936, %v5425
        %v5938 = vadd.f32 %v5937, %v5426
        %v5939 = vadd.f32 %v5938, %v5427
        %v5940 = vadd.f32 %v5939, %v5428
        %v5941 = vadd.f32 %v5940, %v5429
        %v5942 = vadd.f32 %v5941, %v5430
        %v5943 = vadd.f32 %v5942, %v5431
        %v5944 = vadd.f32 %v5943, %v5432
        %v5945 = vadd.f32 %v5944, %v5433
        %v5946 = vadd.f32 %v5945, %v5434
        %v5947 = vadd.f32 %v5946, %v5435
        %v5948 = vadd.f32 %v5947, %v5436
        %v5949 = vadd.f32 %v5948, %v5437
        %v5950 = vadd.f32 %v5949, %v5438
        %v5951 = vadd.f32 %v5950, %v5439
        %v5952 = vadd.f32 %v5951, %v5440
        %v5953 = vadd.f32 %v5952, %v5441
        %v5954 = vadd.f32 %v5953, %v5442
        %v5955 = vadd.f32 %v5954, %v5443
        %v5956 = vadd.f32 %v5955, %v5444
        %v5957 = vadd.f32 %v5956, %v5445
        %v5958 = vadd.f32 %v5957, %v5446
        %v5959 = vadd.f32 %v5958, %v5447
        %v5960 = vadd.f32 %v5959, %v5448
        %v5961 = vadd.f32 %v5960, %v5449
        %v5962 = vadd.f32 %v5961, %v5450
        %v5963 = vadd.f32 %v5962, %v5451
        %v5964 = vadd.f32 %v5963, %v5452
        %v5965 = vadd.f32 %v5964, %v5453
        %v5966 = vadd.f32 %v5965, %v5454
        %v5967 = vadd.f32 %v5966, %v5455
        %v5968 = vadd.f32 %v5967, %v5456
        %v5969 = vadd.f32 %v5968, %v5457
        %v5970 = vadd.f32 %v5969, %v5458
        %v5971 = vadd.f32 %v5970, %v5459
        %v5972 = vadd.f32 %v5971, %v5460
        %v5973 = vadd.f32 %v5972, %v5461
        %v5974 = vadd.f32 %v5973, %v5462
        %v5975 = vadd.f32 %v5974, %v5463
        %v5976 = vadd.f32 %v5975, %v5464
        %v5977 = vadd.f32 %v5976, %v5465
        %v5978 = vadd.f32 %v5977, %v5466
        %v5979 = vadd.f32 %v5978, %v5467
        %v5980 = vadd.f32 %v5979, %v5468
        %v5981 = vadd.f32 %v5980, %v5469
        %v5982 = vadd.f32 %v5981, %v5470
        %v5983 = vadd.f32 %v5982, %v5471
        %v5984 = vadd.f32 %v5983, %v5472
        %v5985 = vadd.f32 %v5984, %v5473
        %v5986 = vadd.f32 %v5985, %v5474
        %v5987 = vadd.f32 %v5986, %v5475
        %v5988 = vadd.f32 %v5987, %v5476
        %v5989 = vadd.f32 %v5988, %v5477
        %v5990 = vadd.f32 %v5989, %v5478
        %v5991 = vadd.f32 %v5990, %v5479
        %v5992 = vadd.f32 %v5991, %v5480
        %v5993 = vadd.f32 %v5992, %v5481
        %v5994 = vadd.f32 %v5993, %v5482
        %v5995 = vadd.f32 %v5994, %v5483
        %v5996 = vadd.f32 %v5995, %v5484
        %v5997 = vadd.f32 %v5996, %v5485
        %v5998 = vadd.f32 %v5997, %v5486
        %v5999 = vadd.f32 %v5998, %v5487
        %v6000 = vadd.f32 %v5999, %v5488
        %v6001 = vadd.f32 %v6000, %v5489
        %v6002 = vadd.f32 %v6001, %v5490
        %v6003 = vadd.f32 %v6002, %v5491
        %v6004 = vadd.f32 %v6003, %v5492
        %v6005 = vadd.f32 %v6004, %v5493
        %v6006 = vadd.f32 %v6005, %v5494
        %v6007 = vadd.f32 %v6006, %v5495
        %v6008 = vadd.f32 %v6007, %v5496
        %v6009 = vadd.f32 %v6008, %v5497
        %v6010 = vadd.f32 %v6009, %v5498
        %v6011 = vadd.f32 %v6010, %v5499
        %v6012 = vadd.f32 %v6011, %v5500
        %v6013 = vadd.f32 %v6012, %v5501
        %v6014 = vadd.f32 %v6013, %v5502
        %v6015 = vadd.f32 %v6014, %v5503
        %v6016 = vadd.f32 %v6015, %v5504
        %v6017 = vadd.f32 %v6016, %v5505
        %v6018 = vadd.f32 %v6017, %v5506
        %v6019 = vadd.f32 %v6018, %v5507
        %v6020 = vadd.f32 %v6019, %v5508
        %v6021 = vadd.f32 %v6020, %v5509
        %v6022 = vadd.f32 %v6021, %v5510
        %v6023 = vadd.f32 %v6022, %v5511
        %v6024 = vadd.f32 %v6023, %v5512
        %v6025 = vadd.f32 %v6024, %v5513
        %v6026 = vadd.f32 %v6025, %v5514
        %v6027 = vadd.f32 %v6026, %v5515
        %v6028 = vadd.f32 %v6027, %v5516
        %v6029 = vadd.f32 %v6028, %v5517
        %v6030 = vadd.f32 %v6029, %v5518
        %v6031 = vadd.f32 %v6030, %v5519
        %v6032 = vadd.f32 %v6031, %v5520
        %v6033 = vadd.f32 %v6032, %v5521
        %v6034 = vadd.f32 %v6033, %v5522
        %v6035 = vadd.f32 %v6034, %v5523
        %v6036 = vadd.f32 %v6035, %v5524
        %v6037 = vadd.f32 %v6036, %v5525
        %v6038 = vadd.f32 %v6037, %v5526
        %v6039 = vadd.f32 %v6038, %v5527
        %v6040 = vadd.f32 %v6039, %v5528
        %v6041 = vadd.f32 %v6040, %v5529
        %v6042 = vadd.f32 %v6041, %v5530
        %v6043 = vadd.f32 %v6042, %v5531
        %v6044 = vadd.f32 %v6043, %v5532
        %v6045 = vadd.f32 %v6044, %v5533
        %v6046 = vadd.f32 %v6045, %v5534
        %v6047 = vadd.f32 %v6046, %v5535
        %v6048 = vadd.f32 %v6047, %v5536
        %v6049 = vadd.f32 %v6048, %v5537
        %v6050 = vadd.f32 %v6049, %v5538
        %v6051 = vadd.f32 %v6050, %v5539
        %v6052 = vadd.f32 %v6051, %v5540
        %v6053 = vadd.f32 %v6052, %v5541
        %v6054 = vadd.f32 %v6053, %v5542
        %v6055 = vadd.f32 %v6054, %v5543
        %v6056 = vadd.f32 %v6055, %v5544
        %v6057 = vadd.f32 %v6056, %v5545
        %v6058 = vadd.f32 %v6057, %v5546
        %v6059 = vadd.f32 %v6058, %v5547
        %v6060 = vadd.f32 %v6059, %v5548
        %v6061 = vadd.f32 %v6060, %v5549
        %v6062 = vadd.f32 %v6061, %v5550
        %v6063 = vadd.f32 %v6062, %v5551
        %v6064 = vadd.f32 %v6063, %v5552
        %v6065 = vadd.f32 %v6064, %v5553
        %v6066 = vadd.f32 %v6065, %v5554
        %v6067 = vadd.f32 %v6066, %v5555
        %v6068 = vadd.f32 %v6067, %v5556
        %v6069 = vadd.f32 %v6068, %v5557
        %v6070 = vadd.f32 %v6069, %v5558
        %v6071 = vadd.f32 %v6070, %v5559
        %v6072 = vadd.f32 %v6071, %v5560
        %v6073 = vadd.f32 %v6072, %v5561
        %v6074 = vadd.f32 %v6073, %v5562
        %v6075 = vadd.f32 %v6074, %v5563
        %v6076 = vadd.f32 %v6075, %v5564
        %v6077 = vadd.f32 %v6076, %v5565
        %v6078 = vadd.f32 %v6077, %v5566
        %v6079 = vadd.f32 %v6078, %v5567
        %v6080 = vadd.f32 %v6079, %v5568
        %v6081 = vadd.f32 %v6080, %v5569
        %v6082 = vadd.f32 %v6081, %v5570
        %v6083 = vadd.f32 %v6082, %v5571
        %v6084 = vadd.f32 %v6083, %v5572
        %v6085 = vadd.f32 %v6084, %v5573
        %v6086 = vadd.f32 %v6085, %v5574
        %v6087 = vadd.f32 %v6086, %v5575
        %v6088 = vadd.f32 %v6087, %v5576
        %v6089 = vadd.f32 %v6088, %v5577
        %v6090 = vadd.f32 %v6089, %v5578
        %v6091 = vadd.f32 %v6090, %v5579
        %v6092 = vadd.f32 %v6091, %v5580
        %v6093 = vadd.f32 %v6092, %v5581
        %v6094 = vadd.f32 %v6093, %v5582
        %v6095 = vadd.f32 %v6094, %v5583
        %v6096 = vadd.f32 %v6095, %v5584
        %v6097 = vadd.f32 %v6096, %v5585
        %v6098 = vadd.f32 %v6097, %v5586
        %v6099 = vadd.f32 %v6098, %v5587
        %v6100 = vadd.f32 %v6099, %v5588
        %v6101 = vadd.f32 %v6100, %v5589
        %v6102 = vadd.f32 %v6101, %v5590
        %v6103 = vadd.f32 %v6102, %v5591
        %v6104 = vadd.f32 %v6103, %v5592
        %v6105 = vadd.f32 %v6104, %v5593
        %v6106 = vadd.f32 %v6105, %v5594
        %v6107 = vadd.f32 %v6106, %v5595
        %v6108 = vadd.f32 %v6107, %v5596
        %v6109 = vadd.f32 %v6108, %v5597
        %v6110 = vadd.f32 %v6109, %v5598
        %v6111 = vadd.f32 %v6110, %v5599
        %v6112 = vadd.f32 %v6111, %v5600
        %v6113 = vadd.f32 %v6112, %v5601
        %v6114 = vadd.f32 %v6113, %v5602
        %v6115 = vadd.f32 %v6114, %v5603
        %v6116 = vadd.f32 %v6115, %v5604
        %v6117 = vadd.f32 %v6116, %v5605
        %v6118 = vadd.f32 %v6117, %v5606
        %v6119 = vadd.f32 %v6118, %v5607
        %v6120 = vadd.f32 %v6119, %v5608
        %v6121 = vadd.f32 %v6120, %v5609
        %v6122 = vadd.f32 %v6121, %v5610
        %v6123 = vadd.f32 %v6122, %v5611
        %v6124 = vadd.f32 %v6123, %v5612
        %v6125 = vadd.f32 %v6124, %v5613
        %v6126 = vadd.f32 %v6125, %v5614
        %v6127 = vadd.f32 %v6126, %v5615
        %v6128 = vadd.f32 %v6127, %v5616
        %v6129 = vadd.f32 %v6128, %v5617
        %v6130 = vadd.f32 %v6129, %v5618
        %v6131 = vadd.f32 %v6130, %v5619
        %v6132 = vadd.f32 %v6131, %v5620
        %v6133 = vadd.f32 %v6132, %v5621
        %v6134 = vadd.f32 %v6133, %v5622
        %v6135 = vadd.f32 %v6134, %v5623
        %v6136 = vadd.f32 %v6135, %v5624
        %v6137 = vadd.f32 %v6136, %v5625
        %v6138 = vadd.f32 %v6137, %v5626
        %v6139 = vadd.f32 %v6138, %v5627
        %v6140 = vadd.f32 %v6139, %v5628
        %v6141 = vadd.f32 %v6140, %v5629
        %v6142 = vadd.f32 %v6141, %v5630
        %v6143 = vadd.f32 %v6142, %v5631
        %v6144 = vadd.f32 %v6143, %v5632
        %v6145 = vadd.f32 %v6144, %v5633
        %v6146 = vadd.f32 %v6145, %v5634
        %v6147 = vadd.f32 %v6146, %v5635
        %v6148 = vadd.f32 %v6147, %v5636
        %v6149 = vadd.f32 %v6148, %v5637
        %v6150 = vadd.f32 %v6149, %v5638
        %v6151 = vadd.f32 %v6150, %v5639
        %v6152 = vadd.f32 %v6151, %v5640
        %v6153 = vadd.f32 %v6152, %v5641
        %v6154 = vadd.f32 %v6153, %v5642
        %v6155 = vadd.f32 %v6154, %v5643
        %v6156 = vadd.f32 %v6155, %v5644
        %v6157 = vadd.f32 %v6156, %v5645
        %v6158 = vadd.f32 %v6157, %v5646
        %v6159 = vadd.f32 %v6158, %v5647
        %v6160 = vadd.f32 %v6159, %v5648
        %v6161 = vadd.f32 %v6160, %v5649
        %v6162 = vadd.f32 %v6161, %v5650
        %v6163 = vadd.f32 %v6162, %v5651
        %v6164 = vadd.f32 %v6163, %v5652
        %v6165 = vadd.f32 %v6164, %v5653
        %v6166 = vadd.f32 %v6165, %v5654
        %v6167 = vadd.f32 %v6166, %v5655
        %v6168 = vadd.f32 %v6167, %v5656
        %v6169 = vadd.f32 %v6168, %v5657
        %v6170 = vadd.f32 %v6169, %v5658
        %v6171 = vadd.f32 %v6170, %v5659
        %v6172 = vadd.f32 %v6171, %v5660
        %v6173 = vadd.f32 %v6172, %v5661
        %v6174 = vadd.f32 %v6173, %v5662
        %v6175 = vadd.f32 %v6174, %v5663
        %v6176 = vadd.f32 %v6175, %v5664
        %v6177 = vadd.f32 %v6176, %v5665
        %v6178 = vadd.f32 %v6177, %v5666
        %v6179 = vadd.f32 %v6178, %v5667
        %v6180 = vadd.f32 %v6179, %v5668
        %v6181 = vadd.f32 %v6180, %v5669
        %v6182 = vadd.f32 %v6181, %v5670
        %v6183 = vadd.f32 %v6182, %v5671
        %v6184 = vadd.f32 %v6183, %v5672
        %v6185 = vadd.f32 %v6184, %v5673
        %v6186 = vadd.f32 %v6185, %v5674
        %v6187 = vadd.f32 %v6186, %v5675
        %v6188 = vadd.f32 %v6187, %v5676
        %v6189 = vadd.f32 %v6188, %v5677
        %v6190 = vadd.f32 %v6189, %v5678
        %v6191 = vadd.f32 %v6190, %v5679
        %v6192 = vadd.f32 %v6191, %v5680
        %v6193 = vadd.f32 %v6192, %v5681
        %v6194 = vadd.f32 %v6193, %v5682
        %v6195 = vadd.f32 %v6194, %v5683
        %v6196 = vadd.f32 %v6195, %v5684
        %v6197 = vadd.f32 %v6196, %v5685
        %v6198 = vadd.f32 %v6197, %v5686
        %v6199 = vadd.f32 %v6198, %v5687
        %v6200 = vadd.f32 %v6199, %v5688
        %v6201 = vadd.f32 %v6200, %v5689
        %v6202 = vadd.f32 %v6201, %v5690
        %v6203 = vadd.f32 %v6202, %v5691
        %v6204 = vadd.f32 %v6203, %v5692
        %v6205 = vadd.f32 %v6204, %v5693
        %v6206 = vadd.f32 %v6205, %v5694
        %v6207 = vadd.f32 %v6206, %v5695
        %v6208 = vadd.f32 %v6207, %v5696
        %v6209 = vadd.f32 %v6208, %v5697
        %v6210 = vadd.f32 %v6209, %v5698
        %v6211 = vadd.f32 %v6210, %v5699
        %v6212 = vadd.f32 %v6211, %v5700
        %v6213 = vadd.f32 %v6212, %v5701
        %v6214 = vadd.f32 %v6213, %v5702
        %v6215 = vadd.f32 %v6214, %v5703
        %v6216 = vadd.f32 %v6215, %v5704
        %v6217 = vadd.f32 %v6216, %v5705
        %v6218 = vadd.f32 %v6217, %v5706
        %v6219 = vadd.f32 %v6218, %v5707
        %v6220 = vadd.f32 %v6219, %v5708
        %v6221 = vadd.f32 %v6220, %v5709
        %v6222 = vadd.f32 %v6221, %v5710
        %v6223 = vadd.f32 %v6222, %v5711
        %v6224 = vadd.f32 %v6223, %v5712
        %v6225 = vadd.f32 %v6224, %v5713
        %v6226 = vadd.f32 %v6225, %v5714
        %v6227 = vadd.f32 %v6226, %v5715
        %v6228 = vadd.f32 %v6227, %v5716
        %v6229 = vadd.f32 %v6228, %v5717
        %v6230 = vadd.f32 %v6229, %v5718
        %v6231 = vadd.f32 %v6230, %v5719
        %v6232 = vadd.f32 %v6231, %v5720
        %v6233 = vadd.f32 %v6232, %v5721
        %v6234 = vadd.f32 %v6233, %v5722
        %v6235 = vadd.f32 %v6234, %v5723
        %v6236 = vadd.f32 %v6235, %v5724
        %v6237 = vadd.f32 %v6236, %v5725
        %v6238 = vadd.f32 %v6237, %v5726
        %v6239 = vadd.f32 %v6238, %v5727
        %v6240 = vadd.f32 %v6239, %v5728
        %v6241 = vadd.f32 %v6240, %v5729
        %v6242 = vadd.f32 %v6241, %v5730
        %v6243 = vadd.f32 %v6242, %v5731
        %v6244 = vadd.f32 %v6243, %v5732
        %v6245 = vadd.f32 %v6244, %v5733
        %v6246 = vadd.f32 %v6245, %v5734
        %v6247 = vadd.f32 %v6246, %v5735
        %v6248 = vadd.f32 %v6247, %v5736
        %v6249 = vadd.f32 %v6248, %v5737
        %v6250 = vadd.f32 %v6249, %v5738
        %v6251 = vadd.f32 %v6250, %v5739
        %v6252 = vadd.f32 %v6251, %v5740
        %v6253 = vadd.f32 %v6252, %v5741
        %v6254 = vadd.f32 %v6253, %v5742
        %v6255 = vadd.f32 %v6254, %v5743
        %v6256 = vadd.f32 %v6255, %v5744
        %v6257 = vadd.f32 %v6256, %v5745
        %v6258 = vadd.f32 %v6257, %v5746
        %v6259 = vadd.f32 %v6258, %v5747
        %v6260 = vadd.f32 %v6259, %v5748
        %v6261 = vadd.f32 %v6260, %v5749
        %v6262 = vadd.f32 %v6261, %v5750
        %v6263 = vadd.f32 %v6262, %v5751
        %v6264 = vadd.f32 %v6263, %v5752
        %v6265 = vadd.f32 %v6264, %v5753
        %v6266 = vadd.f32 %v6265, %v5754
        %v6267 = vadd.f32 %v6266, %v5755
        %v6268 = vadd.f32 %v6267, %v5756
        %v6269 = vadd.f32 %v6268, %v5757
        %v6270 = vadd.f32 %v6269, %v5758
        %v6271 = vadd.f32 %v6270, %v5759
        %v6272 = vadd.f32 %v6271, %v5760
        %v6273 = vadd.f32 %v6272, %v5761
        %v6274 = vadd.f32 %v6273, %v5762
        %v6275 = vadd.f32 %v6274, %v5763
        %v6276 = vadd.f32 %v6275, %v5764
        %v6277 = vadd.f32 %v6276, %v5765
        %v6278 = vadd.f32 %v6277, %v5766
        %v6279 = vadd.f32 %v6278, %v5767
        %v6280 = vadd.f32 %v6279, %v5768
        %v6281 = vadd.f32 %v6280, %v5769
        %v6282 = vadd.f32 %v6281, %v5770
        %v6283 = vadd.f32 %v6282, %v5771
        %v6284 = vadd.f32 %v6283, %v5772
        %v6285 = vadd.f32 %v6284, %v5773
        %v6286 = vadd.f32 %v6285, %v5774
        %v6287 = vadd.f32 %v6286, %v5775
        %v6288 = vadd.f32 %v6287, %v5776
        %v6289 = vadd.f32 %v6288, %v5777
        %v6290 = vadd.f32 %v6289, %v5778
        %v6291 = vadd.f32 %v6290, %v5779
        %v6292 = vadd.f32 %v6291, %v5780
        %v6293 = vadd.f32 %v6292, %v5781
        %v6294 = vadd.f32 %v6293, %v5782
        %v6295 = vadd.f32 %v6294, %v5783
        %v6296 = vadd.f32 %v6295, %v5784
        %v6297 = vadd.f32 %v6296, %v5785
        %v6298 = vadd.f32 %v6297, %v5786
        %v6299 = vadd.f32 %v6298, %v5787
        %v6300 = vadd.f32 %v6299, %v5788
        %v6301 = vadd.f32 %v6300, %v5789
        %v6302 = vadd.f32 %v6301, %v5790
        %v6303 = vadd.f32 %v6302, %v5791
        %v6304 = vadd.f32 %v6303, %v5792
        %v6305 = vadd.f32 %v6304, %v5793
        %v6306 = vadd.f32 %v6305, %v5794
        %v6307 = vadd.f32 %v6306, %v5795
        %v6308 = vadd.f32 %v6307, %v5796
        %v6309 = vadd.f32 %v6308, %v5797
        %v6310 = vadd.f32 %v6309, %v5798
        %v6311 = vadd.f32 %v6310, %v5799
        %v6312 = vadd.f32 %v6311, %v5800
        %v6313 = vadd.f32 %v6312, %v5801
        %v6314 = vadd.f32 %v6313, %v5802
        %v6315 = vadd.f32 %v6314, %v5803
        %v6316 = vadd.f32 %v6315, %v5804
        %v6317 = vadd.f32 %v6316, %v5805
        %v6318 = vadd.f32 %v6317, %v5806
        %v6319 = vadd.f32 %v6318, %v5807
        %v6320 = vadd.f32 %v6319, %v5808
        %v6321 = vadd.f32 %v6320, %v5809
        %v6322 = vadd.f32 %v6321, %v5810
        %v6323 = vadd.f32 %v6322, %v5811
        %v6324 = vadd.f32 %v6323, %v5812
        %v6325 = vadd.f32 %v6324, %v5813
        %v6326 = vadd.f32 %v6325, %v5814
        %v6327 = vadd.f32 %v6326, %v5815
        %v6328 = vadd.f32 %v6327, %v5816
        %v6329 = vadd.f32 %v6328, %v5817
        %v6330 = vadd.f32 %v6329, %v5818
        %v6331 = vadd.f32 %v6330, %v5819
        %v6332 = vadd.f32 %v6331, %v5820
        %v6333 = vadd.f32 %v6332, %v5821
        %v6334 = vadd.f32 %v6333, %v5822
        %v6335 = vadd.f32 %v6334, %v5823
        %v6336 = vadd.f32 %v6335, %v5824
        %v6337 = vadd.f32 %v6336, %v5825
        %v6338 = vadd.f32 %v6337, %v5826
        %v6339 = vadd.f32 %v6338, %v5827
        %v6340 = vadd.f32 %v6339, %v5828
        %v6341 = vadd.f32 %v6340, %v5829
        %v6342 = vadd.f32 %v6341, %v5830
        %v6343 = vadd.f32 %v6342, %v5831
        %v6344 = vadd.f32 %v6343, %v5832
        %v6345 = vadd.f32 %v6344, %v5833
        %v6346 = vadd.f32 %v6345, %v5834
        %v6347 = vadd.f32 %v6346, %v5835
        %v6348 = vadd.f32 %v6347, %v5836
        %v6349 = vadd.f32 %v6348, %v5837
        %v6350 = vadd.f32 %v6349, %v5838
        %v6351 = vadd.f32 %v6350, %v5839
        %v6352 = vadd.f32 %v6351, %v5840
        %v6353 = vadd.f32 %v6352, %v5841
        %v6354 = vadd.f32 %v6353, %v5842
        %v6355 = vadd.f32 %v6354, %v5843
        %v6356 = vadd.f32 %v6355, %v5844
        %v6357 = vadd.f32 %v6356, %v5845
        %v6358 = vadd.f32 %v6357, %v5846
        %v6359 = vadd.f32 %v6358, %v5847
        %v6360 = vadd.f32 %v6359, %v5848
        %v6361 = vadd.f32 %v6360, %v5849
        %v6362 = vadd.f32 %v6361, %v5850
        %v6363 = vadd.f32 %v6362, %v5851
        %v6364 = vadd.f32 %v6363, %v5852
        %v6365 = vadd.f32 %v6364, %v5853
        %v6366 = vadd.f32 %v6365, %v5854
        %v6367 = vadd.f32 %v6366, %v5855
        %v6368 = vadd.f32 %v6367, %v5856
        %v6369 = vadd.f32 %v6368, %v5857
        %v6370 = vadd.f32 %v6369, %v5858
        %v6371 = vadd.f32 %v6370, %v5859
        %v6372 = vadd.f32 %v6371, %v5860
        %v6373 = vadd.f32 %v6372, %v5861
        %v6374 = vadd.f32 %v6373, %v5862
        %v6375 = vadd.f32 %v6374, %v5863
        %v6376 = vadd.f32 %v6375, %v5864
        %v6377 = vadd.f32 %v6376, %v5865
        %v6378 = vadd.f32 %v6377, %v5866
        %v6379 = vadd.f32 %v6378, %v5867
        %v6380 = vadd.f32 %v6379, %v5868
        %v6381 = vadd.f32 %v6380, %v5869
        %v6382 = vadd.f32 %v6381, %v5870
        %v6383 = vadd.f32 %v6382, %v5871
        %v6384 = vadd.f32 %v6383, %v5872
        %v6385 = vadd.f32 %v6384, %v5873
        %v6386 = vadd.f32 %v6385, %v5874
        %v6387 = vadd.f32 %v6386, %v5875
        %v6388 = vadd.f32 %v6387, %v5876
        %v6389 = vadd.f32 %v6388, %v5877
        %v6390 = vadd.f32 %v6389, %v5878
        %v6391 = vadd.f32 %v6390, %v5879
        %v6392 = vadd.f32 %v6391, %v5880
        %v6393 = vadd.f32 %v6392, %v5881
        %v6394 = vadd.f32 %v6393, %v5882
        %v6395 = vadd.f32 %v6394, %v5883
        %v6396 = vadd.f32 %v6395, %v5884
        %v6397 = vadd.f32 %v6396, %v5885
        %v6398 = vadd.f32 %v6397, %v5886
        %v6399 = vadd.f32 %v6398, %v5887
        %v6400 = vadd.f32 %v6399, %v5888
        %v6401 = vadd.f32 %v6400, %v5889
        %v6402 = vadd.f32 %v6401, %v5890
        %v6403 = vadd.f32 %v6402, %v5891
        %v6404 = vadd.f32 %v6403, %v5892
        %v6405 = vadd.f32 %v6404, %v5893
        %v6406 = vadd.f32 %v6405, %v5894
        %v6407 = vadd.f32 %v6406, %v5895
        %v6408 = vadd.f32 %v6407, %v5896
        %v6409 = vadd.f32 %v6408, %v5897
        %v6410 = vadd.f32 %v6409, %v5898
        %v6411 = vadd.f32 %v6410, %v5899
        %v6412 = vadd.f32 %v6411, %v5900
        %v6413 = vadd.f32 %v5901, %v6412
        %6414 = vst [vmem:[%s245] sm:$0xff] %v6413
        %s6415 = sand.u32 %s124, 1
        %s6416 = scalar_lea.sflag [#allocation4], %s6415
        %s6417 = sand.u32 %s124, 1
        %s6418 = smul.addr %s6417, 8
        %s6419 = scalar_lea.vmem [#allocation5], %s6418
        // Predicated region
        $region41: #{tpu_custom_call.1} parent=31 // pred_check
          %p6420 = pneg %p134
        $region42: #{tpu_custom_call.1} parent=31 // pred_check_branch
          %6422 = sbr.rel (%p6420) target = $region44
        $region43: #{tpu_custom_call.1} parent=31 // pred_region
          %s6424 = ssub.s32 128, 128
          %6425 = vsyncadd %s6416, %s6424
          %s6426 = smul.addr %s24, 128
          %s6427 = scalar_lea.hbm %s3, %s6426
          %s6429 = sshll.u32 %s6419, 4
          %s6430 = int_to_ptr.vmem [resolvable:$true] %s6429
          %6432 = dma.vmem_to_hbm [thread:$0]  %s6430, 128, %s6427, %s6416
        $region44: #{tpu_custom_call.1} parent=31 // pred_fallthru
          _
      $region32: #{tpu_custom_call.1} parent=5 // pred_fallthru
        _
      %p6433 = scmp.le.s32.totalorder 2, %s15
      // Predicated region
      $region45: #{tpu_custom_call.1} parent=5 // pred_check
        %p6434 = pneg %p6433
      $region46: #{tpu_custom_call.1} parent=5 // pred_check_branch
        %6436 = sbr.rel (%p6434) target = $region48
      $region47: #{tpu_custom_call.1} parent=5 // pred_region
        %s6437 = ssub.s32 %s15, 2
        // Predicated region
        $region49: #{tpu_custom_call.1} parent=47 // pred_check
          %p6438 = pneg %p140
        $region50: #{tpu_custom_call.1} parent=47 // pred_check_branch
          %6440 = sbr.rel (%p6438) target = $region52
        $region51: #{tpu_custom_call.1} parent=47 // pred_region
          %s6441 = sand.u32 %s125, 1
          %s6442 = scalar_lea.sflag [#allocation4], %s6441
          %s6443 = sand.u32 %s125, 1
          %s6444 = smul.addr %s6443, 8
          %s6445 = scalar_lea.vmem [#allocation5], %s6444
          %6446 = dma.done %s6442, 128
        $region52: #{tpu_custom_call.1} parent=47 // pred_fallthru
          _
      $region48: #{tpu_custom_call.1} parent=5 // pred_fallthru
        _
    $region6: #{tpu_custom_call.1} parent=1 // loop_footer
      %s19 = sadd.s32 1, %s15
    $region7: #{tpu_custom_call.1} parent=1 // loop_footer_branch
      %14 = sbr.rel target = $region3
    $region8: #{tpu_custom_call.1} parent=1 // loop_exit
      _
    %6447 = vsyncpa [#allocation3], 1
    %s6448 = scalar_lea.sflag [#allocation3], 1
    %6449 = vsyncpa %s6448, 1
    %6450 = vsyncpa [#allocation4], 1
    %s6451 = scalar_lea.sflag [#allocation4], 1
    %6452 = vsyncpa %s6451, 1

</llo_original>
